<compile_context>
chip_gen: v7x
topology: tpu7x:2x2x1
jax: 0.10.0
libtpu: 0.0.40
codegen_flags: <defaults>
</compile_context>

<pallas_src>
import functools

import jax
import jax.numpy as jnp
from jax.experimental import pallas as pl
from jax.experimental.pallas import tpu as pltpu


# ------------------------- conv as lane-dense matmul ------------------------ #

def _conv_relu_kernel(w_ref, p_ref, b_ref, o_ref):
    # w: (Cout, K), p: (K, M), b: (Cout, 1)  ->  o: (Cout, M)   (lane dim = M)
    acc = jnp.dot(w_ref[...], p_ref[...], preferred_element_type=jnp.float32)
    o_ref[...] = jnp.maximum(acc + b_ref[...], 0.0)


def _full_spec(shape):
    return pl.BlockSpec(shape, lambda i: (0,) * len(shape))


def conv_matmul_relu(w, patches, b):
    """w: (Cout, K), patches: (K, M), b: (Cout, 1) -> relu(w @ patches + b)."""
    cout, K = w.shape
    _, M = patches.shape
    return pl.pallas_call(
        _conv_relu_kernel,
        out_shape=jax.ShapeDtypeStruct((cout, M), jnp.float32),
        grid=(1,),
        in_specs=[_full_spec((cout, K)), _full_spec((K, M)), _full_spec((cout, 1))],
        out_specs=_full_spec((cout, M)),
        compiler_params=pltpu.CompilerParams(dimension_semantics=("arbitrary",)),
    )(w, patches, b)


def _im2col_cmajor(x, kh, kw, stride):
    """x: (C, N, H, W) channel-major.  Returns (patches, oh, ow) where
    patches[(c*kh + ki)*kw + kj, (n*oh + i)*ow + j] = x[c, n, i*stride+ki, j*stride+kj].
    K order (cin, ki, kj) matches PyTorch conv weight (Cout, Cin, kh, kw).reshape(Cout, -1)."""
    C, N, H, W = x.shape
    oh = (H - kh) // stride + 1
    ow = (W - kw) // stride + 1
    slices = []
    for ki in range(kh):
        for kj in range(kw):
            slices.append(x[:, :,
                            ki:ki + (oh - 1) * stride + 1:stride,
                            kj:kj + (ow - 1) * stride + 1:stride])
    p = jnp.stack(slices, axis=1)                    # (C, kh*kw, N, oh, ow)
    return p.reshape(C * kh * kw, N * oh * ow), oh, ow


# ----------------------------------- GRU ------------------------------------ #

def _gru_kernel(feat_ref, rew_ref, wif_ref, wir_ref, bx_ref, wh_ref, bhn_ref,
                o_ref, *, seq_len):
    # Hoisted input-side gates for all time steps in one MXU matmul:
    #   gx = feat @ Wi_feat + reward-contribution + (b_ih + [b_hr, b_hz, 0])
    gx = jnp.dot(feat_ref[...], wif_ref[...], preferred_element_type=jnp.float32)
    if rew_ref.shape[1] == 1:
        gx = gx + rew_ref[...] * wir_ref[...]        # (T*B,1) * (1,3H) broadcast (VPU)
    else:
        gx = gx + jnp.dot(rew_ref[...], wir_ref[...],
                          preferred_element_type=jnp.float32)
    gx = gx + bx_ref[...]                            # (T*B, 3H)

    B, Hh = o_ref.shape
    h = jnp.zeros((B, Hh), jnp.float32)
    bhn = bhn_ref[...]                               # (1, H)
    wh = wh_ref[...]                                 # (H, 3H) fused (r, z, n)
    for t in range(seq_len):                         # fully static recurrence
        gxt = gx[t * B:(t + 1) * B, :]               # (B, 3H) static slice
        gh = jnp.dot(h, wh, preferred_element_type=jnp.float32)   # (B, 3H)
        r = jax.nn.sigmoid(gxt[:, 0:Hh] + gh[:, 0:Hh])
        z = jax.nn.sigmoid(gxt[:, Hh:2 * Hh] + gh[:, Hh:2 * Hh])
        n = jnp.tanh(gxt[:, 2 * Hh:] + r * (gh[:, 2 * Hh:] + bhn))
        h = (1.0 - z) * n + z * h
    o_ref[...] = h


def gru_last_hidden(feat, rew, wi_feat, wi_rew, bias_x, wh, bh_n, *, seq_len, batch):
    """feat: (T*B, feat_size), rew: (T*B, R).  Returns final hidden state (B, H)."""
    hidden = wh.shape[0]
    kernel = functools.partial(_gru_kernel, seq_len=seq_len)
    return pl.pallas_call(
        kernel,
        out_shape=jax.ShapeDtypeStruct((batch, hidden), jnp.float32),
        grid=(1,),
        in_specs=[_full_spec(feat.shape), _full_spec(rew.shape),
                  _full_spec(wi_feat.shape), _full_spec(wi_rew.shape),
                  _full_spec(bias_x.shape), _full_spec(wh.shape),
                  _full_spec(bh_n.shape)],
        out_specs=_full_spec((batch, hidden)),
        compiler_params=pltpu.CompilerParams(dimension_semantics=("arbitrary",)),
    )(feat, rew, wi_feat, wi_rew, bias_x, wh, bh_n)


# ------------------------------ full forward -------------------------------- #

def rollout_encoder_forward(state, reward, params):
    """state: (T, B, C, H, W) f32, reward: (T, B, R) f32 -> (B, hidden_size) f32."""
    T, B, C, H, W = state.shape
    N = T * B
    x = state.reshape(N, C, H, W).transpose(1, 0, 2, 3)       # (C, N, H, W)

    p1, h1, w1 = _im2col_cmajor(x, 3, 3, stride=1)            # (C*9, N*h1*w1)
    f1 = conv_matmul_relu(params["w1"], p1, params["b1"])     # (16, N*h1*w1)
    f1 = f1.reshape(16, N, h1, w1)                            # channel-major, no transpose

    p2, h2, w2 = _im2col_cmajor(f1, 3, 3, stride=2)           # (16*9, N*h2*w2)
    f2 = conv_matmul_relu(params["w2"], p2, params["b2"])     # (16, N*h2*w2)

    # Reorder to PyTorch's NCHW flatten order: feat[n, c*h2*w2 + i*w2 + j]
    feat = f2.reshape(16, N, h2 * w2).transpose(1, 0, 2).reshape(N, 16 * h2 * w2)
    rew = reward.reshape(N, -1)

    return gru_last_hidden(feat, rew, params["wi_feat"], params["wi_rew"],
                           params["bias_x"], params["wh"], params["bh_n"],
                           seq_len=T, batch=B)


# ------------------------------- param init --------------------------------- #

def init_params(key, in_shape, num_rewards, hidden_size):
    C, Hin, Win = in_shape
    h1, w1 = Hin - 2, Win - 2                        # conv1: k=3, s=1
    h2, w2 = (h1 - 3) // 2 + 1, (w1 - 3) // 2 + 1    # conv2: k=3, s=2
    feat_size = 16 * h2 * w2
    F = feat_size + num_rewards
    H = hidden_size

    keys = jax.random.split(key, 8)

    def uni(k, shape, fan_in):
        bound = 1.0 / jnp.sqrt(jnp.float32(fan_in))
        return jax.random.uniform(k, shape, jnp.float32, -bound, bound)

    # Conv weights stored as PyTorch (Cout, Cin, kh, kw).reshape(Cout, -1); bias (Cout, 1).
    w1p = uni(keys[0], (16, 3 * 3 * C), 3 * 3 * C)
    b1p = uni(keys[1], (16, 1), 3 * 3 * C)
    w2p = uni(keys[2], (16, 3 * 3 * 16), 3 * 3 * 16)
    b2p = uni(keys[3], (16, 1), 3 * 3 * 16)

    # GRU params in PyTorch layout (gate order r, z, n), then repacked fused.
    w_ih = uni(keys[4], (3 * H, F), H)               # weight_ih_l0
    w_hh = uni(keys[5], (3 * H, H), H)               # weight_hh_l0
    b_ih = uni(keys[6], (3 * H,), H)                 # bias_ih_l0
    b_hh = uni(keys[7], (3 * H,), H)                 # bias_hh_l0

    wi = w_ih.T                                      # (F, 3H)
    wi_feat = wi[:feat_size]                         # (feat_size, 3H)
    wi_rew = wi[feat_size:]                          # (R, 3H)
    wh = w_hh.T                                      # (H, 3H)
    # Fold b_hr, b_hz into the input-side bias (they only ever appear summed);
    # keep b_hn separate because it is gated by r.
    bias_x = (b_ih + jnp.concatenate(
        [b_hh[:2 * H], jnp.zeros((H,), jnp.float32)])).reshape(1, 3 * H)
    bh_n = b_hh[2 * H:].reshape(1, H)

    return {"w1": w1p, "b1": b1p, "w2": w2p, "b2": b2p,
            "wi_feat": wi_feat, "wi_rew": wi_rew, "bias_x": bias_x,
            "wh": wh, "bh_n": bh_n}


# ------------------------- pure-JAX reference (check) ----------------------- #

def reference_forward(state, reward, params):
    T, B, C, H, W = state.shape
    hp = jax.lax.Precision.HIGHEST
    x = state.reshape(T * B, C, H, W)
    w1 = params["w1"].reshape(16, C, 3, 3)
    f = jax.lax.conv_general_dilated(x, w1, (1, 1), "VALID",
                                     dimension_numbers=("NCHW", "OIHW", "NCHW"),
                                     precision=hp)
    f = jax.nn.relu(f + params["b1"].reshape(1, 16, 1, 1))
    w2 = params["w2"].reshape(16, 16, 3, 3)
    f = jax.lax.conv_general_dilated(f, w2, (2, 2), "VALID",
                                     dimension_numbers=("NCHW", "OIHW", "NCHW"),
                                     precision=hp)
    f = jax.nn.relu(f + params["b2"].reshape(1, 16, 1, 1))
    feat = f.reshape(T, B, -1)
    rnn_in = jnp.concatenate([feat, reward], axis=2)
    wi = jnp.concatenate([params["wi_feat"], params["wi_rew"]], axis=0)
    Hh = params["wh"].shape[0]
    h = jnp.zeros((B, Hh), jnp.float32)
    for t in range(T):
        gx = jnp.dot(rnn_in[t], wi, precision=hp) + params["bias_x"]
        gh = jnp.dot(h, params["wh"], precision=hp)
        r = jax.nn.sigmoid(gx[:, :Hh] + gh[:, :Hh])
        z = jax.nn.sigmoid(gx[:, Hh:2 * Hh] + gh[:, Hh:2 * Hh])
        n = jnp.tanh(gx[:, 2 * Hh:] + r * (gh[:, 2 * Hh:] + params["bh_n"]))
        h = (1.0 - z) * n + z * h
    return h


# ----------------------------------- main ------------------------------------ #

if __name__ == "__main__":
    in_shape = (4, 16, 16)       # (C, H, W)
    num_rewards = 1
    hidden_size = 32
    num_steps, batch = 8, 2

    key = jax.random.PRNGKey(0)
    k_state, k_reward, k_params = jax.random.split(key, 3)

    state = jax.random.normal(
        k_state, (num_steps, batch, *in_shape), dtype=jnp.float32)
    reward = jax.random.normal(
        k_reward, (num_steps, batch, num_rewards), dtype=jnp.float32)

    params = init_params(k_params, in_shape, num_rewards, hidden_size)

    fwd = jax.jit(functools.partial(rollout_encoder_forward, params=params))
    hidden = fwd(state, reward)
    jax.block_until_ready(hidden)

    assert hidden.shape == (batch, hidden_size), hidden.shape
    assert hidden.dtype == jnp.float32

    ref = reference_forward(state, reward, params)
    assert jnp.allclose(hidden, ref, rtol=5e-3, atol=5e-3), (
        float(jnp.max(jnp.abs(hidden - ref))))

    print("KERNEL_OK")
</pallas_src>

<mosaic_0001>
module attributes {stable_mosaic.version = 11 : i64} {
  func.func @_conv_relu_kernel(%arg0: i32, %arg1: memref<16x36xf32, #tpu.memory_space<vmem>>, %arg2: memref<36x3136xf32, #tpu.memory_space<vmem>>, %arg3: memref<16x1xf32, #tpu.memory_space<vmem>>, %arg4: memref<16x3136xf32, #tpu.memory_space<vmem>>) attributes {dimension_semantics = [#tpu.dimension_semantics<arbitrary>], iteration_bounds = array<i64: 1>, scalar_prefetch = 0 : i64, scratch_operands = 0 : i64, tpu.core_type = #tpu.core_type<tc>, window_params = [{pipeline_mode = #tpu.pipeline_mode<synchronous>, transform_indices = @transform_0, window_bounds = array<i64: 16, 36>}, {pipeline_mode = #tpu.pipeline_mode<synchronous>, transform_indices = @transform_1, window_bounds = array<i64: 36, 3136>}, {pipeline_mode = #tpu.pipeline_mode<synchronous>, transform_indices = @transform_2, window_bounds = array<i64: 16, 1>}, {pipeline_mode = #tpu.pipeline_mode<synchronous>, transform_indices = @transform_3, window_bounds = array<i64: 16, 3136>}]} {
    %c0 = arith.constant 0 : index
    %c0_0 = arith.constant 0 : index
    %0 = vector.load %arg1[%c0, %c0_0] : memref<16x36xf32, #tpu.memory_space<vmem>>, vector<16x36xf32>
    %c0_1 = arith.constant 0 : index
    %c0_2 = arith.constant 0 : index
    %1 = vector.load %arg2[%c0_1, %c0_2] : memref<36x3136xf32, #tpu.memory_space<vmem>>, vector<36x3136xf32>
    %cst = arith.constant dense<0.000000e+00> : vector<16x3136xf32>
    %2 = tpu.matmul %0, %1, %cst {dimension_numbers = #tpu.dot_dimension_numbers<[1], [0], [0], [1], [0, 0, 1, 1], [], []>} : vector<16x36xf32>, vector<36x3136xf32>, vector<16x3136xf32> -> vector<16x3136xf32>
    %c0_3 = arith.constant 0 : index
    %c0_4 = arith.constant 0 : index
    %3 = vector.load %arg3[%c0_3, %c0_4] : memref<16x1xf32, #tpu.memory_space<vmem>>, vector<16x1xf32>
    %4 = vector.broadcast %3 : vector<16x1xf32> to vector<16x3136xf32>
    %5 = arith.addf %2, %4 : vector<16x3136xf32>
    %cst_5 = arith.constant 0.000000e+00 : f32
    %6 = vector.broadcast %cst_5 : f32 to vector<16x3136xf32>
    %7 = arith.maximumf %5, %6 : vector<16x3136xf32>
    %c0_6 = arith.constant 0 : index
    %c0_7 = arith.constant 0 : index
    %8 = vector.load %arg4[%c0_6, %c0_7] : memref<16x3136xf32, #tpu.memory_space<vmem>>, vector<16x3136xf32>
    tpu.vector_store %arg4[%c0_6, %c0_7], %7 {strides = array<i32>} : memref<16x3136xf32, #tpu.memory_space<vmem>>, vector<16x3136xf32>,
    return
  }
  func.func @transform_0(%arg0: i32) -> (i32, i32) {
    %c0_i32 = arith.constant 0 : i32
    %c0_i32_0 = arith.constant 0 : i32
    %c0_i32_1 = arith.constant 0 : i32
    return %c0_i32, %c0_i32_0 : i32, i32
  }
  func.func @transform_1(%arg0: i32) -> (i32, i32) {
    %c0_i32 = arith.constant 0 : i32
    %c0_i32_0 = arith.constant 0 : i32
    %c0_i32_1 = arith.constant 0 : i32
    return %c0_i32, %c0_i32_0 : i32, i32
  }
  func.func @transform_2(%arg0: i32) -> (i32, i32) {
    %c0_i32 = arith.constant 0 : i32
    %c0_i32_0 = arith.constant 0 : i32
    %c0_i32_1 = arith.constant 0 : i32
    return %c0_i32, %c0_i32_0 : i32, i32
  }
  func.func @transform_3(%arg0: i32) -> (i32, i32) {
    %c0_i32 = arith.constant 0 : i32
    %c0_i32_0 = arith.constant 0 : i32
    %c0_i32_1 = arith.constant 0 : i32
    return %c0_i32, %c0_i32_0 : i32, i32
  }
}

module attributes {stable_mosaic.version = 11 : i64} {
  func.func @_conv_relu_kernel(%arg0: i32, %arg1: memref<16x144xf32, #tpu.memory_space<vmem>>, %arg2: memref<144x576xf32, #tpu.memory_space<vmem>>, %arg3: memref<16x1xf32, #tpu.memory_space<vmem>>, %arg4: memref<16x576xf32, #tpu.memory_space<vmem>>) attributes {dimension_semantics = [#tpu.dimension_semantics<arbitrary>], iteration_bounds = array<i64: 1>, scalar_prefetch = 0 : i64, scratch_operands = 0 : i64, tpu.core_type = #tpu.core_type<tc>, window_params = [{pipeline_mode = #tpu.pipeline_mode<synchronous>, transform_indices = @transform_0, window_bounds = array<i64: 16, 144>}, {pipeline_mode = #tpu.pipeline_mode<synchronous>, transform_indices = @transform_1, window_bounds = array<i64: 144, 576>}, {pipeline_mode = #tpu.pipeline_mode<synchronous>, transform_indices = @transform_2, window_bounds = array<i64: 16, 1>}, {pipeline_mode = #tpu.pipeline_mode<synchronous>, transform_indices = @transform_3, window_bounds = array<i64: 16, 576>}]} {
    %c0 = arith.constant 0 : index
    %c0_0 = arith.constant 0 : index
    %0 = vector.load %arg1[%c0, %c0_0] : memref<16x144xf32, #tpu.memory_space<vmem>>, vector<16x144xf32>
    %c0_1 = arith.constant 0 : index
    %c0_2 = arith.constant 0 : index
    %1 = vector.load %arg2[%c0_1, %c0_2] : memref<144x576xf32, #tpu.memory_space<vmem>>, vector<144x576xf32>
    %cst = arith.constant dense<0.000000e+00> : vector<16x576xf32>
    %2 = tpu.matmul %0, %1, %cst {dimension_numbers = #tpu.dot_dimension_numbers<[1], [0], [0], [1], [0, 0, 1, 1], [], []>} : vector<16x144xf32>, vector<144x576xf32>, vector<16x576xf32> -> vector<16x576xf32>
    %c0_3 = arith.constant 0 : index
    %c0_4 = arith.constant 0 : index
    %3 = vector.load %arg3[%c0_3, %c0_4] : memref<16x1xf32, #tpu.memory_space<vmem>>, vector<16x1xf32>
    %4 = vector.broadcast %3 : vector<16x1xf32> to vector<16x576xf32>
    %5 = arith.addf %2, %4 : vector<16x576xf32>
    %cst_5 = arith.constant 0.000000e+00 : f32
    %6 = vector.broadcast %cst_5 : f32 to vector<16x576xf32>
    %7 = arith.maximumf %5, %6 : vector<16x576xf32>
    %c0_6 = arith.constant 0 : index
    %c0_7 = arith.constant 0 : index
    %8 = vector.load %arg4[%c0_6, %c0_7] : memref<16x576xf32, #tpu.memory_space<vmem>>, vector<16x576xf32>
    tpu.vector_store %arg4[%c0_6, %c0_7], %7 {strides = array<i32>} : memref<16x576xf32, #tpu.memory_space<vmem>>, vector<16x576xf32>,
    return
  }
  func.func @transform_0(%arg0: i32) -> (i32, i32) {
    %c0_i32 = arith.constant 0 : i32
    %c0_i32_0 = arith.constant 0 : i32
    %c0_i32_1 = arith.constant 0 : i32
    return %c0_i32, %c0_i32_0 : i32, i32
  }
  func.func @transform_1(%arg0: i32) -> (i32, i32) {
    %c0_i32 = arith.constant 0 : i32
    %c0_i32_0 = arith.constant 0 : i32
    %c0_i32_1 = arith.constant 0 : i32
    return %c0_i32, %c0_i32_0 : i32, i32
  }
  func.func @transform_2(%arg0: i32) -> (i32, i32) {
    %c0_i32 = arith.constant 0 : i32
    %c0_i32_0 = arith.constant 0 : i32
    %c0_i32_1 = arith.constant 0 : i32
    return %c0_i32, %c0_i32_0 : i32, i32
  }
  func.func @transform_3(%arg0: i32) -> (i32, i32) {
    %c0_i32 = arith.constant 0 : i32
    %c0_i32_0 = arith.constant 0 : i32
    %c0_i32_1 = arith.constant 0 : i32
    return %c0_i32, %c0_i32_0 : i32, i32
  }
}

module attributes {stable_mosaic.version = 11 : i64} {
  func.func @_gru_kernel(%arg0: i32, %arg1: memref<16x576xf32, #tpu.memory_space<vmem>>, %arg2: memref<16x1xf32, #tpu.memory_space<vmem>>, %arg3: memref<576x96xf32, #tpu.memory_space<vmem>>, %arg4: memref<1x96xf32, #tpu.memory_space<vmem>>, %arg5: memref<1x96xf32, #tpu.memory_space<vmem>>, %arg6: memref<32x96xf32, #tpu.memory_space<vmem>>, %arg7: memref<1x32xf32, #tpu.memory_space<vmem>>, %arg8: memref<2x32xf32, #tpu.memory_space<vmem>>) attributes {dimension_semantics = [#tpu.dimension_semantics<arbitrary>], iteration_bounds = array<i64: 1>, scalar_prefetch = 0 : i64, scratch_operands = 0 : i64, tpu.core_type = #tpu.core_type<tc>, window_params = [{pipeline_mode = #tpu.pipeline_mode<synchronous>, transform_indices = @transform_0, window_bounds = array<i64: 16, 576>}, {pipeline_mode = #tpu.pipeline_mode<synchronous>, transform_indices = @transform_1, window_bounds = array<i64: 16, 1>}, {pipeline_mode = #tpu.pipeline_mode<synchronous>, transform_indices = @transform_2, window_bounds = array<i64: 576, 96>}, {pipeline_mode = #tpu.pipeline_mode<synchronous>, transform_indices = @transform_3, window_bounds = array<i64: 1, 96>}, {pipeline_mode = #tpu.pipeline_mode<synchronous>, transform_indices = @transform_4, window_bounds = array<i64: 1, 96>}, {pipeline_mode = #tpu.pipeline_mode<synchronous>, transform_indices = @transform_5, window_bounds = array<i64: 32, 96>}, {pipeline_mode = #tpu.pipeline_mode<synchronous>, transform_indices = @transform_6, window_bounds = array<i64: 1, 32>}, {pipeline_mode = #tpu.pipeline_mode<synchronous>, transform_indices = @transform_7, window_bounds = array<i64: 2, 32>}]} {
    %c0 = arith.constant 0 : index
    %c0_0 = arith.constant 0 : index
    %0 = vector.load %arg1[%c0, %c0_0] : memref<16x576xf32, #tpu.memory_space<vmem>>, vector<16x576xf32>
    %c0_1 = arith.constant 0 : index
    %c0_2 = arith.constant 0 : index
    %1 = vector.load %arg3[%c0_1, %c0_2] : memref<576x96xf32, #tpu.memory_space<vmem>>, vector<576x96xf32>
    %cst = arith.constant dense<0.000000e+00> : vector<16x96xf32>
    %2 = tpu.matmul %0, %1, %cst {dimension_numbers = #tpu.dot_dimension_numbers<[1], [0], [0], [1], [0, 0, 1, 1], [], []>} : vector<16x576xf32>, vector<576x96xf32>, vector<16x96xf32> -> vector<16x96xf32>
    %c0_3 = arith.constant 0 : index
    %c0_4 = arith.constant 0 : index
    %3 = vector.load %arg2[%c0_3, %c0_4] : memref<16x1xf32, #tpu.memory_space<vmem>>, vector<16x1xf32>
    %c0_5 = arith.constant 0 : index
    %c0_6 = arith.constant 0 : index
    %4 = vector.load %arg4[%c0_5, %c0_6] : memref<1x96xf32, #tpu.memory_space<vmem>>, vector<1x96xf32>
    %5 = vector.broadcast %3 : vector<16x1xf32> to vector<16x96xf32>
    %6 = vector.broadcast %4 : vector<1x96xf32> to vector<16x96xf32>
    %7 = arith.mulf %5, %6 : vector<16x96xf32>
    %8 = arith.addf %2, %7 : vector<16x96xf32>
    %c0_7 = arith.constant 0 : index
    %c0_8 = arith.constant 0 : index
    %9 = vector.load %arg5[%c0_7, %c0_8] : memref<1x96xf32, #tpu.memory_space<vmem>>, vector<1x96xf32>
    %10 = vector.broadcast %9 : vector<1x96xf32> to vector<16x96xf32>
    %11 = arith.addf %8, %10 : vector<16x96xf32>
    %cst_9 = arith.constant 0.000000e+00 : f32
    %12 = vector.broadcast %cst_9 : f32 to vector<2x32xf32>
    %c0_10 = arith.constant 0 : index
    %c0_11 = arith.constant 0 : index
    %13 = vector.load %arg7[%c0_10, %c0_11] : memref<1x32xf32, #tpu.memory_space<vmem>>, vector<1x32xf32>
    %c0_12 = arith.constant 0 : index
    %c0_13 = arith.constant 0 : index
    %14 = vector.load %arg6[%c0_12, %c0_13] : memref<32x96xf32, #tpu.memory_space<vmem>>, vector<32x96xf32>
    %15 = vector.extract_strided_slice %11 {offsets = [0, 0], sizes = [2, 96], strides = [1, 1]} : vector<16x96xf32> to vector<2x96xf32>
    %cst_14 = arith.constant dense<0.000000e+00> : vector<2x96xf32>
    %16 = tpu.matmul %12, %14, %cst_14 {dimension_numbers = #tpu.dot_dimension_numbers<[1], [0], [0], [1], [0, 0, 1, 1], [], []>} : vector<2x32xf32>, vector<32x96xf32>, vector<2x96xf32> -> vector<2x96xf32>
    %17 = vector.extract_strided_slice %15 {offsets = [0, 0], sizes = [2, 32], strides = [1, 1]} : vector<2x96xf32> to vector<2x32xf32>
    %18 = vector.extract_strided_slice %16 {offsets = [0, 0], sizes = [2, 32], strides = [1, 1]} : vector<2x96xf32> to vector<2x32xf32>
    %19 = arith.addf %17, %18 : vector<2x32xf32>
    %20 = arith.negf %19 : vector<2x32xf32>
    %21 = math.exp %20 : vector<2x32xf32>
    %cst_15 = arith.constant 1.000000e+00 : f32
    %22 = vector.broadcast %cst_15 : f32 to vector<2x32xf32>
    %23 = arith.addf %22, %21 : vector<2x32xf32>
    %24 = arith.divf %22, %23 : vector<2x32xf32>
    %25 = vector.extract_strided_slice %15 {offsets = [0, 32], sizes = [2, 32], strides = [1, 1]} : vector<2x96xf32> to vector<2x32xf32>
    %26 = vector.extract_strided_slice %16 {offsets = [0, 32], sizes = [2, 32], strides = [1, 1]} : vector<2x96xf32> to vector<2x32xf32>
    %27 = arith.addf %25, %26 : vector<2x32xf32>
    %28 = arith.negf %27 : vector<2x32xf32>
    %29 = math.exp %28 : vector<2x32xf32>
    %cst_16 = arith.constant 1.000000e+00 : f32
    %30 = vector.broadcast %cst_16 : f32 to vector<2x32xf32>
    %31 = arith.addf %30, %29 : vector<2x32xf32>
    %32 = arith.divf %30, %31 : vector<2x32xf32>
    %33 = vector.extract_strided_slice %15 {offsets = [0, 64], sizes = [2, 32], strides = [1, 1]} : vector<2x96xf32> to vector<2x32xf32>
    %34 = vector.extract_strided_slice %16 {offsets = [0, 64], sizes = [2, 32], strides = [1, 1]} : vector<2x96xf32> to vector<2x32xf32>
    %35 = vector.broadcast %13 : vector<1x32xf32> to vector<2x32xf32>
    %36 = arith.addf %34, %35 : vector<2x32xf32>
    %37 = arith.mulf %24, %36 : vector<2x32xf32>
    %38 = arith.addf %33, %37 : vector<2x32xf32>
    %39 = math.tanh %38 : vector<2x32xf32>
    %cst_17 = arith.constant 1.000000e+00 : f32
    %40 = vector.broadcast %cst_17 : f32 to vector<2x32xf32>
    %41 = arith.subf %40, %32 : vector<2x32xf32>
    %42 = arith.mulf %41, %39 : vector<2x32xf32>
    %43 = arith.mulf %32, %12 : vector<2x32xf32>
    %44 = arith.addf %42, %43 : vector<2x32xf32>
    %45 = vector.extract_strided_slice %11 {offsets = [2, 0], sizes = [2, 96], strides = [1, 1]} : vector<16x96xf32> to vector<2x96xf32>
    %cst_18 = arith.constant dense<0.000000e+00> : vector<2x96xf32>
    %46 = tpu.matmul %44, %14, %cst_18 {dimension_numbers = #tpu.dot_dimension_numbers<[1], [0], [0], [1], [0, 0, 1, 1], [], []>} : vector<2x32xf32>, vector<32x96xf32>, vector<2x96xf32> -> vector<2x96xf32>
    %47 = vector.extract_strided_slice %45 {offsets = [0, 0], sizes = [2, 32], strides = [1, 1]} : vector<2x96xf32> to vector<2x32xf32>
    %48 = vector.extract_strided_slice %46 {offsets = [0, 0], sizes = [2, 32], strides = [1, 1]} : vector<2x96xf32> to vector<2x32xf32>
    %49 = arith.addf %47, %48 : vector<2x32xf32>
    %50 = arith.negf %49 : vector<2x32xf32>
    %51 = math.exp %50 : vector<2x32xf32>
    %cst_19 = arith.constant 1.000000e+00 : f32
    %52 = vector.broadcast %cst_19 : f32 to vector<2x32xf32>
    %53 = arith.addf %52, %51 : vector<2x32xf32>
    %54 = arith.divf %52, %53 : vector<2x32xf32>
    %55 = vector.extract_strided_slice %45 {offsets = [0, 32], sizes = [2, 32], strides = [1, 1]} : vector<2x96xf32> to vector<2x32xf32>
    %56 = vector.extract_strided_slice %46 {offsets = [0, 32], sizes = [2, 32], strides = [1, 1]} : vector<2x96xf32> to vector<2x32xf32>
    %57 = arith.addf %55, %56 : vector<2x32xf32>
    %58 = arith.negf %57 : vector<2x32xf32>
    %59 = math.exp %58 : vector<2x32xf32>
    %cst_20 = arith.constant 1.000000e+00 : f32
    %60 = vector.broadcast %cst_20 : f32 to vector<2x32xf32>
    %61 = arith.addf %60, %59 : vector<2x32xf32>
    %62 = arith.divf %60, %61 : vector<2x32xf32>
    %63 = vector.extract_strided_slice %45 {offsets = [0, 64], sizes = [2, 32], strides = [1, 1]} : vector<2x96xf32> to vector<2x32xf32>
    %64 = vector.extract_strided_slice %46 {offsets = [0, 64], sizes = [2, 32], strides = [1, 1]} : vector<2x96xf32> to vector<2x32xf32>
    %65 = vector.broadcast %13 : vector<1x32xf32> to vector<2x32xf32>
    %66 = arith.addf %64, %65 : vector<2x32xf32>
    %67 = arith.mulf %54, %66 : vector<2x32xf32>
    %68 = arith.addf %63, %67 : vector<2x32xf32>
    %69 = math.tanh %68 : vector<2x32xf32>
    %cst_21 = arith.constant 1.000000e+00 : f32
    %70 = vector.broadcast %cst_21 : f32 to vector<2x32xf32>
    %71 = arith.subf %70, %62 : vector<2x32xf32>
    %72 = arith.mulf %71, %69 : vector<2x32xf32>
    %73 = arith.mulf %62, %44 : vector<2x32xf32>
    %74 = arith.addf %72, %73 : vector<2x32xf32>
    %75 = vector.extract_strided_slice %11 {offsets = [4, 0], sizes = [2, 96], strides = [1, 1]} : vector<16x96xf32> to vector<2x96xf32>
    %cst_22 = arith.constant dense<0.000000e+00> : vector<2x96xf32>
    %76 = tpu.matmul %74, %14, %cst_22 {dimension_numbers = #tpu.dot_dimension_numbers<[1], [0], [0], [1], [0, 0, 1, 1], [], []>} : vector<2x32xf32>, vector<32x96xf32>, vector<2x96xf32> -> vector<2x96xf32>
    %77 = vector.extract_strided_slice %75 {offsets = [0, 0], sizes = [2, 32], strides = [1, 1]} : vector<2x96xf32> to vector<2x32xf32>
    %78 = vector.extract_strided_slice %76 {offsets = [0, 0], sizes = [2, 32], strides = [1, 1]} : vector<2x96xf32> to vector<2x32xf32>
    %79 = arith.addf %77, %78 : vector<2x32xf32>
    %80 = arith.negf %79 : vector<2x32xf32>
    %81 = math.exp %80 : vector<2x32xf32>
    %cst_23 = arith.constant 1.000000e+00 : f32
    %82 = vector.broadcast %cst_23 : f32 to vector<2x32xf32>
    %83 = arith.addf %82, %81 : vector<2x32xf32>
    %84 = arith.divf %82, %83 : vector<2x32xf32>
    %85 = vector.extract_strided_slice %75 {offsets = [0, 32], sizes = [2, 32], strides = [1, 1]} : vector<2x96xf32> to vector<2x32xf32>
    %86 = vector.extract_strided_slice %76 {offsets = [0, 32], sizes = [2, 32], strides = [1, 1]} : vector<2x96xf32> to vector<2x32xf32>
    %87 = arith.addf %85, %86 : vector<2x32xf32>
    %88 = arith.negf %87 : vector<2x32xf32>
    %89 = math.exp %88 : vector<2x32xf32>
    %cst_24 = arith.constant 1.000000e+00 : f32
    %90 = vector.broadcast %cst_24 : f32 to vector<2x32xf32>
    %91 = arith.addf %90, %89 : vector<2x32xf32>
    %92 = arith.divf %90, %91 : vector<2x32xf32>
    %93 = vector.extract_strided_slice %75 {offsets = [0, 64], sizes = [2, 32], strides = [1, 1]} : vector<2x96xf32> to vector<2x32xf32>
    %94 = vector.extract_strided_slice %76 {offsets = [0, 64], sizes = [2, 32], strides = [1, 1]} : vector<2x96xf32> to vector<2x32xf32>
    %95 = vector.broadcast %13 : vector<1x32xf32> to vector<2x32xf32>
    %96 = arith.addf %94, %95 : vector<2x32xf32>
    %97 = arith.mulf %84, %96 : vector<2x32xf32>
    %98 = arith.addf %93, %97 : vector<2x32xf32>
    %99 = math.tanh %98 : vector<2x32xf32>
    %cst_25 = arith.constant 1.000000e+00 : f32
    %100 = vector.broadcast %cst_25 : f32 to vector<2x32xf32>
    %101 = arith.subf %100, %92 : vector<2x32xf32>
    %102 = arith.mulf %101, %99 : vector<2x32xf32>
    %103 = arith.mulf %92, %74 : vector<2x32xf32>
    %104 = arith.addf %102, %103 : vector<2x32xf32>
    %105 = vector.extract_strided_slice %11 {offsets = [6, 0], sizes = [2, 96], strides = [1, 1]} : vector<16x96xf32> to vector<2x96xf32>
    %cst_26 = arith.constant dense<0.000000e+00> : vector<2x96xf32>
    %106 = tpu.matmul %104, %14, %cst_26 {dimension_numbers = #tpu.dot_dimension_numbers<[1], [0], [0], [1], [0, 0, 1, 1], [], []>} : vector<2x32xf32>, vector<32x96xf32>, vector<2x96xf32> -> vector<2x96xf32>
    %107 = vector.extract_strided_slice %105 {offsets = [0, 0], sizes = [2, 32], strides = [1, 1]} : vector<2x96xf32> to vector<2x32xf32>
    %108 = vector.extract_strided_slice %106 {offsets = [0, 0], sizes = [2, 32], strides = [1, 1]} : vector<2x96xf32> to vector<2x32xf32>
    %109 = arith.addf %107, %108 : vector<2x32xf32>
    %110 = arith.negf %109 : vector<2x32xf32>
    %111 = math.exp %110 : vector<2x32xf32>
    %cst_27 = arith.constant 1.000000e+00 : f32
    %112 = vector.broadcast %cst_27 : f32 to vector<2x32xf32>
    %113 = arith.addf %112, %111 : vector<2x32xf32>
    %114 = arith.divf %112, %113 : vector<2x32xf32>
    %115 = vector.extract_strided_slice %105 {offsets = [0, 32], sizes = [2, 32], strides = [1, 1]} : vector<2x96xf32> to vector<2x32xf32>
    %116 = vector.extract_strided_slice %106 {offsets = [0, 32], sizes = [2, 32], strides = [1, 1]} : vector<2x96xf32> to vector<2x32xf32>
    %117 = arith.addf %115, %116 : vector<2x32xf32>
    %118 = arith.negf %117 : vector<2x32xf32>
    %119 = math.exp %118 : vector<2x32xf32>
    %cst_28 = arith.constant 1.000000e+00 : f32
    %120 = vector.broadcast %cst_28 : f32 to vector<2x32xf32>
    %121 = arith.addf %120, %119 : vector<2x32xf32>
    %122 = arith.divf %120, %121 : vector<2x32xf32>
    %123 = vector.extract_strided_slice %105 {offsets = [0, 64], sizes = [2, 32], strides = [1, 1]} : vector<2x96xf32> to vector<2x32xf32>
    %124 = vector.extract_strided_slice %106 {offsets = [0, 64], sizes = [2, 32], strides = [1, 1]} : vector<2x96xf32> to vector<2x32xf32>
    %125 = vector.broadcast %13 : vector<1x32xf32> to vector<2x32xf32>
    %126 = arith.addf %124, %125 : vector<2x32xf32>
    %127 = arith.mulf %114, %126 : vector<2x32xf32>
    %128 = arith.addf %123, %127 : vector<2x32xf32>
    %129 = math.tanh %128 : vector<2x32xf32>
    %cst_29 = arith.constant 1.000000e+00 : f32
    %130 = vector.broadcast %cst_29 : f32 to vector<2x32xf32>
    %131 = arith.subf %130, %122 : vector<2x32xf32>
    %132 = arith.mulf %131, %129 : vector<2x32xf32>
    %133 = arith.mulf %122, %104 : vector<2x32xf32>
    %134 = arith.addf %132, %133 : vector<2x32xf32>
    %135 = vector.extract_strided_slice %11 {offsets = [8, 0], sizes = [2, 96], strides = [1, 1]} : vector<16x96xf32> to vector<2x96xf32>
    %cst_30 = arith.constant dense<0.000000e+00> : vector<2x96xf32>
    %136 = tpu.matmul %134, %14, %cst_30 {dimension_numbers = #tpu.dot_dimension_numbers<[1], [0], [0], [1], [0, 0, 1, 1], [], []>} : vector<2x32xf32>, vector<32x96xf32>, vector<2x96xf32> -> vector<2x96xf32>
    %137 = vector.extract_strided_slice %135 {offsets = [0, 0], sizes = [2, 32], strides = [1, 1]} : vector<2x96xf32> to vector<2x32xf32>
    %138 = vector.extract_strided_slice %136 {offsets = [0, 0], sizes = [2, 32], strides = [1, 1]} : vector<2x96xf32> to vector<2x32xf32>
    %139 = arith.addf %137, %138 : vector<2x32xf32>
    %140 = arith.negf %139 : vector<2x32xf32>
    %141 = math.exp %140 : vector<2x32xf32>
    %cst_31 = arith.constant 1.000000e+00 : f32
    %142 = vector.broadcast %cst_31 : f32 to vector<2x32xf32>
    %143 = arith.addf %142, %141 : vector<2x32xf32>
    %144 = arith.divf %142, %143 : vector<2x32xf32>
    %145 = vector.extract_strided_slice %135 {offsets = [0, 32], sizes = [2, 32], strides = [1, 1]} : vector<2x96xf32> to vector<2x32xf32>
    %146 = vector.extract_strided_slice %136 {offsets = [0, 32], sizes = [2, 32], strides = [1, 1]} : vector<2x96xf32> to vector<2x32xf32>
    %147 = arith.addf %145, %146 : vector<2x32xf32>
    %148 = arith.negf %147 : vector<2x32xf32>
    %149 = math.exp %148 : vector<2x32xf32>
    %cst_32 = arith.constant 1.000000e+00 : f32
    %150 = vector.broadcast %cst_32 : f32 to vector<2x32xf32>
    %151 = arith.addf %150, %149 : vector<2x32xf32>
    %152 = arith.divf %150, %151 : vector<2x32xf32>
    %153 = vector.extract_strided_slice %135 {offsets = [0, 64], sizes = [2, 32], strides = [1, 1]} : vector<2x96xf32> to vector<2x32xf32>
    %154 = vector.extract_strided_slice %136 {offsets = [0, 64], sizes = [2, 32], strides = [1, 1]} : vector<2x96xf32> to vector<2x32xf32>
    %155 = vector.broadcast %13 : vector<1x32xf32> to vector<2x32xf32>
    %156 = arith.addf %154, %155 : vector<2x32xf32>
    %157 = arith.mulf %144, %156 : vector<2x32xf32>
    %158 = arith.addf %153, %157 : vector<2x32xf32>
    %159 = math.tanh %158 : vector<2x32xf32>
    %cst_33 = arith.constant 1.000000e+00 : f32
    %160 = vector.broadcast %cst_33 : f32 to vector<2x32xf32>
    %161 = arith.subf %160, %152 : vector<2x32xf32>
    %162 = arith.mulf %161, %159 : vector<2x32xf32>
    %163 = arith.mulf %152, %134 : vector<2x32xf32>
    %164 = arith.addf %162, %163 : vector<2x32xf32>
    %165 = vector.extract_strided_slice %11 {offsets = [10, 0], sizes = [2, 96], strides = [1, 1]} : vector<16x96xf32> to vector<2x96xf32>
    %cst_34 = arith.constant dense<0.000000e+00> : vector<2x96xf32>
    %166 = tpu.matmul %164, %14, %cst_34 {dimension_numbers = #tpu.dot_dimension_numbers<[1], [0], [0], [1], [0, 0, 1, 1], [], []>} : vector<2x32xf32>, vector<32x96xf32>, vector<2x96xf32> -> vector<2x96xf32>
    %167 = vector.extract_strided_slice %165 {offsets = [0, 0], sizes = [2, 32], strides = [1, 1]} : vector<2x96xf32> to vector<2x32xf32>
    %168 = vector.extract_strided_slice %166 {offsets = [0, 0], sizes = [2, 32], strides = [1, 1]} : vector<2x96xf32> to vector<2x32xf32>
    %169 = arith.addf %167, %168 : vector<2x32xf32>
    %170 = arith.negf %169 : vector<2x32xf32>
    %171 = math.exp %170 : vector<2x32xf32>
    %cst_35 = arith.constant 1.000000e+00 : f32
    %172 = vector.broadcast %cst_35 : f32 to vector<2x32xf32>
    %173 = arith.addf %172, %171 : vector<2x32xf32>
    %174 = arith.divf %172, %173 : vector<2x32xf32>
    %175 = vector.extract_strided_slice %165 {offsets = [0, 32], sizes = [2, 32], strides = [1, 1]} : vector<2x96xf32> to vector<2x32xf32>
    %176 = vector.extract_strided_slice %166 {offsets = [0, 32], sizes = [2, 32], strides = [1, 1]} : vector<2x96xf32> to vector<2x32xf32>
    %177 = arith.addf %175, %176 : vector<2x32xf32>
    %178 = arith.negf %177 : vector<2x32xf32>
    %179 = math.exp %178 : vector<2x32xf32>
    %cst_36 = arith.constant 1.000000e+00 : f32
    %180 = vector.broadcast %cst_36 : f32 to vector<2x32xf32>
    %181 = arith.addf %180, %179 : vector<2x32xf32>
    %182 = arith.divf %180, %181 : vector<2x32xf32>
    %183 = vector.extract_strided_slice %165 {offsets = [0, 64], sizes = [2, 32], strides = [1, 1]} : vector<2x96xf32> to vector<2x32xf32>
    %184 = vector.extract_strided_slice %166 {offsets = [0, 64], sizes = [2, 32], strides = [1, 1]} : vector<2x96xf32> to vector<2x32xf32>
    %185 = vector.broadcast %13 : vector<1x32xf32> to vector<2x32xf32>
    %186 = arith.addf %184, %185 : vector<2x32xf32>
    %187 = arith.mulf %174, %186 : vector<2x32xf32>
    %188 = arith.addf %183, %187 : vector<2x32xf32>
    %189 = math.tanh %188 : vector<2x32xf32>
    %cst_37 = arith.constant 1.000000e+00 : f32
    %190 = vector.broadcast %cst_37 : f32 to vector<2x32xf32>
    %191 = arith.subf %190, %182 : vector<2x32xf32>
    %192 = arith.mulf %191, %189 : vector<2x32xf32>
    %193 = arith.mulf %182, %164 : vector<2x32xf32>
    %194 = arith.addf %192, %193 : vector<2x32xf32>
    %195 = vector.extract_strided_slice %11 {offsets = [12, 0], sizes = [2, 96], strides = [1, 1]} : vector<16x96xf32> to vector<2x96xf32>
    %cst_38 = arith.constant dense<0.000000e+00> : vector<2x96xf32>
    %196 = tpu.matmul %194, %14, %cst_38 {dimension_numbers = #tpu.dot_dimension_numbers<[1], [0], [0], [1], [0, 0, 1, 1], [], []>} : vector<2x32xf32>, vector<32x96xf32>, vector<2x96xf32> -> vector<2x96xf32>
    %197 = vector.extract_strided_slice %195 {offsets = [0, 0], sizes = [2, 32], strides = [1, 1]} : vector<2x96xf32> to vector<2x32xf32>
    %198 = vector.extract_strided_slice %196 {offsets = [0, 0], sizes = [2, 32], strides = [1, 1]} : vector<2x96xf32> to vector<2x32xf32>
    %199 = arith.addf %197, %198 : vector<2x32xf32>
    %200 = arith.negf %199 : vector<2x32xf32>
    %201 = math.exp %200 : vector<2x32xf32>
    %cst_39 = arith.constant 1.000000e+00 : f32
    %202 = vector.broadcast %cst_39 : f32 to vector<2x32xf32>
    %203 = arith.addf %202, %201 : vector<2x32xf32>
    %204 = arith.divf %202, %203 : vector<2x32xf32>
    %205 = vector.extract_strided_slice %195 {offsets = [0, 32], sizes = [2, 32], strides = [1, 1]} : vector<2x96xf32> to vector<2x32xf32>
    %206 = vector.extract_strided_slice %196 {offsets = [0, 32], sizes = [2, 32], strides = [1, 1]} : vector<2x96xf32> to vector<2x32xf32>
    %207 = arith.addf %205, %206 : vector<2x32xf32>
    %208 = arith.negf %207 : vector<2x32xf32>
    %209 = math.exp %208 : vector<2x32xf32>
    %cst_40 = arith.constant 1.000000e+00 : f32
    %210 = vector.broadcast %cst_40 : f32 to vector<2x32xf32>
    %211 = arith.addf %210, %209 : vector<2x32xf32>
    %212 = arith.divf %210, %211 : vector<2x32xf32>
    %213 = vector.extract_strided_slice %195 {offsets = [0, 64], sizes = [2, 32], strides = [1, 1]} : vector<2x96xf32> to vector<2x32xf32>
    %214 = vector.extract_strided_slice %196 {offsets = [0, 64], sizes = [2, 32], strides = [1, 1]} : vector<2x96xf32> to vector<2x32xf32>
    %215 = vector.broadcast %13 : vector<1x32xf32> to vector<2x32xf32>
    %216 = arith.addf %214, %215 : vector<2x32xf32>
    %217 = arith.mulf %204, %216 : vector<2x32xf32>
    %218 = arith.addf %213, %217 : vector<2x32xf32>
    %219 = math.tanh %218 : vector<2x32xf32>
    %cst_41 = arith.constant 1.000000e+00 : f32
    %220 = vector.broadcast %cst_41 : f32 to vector<2x32xf32>
    %221 = arith.subf %220, %212 : vector<2x32xf32>
    %222 = arith.mulf %221, %219 : vector<2x32xf32>
    %223 = arith.mulf %212, %194 : vector<2x32xf32>
    %224 = arith.addf %222, %223 : vector<2x32xf32>
    %225 = vector.extract_strided_slice %11 {offsets = [14, 0], sizes = [2, 96], strides = [1, 1]} : vector<16x96xf32> to vector<2x96xf32>
    %cst_42 = arith.constant dense<0.000000e+00> : vector<2x96xf32>
    %226 = tpu.matmul %224, %14, %cst_42 {dimension_numbers = #tpu.dot_dimension_numbers<[1], [0], [0], [1], [0, 0, 1, 1], [], []>} : vector<2x32xf32>, vector<32x96xf32>, vector<2x96xf32> -> vector<2x96xf32>
    %227 = vector.extract_strided_slice %225 {offsets = [0, 0], sizes = [2, 32], strides = [1, 1]} : vector<2x96xf32> to vector<2x32xf32>
    %228 = vector.extract_strided_slice %226 {offsets = [0, 0], sizes = [2, 32], strides = [1, 1]} : vector<2x96xf32> to vector<2x32xf32>
    %229 = arith.addf %227, %228 : vector<2x32xf32>
    %230 = arith.negf %229 : vector<2x32xf32>
    %231 = math.exp %230 : vector<2x32xf32>
    %cst_43 = arith.constant 1.000000e+00 : f32
    %232 = vector.broadcast %cst_43 : f32 to vector<2x32xf32>
    %233 = arith.addf %232, %231 : vector<2x32xf32>
    %234 = arith.divf %232, %233 : vector<2x32xf32>
    %235 = vector.extract_strided_slice %225 {offsets = [0, 32], sizes = [2, 32], strides = [1, 1]} : vector<2x96xf32> to vector<2x32xf32>
    %236 = vector.extract_strided_slice %226 {offsets = [0, 32], sizes = [2, 32], strides = [1, 1]} : vector<2x96xf32> to vector<2x32xf32>
    %237 = arith.addf %235, %236 : vector<2x32xf32>
    %238 = arith.negf %237 : vector<2x32xf32>
    %239 = math.exp %238 : vector<2x32xf32>
    %cst_44 = arith.constant 1.000000e+00 : f32
    %240 = vector.broadcast %cst_44 : f32 to vector<2x32xf32>
    %241 = arith.addf %240, %239 : vector<2x32xf32>
    %242 = arith.divf %240, %241 : vector<2x32xf32>
    %243 = vector.extract_strided_slice %225 {offsets = [0, 64], sizes = [2, 32], strides = [1, 1]} : vector<2x96xf32> to vector<2x32xf32>
    %244 = vector.extract_strided_slice %226 {offsets = [0, 64], sizes = [2, 32], strides = [1, 1]} : vector<2x96xf32> to vector<2x32xf32>
    %245 = vector.broadcast %13 : vector<1x32xf32> to vector<2x32xf32>
    %246 = arith.addf %244, %245 : vector<2x32xf32>
    %247 = arith.mulf %234, %246 : vector<2x32xf32>
    %248 = arith.addf %243, %247 : vector<2x32xf32>
    %249 = math.tanh %248 : vector<2x32xf32>
    %cst_45 = arith.constant 1.000000e+00 : f32
    %250 = vector.broadcast %cst_45 : f32 to vector<2x32xf32>
    %251 = arith.subf %250, %242 : vector<2x32xf32>
    %252 = arith.mulf %251, %249 : vector<2x32xf32>
    %253 = arith.mulf %242, %224 : vector<2x32xf32>
    %254 = arith.addf %252, %253 : vector<2x32xf32>
    %c0_46 = arith.constant 0 : index
    %c0_47 = arith.constant 0 : index
    %255 = vector.load %arg8[%c0_46, %c0_47] : memref<2x32xf32, #tpu.memory_space<vmem>>, vector<2x32xf32>
    tpu.vector_store %arg8[%c0_46, %c0_47], %254 {strides = array<i32>} : memref<2x32xf32, #tpu.memory_space<vmem>>, vector<2x32xf32>,
    return
  }
  func.func @transform_0(%arg0: i32) -> (i32, i32) {
    %c0_i32 = arith.constant 0 : i32
    %c0_i32_0 = arith.constant 0 : i32
    %c0_i32_1 = arith.constant 0 : i32
    return %c0_i32, %c0_i32_0 : i32, i32
  }
  func.func @transform_1(%arg0: i32) -> (i32, i32) {
    %c0_i32 = arith.constant 0 : i32
    %c0_i32_0 = arith.constant 0 : i32
    %c0_i32_1 = arith.constant 0 : i32
    return %c0_i32, %c0_i32_0 : i32, i32
  }
  func.func @transform_2(%arg0: i32) -> (i32, i32) {
    %c0_i32 = arith.constant 0 : i32
    %c0_i32_0 = arith.constant 0 : i32
    %c0_i32_1 = arith.constant 0 : i32
    return %c0_i32, %c0_i32_0 : i32, i32
  }
  func.func @transform_3(%arg0: i32) -> (i32, i32) {
    %c0_i32 = arith.constant 0 : i32
    %c0_i32_0 = arith.constant 0 : i32
    %c0_i32_1 = arith.constant 0 : i32
    return %c0_i32, %c0_i32_0 : i32, i32
  }
  func.func @transform_4(%arg0: i32) -> (i32, i32) {
    %c0_i32 = arith.constant 0 : i32
    %c0_i32_0 = arith.constant 0 : i32
    %c0_i32_1 = arith.constant 0 : i32
    return %c0_i32, %c0_i32_0 : i32, i32
  }
  func.func @transform_5(%arg0: i32) -> (i32, i32) {
    %c0_i32 = arith.constant 0 : i32
    %c0_i32_0 = arith.constant 0 : i32
    %c0_i32_1 = arith.constant 0 : i32
    return %c0_i32, %c0_i32_0 : i32, i32
  }
  func.func @transform_6(%arg0: i32) -> (i32, i32) {
    %c0_i32 = arith.constant 0 : i32
    %c0_i32_0 = arith.constant 0 : i32
    %c0_i32_1 = arith.constant 0 : i32
    return %c0_i32, %c0_i32_0 : i32, i32
  }
  func.func @transform_7(%arg0: i32) -> (i32, i32) {
    %c0_i32 = arith.constant 0 : i32
    %c0_i32_0 = arith.constant 0 : i32
    %c0_i32_1 = arith.constant 0 : i32
    return %c0_i32, %c0_i32_0 : i32, i32
  }
}

</mosaic_0001>

<llo_original>
// kernel: rollout_encoder_forward.3
$region0: #{rollout_encoder_forward.3}
  #allocation0 [shape = 'u32[]', space=smem, size = 0x4, offset = 0x4, fixed_abs, tag = 'smem constant byte address 0x4 - core index']
  #allocation1 [shape = 'u32[144,128]{1,0:T(1,128)}', space=vmem, size = 0x12000, scoped, tag = 'internal scratch']
  %s0 = inlined_call_operand.vmem [shape: f32[16,36], index: 0, kind: input, shape index: {}]
  %s1 = inlined_call_operand.vmem [shape: f32[36,3136], index: 1, kind: input, shape index: {}]
  %s2 = inlined_call_operand.vmem [shape: f32[16,1], index: 2, kind: input, shape index: {}]
  %s3 = inlined_call_operand.vmem [shape: f32[16,3136], index: 3, kind: output, shape index: {}]
  %s4 = sld [smem:[#allocation0]]
  $region22: #{rollout_encoder_forward.3} parent=0
    _
  %s6 = ssub.s32 1, %s4
  %s7 = scalar_select 0, %s6, %s4
  // Predicated region
  $region2: #{rollout_encoder_forward.3} parent=0 // pred_check
    _
  $region3: #{rollout_encoder_forward.3} parent=0 // pred_check_branch
    %9 = sbr.rel (0) target = $region5
  $region4: #{rollout_encoder_forward.3} parent=0 // pred_region
    _
  $region5: #{rollout_encoder_forward.3} parent=0 // pred_fallthru
    _
  // Predicated region
  $region6: #{rollout_encoder_forward.3} parent=0 // pred_check
    _
  $region7: #{rollout_encoder_forward.3} parent=0 // pred_check_branch
    %11 = sbr.rel (0) target = $region9
  $region8: #{rollout_encoder_forward.3} parent=0 // pred_region
    _
  $region9: #{rollout_encoder_forward.3} parent=0 // pred_fallthru
    _
  // Predicated region
  $region10: #{rollout_encoder_forward.3} parent=0 // pred_check
    _
  $region11: #{rollout_encoder_forward.3} parent=0 // pred_check_branch
    %13 = sbr.rel (0) target = $region13
  $region12: #{rollout_encoder_forward.3} parent=0 // pred_region
    _
  $region13: #{rollout_encoder_forward.3} parent=0 // pred_fallthru
    _
  %v14 = vld [vmem:[%s0] sm:$0xff]
  %v15 = vld [vmem:[%s0 + $0x8] sm:$0xff]
  %v16 = vld [vmem:[%s1] sm:$0xff]
  %v17 = vld [vmem:[%s1 + $0x8] sm:$0xff]
  %v18 = vld [vmem:[%s1 + $0x10] sm:$0xff]
  %v19 = vld [vmem:[%s1 + $0x18] sm:$0xff]
  %v20 = vld [vmem:[%s1 + $0x20] sm:$0xff]
  %v21 = vld [vmem:[%s1 + $0x28] sm:$0xff]
  %v22 = vld [vmem:[%s1 + $0x30] sm:$0xff]
  %v23 = vld [vmem:[%s1 + $0x38] sm:$0xff]
  %v24 = vld [vmem:[%s1 + $0x40] sm:$0xff]
  %v25 = vld [vmem:[%s1 + $0x48] sm:$0xff]
  %v26 = vld [vmem:[%s1 + $0x50] sm:$0xff]
  %v27 = vld [vmem:[%s1 + $0x58] sm:$0xff]
  %v28 = vld [vmem:[%s1 + $0x60] sm:$0xff]
  %v29 = vld [vmem:[%s1 + $0x68] sm:$0xff]
  %v30 = vld [vmem:[%s1 + $0x70] sm:$0xff]
  %v31 = vld [vmem:[%s1 + $0x78] sm:$0xff]
  %v32 = vld [vmem:[%s1 + $0x80] sm:$0xff]
  %v33 = vld [vmem:[%s1 + $0x88] sm:$0xff]
  %v34 = vld [vmem:[%s1 + $0x90] sm:$0xff]
  %v35 = vld [vmem:[%s1 + $0x98] sm:$0xff]
  %v36 = vld [vmem:[%s1 + $0xa0] sm:$0xff]
  %v37 = vld [vmem:[%s1 + $0xa8] sm:$0xff]
  %v38 = vld [vmem:[%s1 + $0xb0] sm:$0xff]
  %v39 = vld [vmem:[%s1 + $0xb8] sm:$0xff]
  %v40 = vld [vmem:[%s1 + $0xc0] sm:$0xff]
  %v41 = vld [vmem:[%s1 + $0xc8] sm:$0xff]
  %v42 = vld [vmem:[%s1 + $0xd0] sm:$0xff]
  %v43 = vld [vmem:[%s1 + $0xd8] sm:$0xff]
  %v44 = vld [vmem:[%s1 + $0xe0] sm:$0xff]
  %v45 = vld [vmem:[%s1 + $0xe8] sm:$0xff]
  %v46 = vld [vmem:[%s1 + $0xf0] sm:$0xff]
  %v47 = vld [vmem:[%s1 + $0xf8] sm:$0xff]
  %v48 = vld [vmem:[%s1 + $0x100] sm:$0xff]
  %v49 = vld [vmem:[%s1 + $0x108] sm:$0xff]
  %v50 = vld [vmem:[%s1 + $0x110] sm:$0xff]
  %v51 = vld [vmem:[%s1 + $0x118] sm:$0xff]
  %v52 = vld [vmem:[%s1 + $0x120] sm:$0xff]
  %v53 = vld [vmem:[%s1 + $0x128] sm:$0xff]
  %v54 = vld [vmem:[%s1 + $0x130] sm:$0xff]
  %v55 = vld [vmem:[%s1 + $0x138] sm:$0xff]
  %v56 = vld [vmem:[%s1 + $0x140] sm:$0xff]
  %v57 = vld [vmem:[%s1 + $0x148] sm:$0xff]
  %v58 = vld [vmem:[%s1 + $0x150] sm:$0xff]
  %v59 = vld [vmem:[%s1 + $0x158] sm:$0xff]
  %v60 = vld [vmem:[%s1 + $0x160] sm:$0xff]
  %v61 = vld [vmem:[%s1 + $0x168] sm:$0xff]
  %v62 = vld [vmem:[%s1 + $0x170] sm:$0xff]
  %v63 = vld [vmem:[%s1 + $0x178] sm:$0xff]
  %v64 = vld [vmem:[%s1 + $0x180] sm:$0xff]
  %v65 = vld [vmem:[%s1 + $0x188] sm:$0xff]
  %v66 = vld [vmem:[%s1 + $0x190] sm:$0xff]
  %v67 = vld [vmem:[%s1 + $0x198] sm:$0xff]
  %v68 = vld [vmem:[%s1 + $0x1a0] sm:$0xff]
  %v69 = vld [vmem:[%s1 + $0x1a8] sm:$0xff]
  %v70 = vld [vmem:[%s1 + $0x1b0] sm:$0xff]
  %v71 = vld [vmem:[%s1 + $0x1b8] sm:$0xff]
  %v72 = vld [vmem:[%s1 + $0x1c0] sm:$0xff]
  %v73 = vld [vmem:[%s1 + $0x1c8] sm:$0xff]
  %v74 = vld [vmem:[%s1 + $0x1d0] sm:$0xff]
  %v75 = vld [vmem:[%s1 + $0x1d8] sm:$0xff]
  %v76 = vld [vmem:[%s1 + $0x1e0] sm:$0xff]
  %v77 = vld [vmem:[%s1 + $0x1e8] sm:$0xff]
  %v78 = vld [vmem:[%s1 + $0x1f0] sm:$0xff]
  %v79 = vld [vmem:[%s1 + $0x1f8] sm:$0xff]
  %v80 = vld [vmem:[%s1 + $0x200] sm:$0xff]
  %v81 = vld [vmem:[%s1 + $0x208] sm:$0xff]
  %v82 = vld [vmem:[%s1 + $0x210] sm:$0xff]
  %v83 = vld [vmem:[%s1 + $0x218] sm:$0xff]
  %v84 = vld [vmem:[%s1 + $0x220] sm:$0xff]
  %v85 = vld [vmem:[%s1 + $0x228] sm:$0xff]
  %v86 = vld [vmem:[%s1 + $0x230] sm:$0xff]
  %v87 = vld [vmem:[%s1 + $0x238] sm:$0xff]
  %v88 = vld [vmem:[%s1 + $0x240] sm:$0xff]
  %v89 = vld [vmem:[%s1 + $0x248] sm:$0xff]
  %v90 = vld [vmem:[%s1 + $0x250] sm:$0xff]
  %v91 = vld [vmem:[%s1 + $0x258] sm:$0xff]
  %v92 = vld [vmem:[%s1 + $0x260] sm:$0xff]
  %v93 = vld [vmem:[%s1 + $0x268] sm:$0xff]
  %v94 = vld [vmem:[%s1 + $0x270] sm:$0xff]
  %v95 = vld [vmem:[%s1 + $0x278] sm:$0xff]
  %v96 = vld [vmem:[%s1 + $0x280] sm:$0xff]
  %v97 = vld [vmem:[%s1 + $0x288] sm:$0xff]
  %v98 = vld [vmem:[%s1 + $0x290] sm:$0xff]
  %v99 = vld [vmem:[%s1 + $0x298] sm:$0xff]
  %v100 = vld [vmem:[%s1 + $0x2a0] sm:$0xff]
  %v101 = vld [vmem:[%s1 + $0x2a8] sm:$0xff]
  %v102 = vld [vmem:[%s1 + $0x2b0] sm:$0xff]
  %v103 = vld [vmem:[%s1 + $0x2b8] sm:$0xff]
  %v104 = vld [vmem:[%s1 + $0x2c0] sm:$0xff]
  %v105 = vld [vmem:[%s1 + $0x2c8] sm:$0xff]
  %v106 = vld [vmem:[%s1 + $0x2d0] sm:$0xff]
  %v107 = vld [vmem:[%s1 + $0x2d8] sm:$0xff]
  %v108 = vld [vmem:[%s1 + $0x2e0] sm:$0xff]
  %v109 = vld [vmem:[%s1 + $0x2e8] sm:$0xff]
  %v110 = vld [vmem:[%s1 + $0x2f0] sm:$0xff]
  %v111 = vld [vmem:[%s1 + $0x2f8] sm:$0xff]
  %v112 = vld [vmem:[%s1 + $0x300] sm:$0xff]
  %v113 = vld [vmem:[%s1 + $0x308] sm:$0xff]
  %v114 = vld [vmem:[%s1 + $0x310] sm:$0xff]
  %v115 = vld [vmem:[%s1 + $0x318] sm:$0xff]
  %v116 = vld [vmem:[%s1 + $0x320] sm:$0xf]
  %v117 = vld [vmem:[%s1 + $0x328] sm:$0xf]
  %v118 = vld [vmem:[%s1 + $0x330] sm:$0xf]
  %v119 = vld [vmem:[%s1 + $0x338] sm:$0xf]
  %v120 = vld [vmem:[%s1 + $0x340] sm:$0xf]
  %v121 = vld [vmem:[%s1 + $0x348] sm:$0xf]
  %v122 = vld [vmem:[%s1 + $0x350] sm:$0xf]
  %v123 = vld [vmem:[%s1 + $0x358] sm:$0xf]
  %v124 = vld [vmem:[%s1 + $0x360] sm:$0xf]
  %v125 = vld [vmem:[%s1 + $0x368] sm:$0xf]
  %v126 = vld [vmem:[%s1 + $0x370] sm:$0xf]
  %v127 = vld [vmem:[%s1 + $0x378] sm:$0xf]
  %v128 = vld [vmem:[%s1 + $0x380] sm:$0xf]
  %v129 = vld [vmem:[%s1 + $0x388] sm:$0xf]
  %v130 = vld [vmem:[%s1 + $0x390] sm:$0xf]
  %v131 = vld [vmem:[%s1 + $0x398] sm:$0xf]
  %v132 = vld [vmem:[%s1 + $0x3a0] sm:$0xf]
  %v133 = vld [vmem:[%s1 + $0x3a8] sm:$0xf]
  %v134 = vld [vmem:[%s1 + $0x3b0] sm:$0xf]
  %v135 = vld [vmem:[%s1 + $0x3b8] sm:$0xf]
  %v136 = vld [vmem:[%s1 + $0x3c0] sm:$0xf]
  %v137 = vld [vmem:[%s1 + $0x3c8] sm:$0xf]
  %v138 = vld [vmem:[%s1 + $0x3d0] sm:$0xf]
  %v139 = vld [vmem:[%s1 + $0x3d8] sm:$0xf]
  %v140 = vld [vmem:[%s1 + $0x3e0] sm:$0xf]
  %v141 = vld [vmem:[%s2] sm:$0xff]
  %v142 = vld [vmem:[%s2 + $0x8] sm:$0xff]
  %144 = vset.pattern.permute.xlu0 0
  %145 = vperm.xlu0 %144, %v141
  %v146 = vpop.permute.xlu0 %145
  %149 = vset.pattern.permute.xlu0 0
  %150 = vperm.xlu0 %149, %v142
  %v151 = vpop.permute.xlu0 %150
  %vm153 = vcmask 293888
  %v155 = vsel %vm153, %v14, 0
  %v158 = vsel %vm153, %v15, 0
  %vm160 = vcmask 1043456
  %v162 = vsel %vm160, %v116, 0
  %v165 = vsel %vm160, %v117, 0
  %v168 = vsel %vm160, %v118, 0
  %v171 = vsel %vm160, %v119, 0
  %v174 = vsel %vm160, %v120, 0
  %v177 = vsel %vm160, %v121, 0
  %v180 = vsel %vm160, %v122, 0
  %v183 = vsel %vm160, %v123, 0
  %v186 = vsel %vm160, %v124, 0
  %v189 = vsel %vm160, %v125, 0
  %v192 = vsel %vm160, %v126, 0
  %v195 = vsel %vm160, %v127, 0
  %v198 = vsel %vm160, %v128, 0
  %v201 = vsel %vm160, %v129, 0
  %v204 = vsel %vm160, %v130, 0
  %v207 = vsel %vm160, %v131, 0
  %v210 = vsel %vm160, %v132, 0
  %v213 = vsel %vm160, %v133, 0
  %v216 = vsel %vm160, %v134, 0
  %v219 = vsel %vm160, %v135, 0
  %v222 = vsel %vm160, %v136, 0
  %v225 = vsel %vm160, %v137, 0
  %v228 = vsel %vm160, %v138, 0
  %v231 = vsel %vm160, %v139, 0
  %v234 = vsel %vm160, %v140, 0
  %236 = vmatprep.subr.mxu0 %v17
  %237 = vmatpush1.msra.mxu0 %v16
  %238 = vmatprep.subr.mxu0 %v42
  %239 = vmatpush1.msra.mxu0 %v41
  %240 = vmatprep.subr.mxu0 %v67
  %241 = vmatpush1.msra.mxu0 %v66
  %242 = vmatprep.subr.mxu0 %v92
  %243 = vmatpush1.msra.mxu0 %v91
  %244 = vmatprep.subr.mxu0 %v165
  %245 = vmatpush1.msra.mxu0 %v162
  %246 = vmatprep.subr.mxu0 0.0
  %247 = vmatpush1.msra.mxu0 0.0
  %248 = vmatprep.subr.mxu0 0.0
  %249 = vmatpush1.msra.mxu0 0.0
  %250 = vmatprep.subr.mxu0 0.0
  %251 = vmatpush1.msra.mxu0 0.0
  %252 = vmatprep.subr.mxu0 0.0
  %253 = vmatpush1.msra.mxu0 0.0
  %254 = vmatprep.subr.mxu0 0.0
  %255 = vmatpush1.msra.mxu0 0.0
  %256 = vmatprep.subr.mxu0 0.0
  %257 = vmatpush1.msra.mxu0 0.0
  %258 = vmatprep.subr.mxu0 0.0
  %259 = vmatpush1.msra.mxu0 0.0
  %260 = vmatprep.subr.mxu0 0.0
  %261 = vmatpush1.msra.mxu0 0.0
  %262 = vmatprep.subr.mxu0 0.0
  %263 = vmatpush1.msra.mxu0 0.0
  %264 = vmatprep.subr.mxu0 0.0
  %265 = vmatpush1.msra.mxu0 0.0
  %266 = vmatprep.subr.mxu0 0.0
  %267 = vmatpush1.msra.mxu0 0.0
  %268 = vmatprep.subr.mxu0 0.0
  %269 = vmatpush1.msra.mxu0 0.0
  %270 = vmatprep.subr.mxu0 0.0
  %271 = vmatpush1.msra.mxu0 0.0
  %272 = vmatprep.subr.mxu0 0.0
  %273 = vmatpush1.msra.mxu0 0.0
  %274 = vmatprep.subr.mxu0 0.0
  %275 = vmatpush1.msra.mxu0 0.0
  %276 = vmatprep.subr.mxu0 0.0
  %277 = vmatpush1.msra.mxu0 0.0
  %278 = vmatprep.subr.mxu0 0.0
  %279 = vmatpush1.msra.mxu0 0.0
  %280 = vmatprep.subr.mxu0 0.0
  %281 = vmatpush1.msra.mxu0 0.0
  %282 = vmatprep.subr.mxu0 0.0
  %283 = vmatpush1.msra.mxu0 0.0
  %284 = vmatprep.subr.mxu0 0.0
  %285 = vmatpush1.msra.mxu0 0.0
  %286 = vmatprep.subr.mxu0 0.0
  %287 = vmatpush1.msra.mxu0 0.0
  %288 = vmatprep.subr.mxu0 0.0
  %289 = vmatpush1.msra.mxu0 0.0
  %290 = vmatprep.subr.mxu0 0.0
  %291 = vmatpush1.msra.mxu0 0.0
  %292 = vmatprep.subr.mxu0 0.0
  %293 = vmatpush1.msra.mxu0 0.0
  %294 = vmatprep.subr.mxu0 0.0
  %295 = vmatpush1.msra.mxu0 0.0
  %296 = vmatprep.subr.mxu0 0.0
  %297 = vmatpush1.msra.mxu0 0.0
  %298 = vmatprep.subr.mxu0 0.0
  %299 = vmatpush1.msra.mxu0 0.0
  %300 = vmatprep.mubr.f32.mxu0 0.0
  %301 = vmatmul.mubr.f32.gmra.mrb[0].mxu0 %v155
  %v302 = vpop.f32.mrb[0].mxu0
  %v303 = vadd.f32 %v146, %v302
  %v304 = vpop.f32.mrb[0].mxu0
  %v305 = vadd.f32 %v146, %v304
  %306 = vmatprep.mubr.f32.mxu0 0.0
  %307 = vmatmul.mubr.f32.gmra.mrb[0].mxu0 %v158
  %v308 = vpop.f32.mrb[0].mxu0
  %v309 = vadd.f32 %v151, %v308
  %v310 = vpop.f32.mrb[0].mxu0
  %v311 = vadd.f32 %v151, %v310
  %312 = vdwg.mxu0
  %313 = vmatprep.subr.mxu0 %v19
  %314 = vmatpush1.msra.mxu0 %v18
  %315 = vmatprep.subr.mxu0 %v44
  %316 = vmatpush1.msra.mxu0 %v43
  %317 = vmatprep.subr.mxu0 %v69
  %318 = vmatpush1.msra.mxu0 %v68
  %319 = vmatprep.subr.mxu0 %v94
  %320 = vmatpush1.msra.mxu0 %v93
  %321 = vmatprep.subr.mxu0 %v171
  %322 = vmatpush1.msra.mxu0 %v168
  %323 = vmatprep.subr.mxu0 0.0
  %324 = vmatpush1.msra.mxu0 0.0
  %325 = vmatprep.subr.mxu0 0.0
  %326 = vmatpush1.msra.mxu0 0.0
  %327 = vmatprep.subr.mxu0 0.0
  %328 = vmatpush1.msra.mxu0 0.0
  %329 = vmatprep.subr.mxu0 0.0
  %330 = vmatpush1.msra.mxu0 0.0
  %331 = vmatprep.subr.mxu0 0.0
  %332 = vmatpush1.msra.mxu0 0.0
  %333 = vmatprep.subr.mxu0 0.0
  %334 = vmatpush1.msra.mxu0 0.0
  %335 = vmatprep.subr.mxu0 0.0
  %336 = vmatpush1.msra.mxu0 0.0
  %337 = vmatprep.subr.mxu0 0.0
  %338 = vmatpush1.msra.mxu0 0.0
  %339 = vmatprep.subr.mxu0 0.0
  %340 = vmatpush1.msra.mxu0 0.0
  %341 = vmatprep.subr.mxu0 0.0
  %342 = vmatpush1.msra.mxu0 0.0
  %343 = vmatprep.subr.mxu0 0.0
  %344 = vmatpush1.msra.mxu0 0.0
  %345 = vmatprep.subr.mxu0 0.0
  %346 = vmatpush1.msra.mxu0 0.0
  %347 = vmatprep.subr.mxu0 0.0
  %348 = vmatpush1.msra.mxu0 0.0
  %349 = vmatprep.subr.mxu0 0.0
  %350 = vmatpush1.msra.mxu0 0.0
  %351 = vmatprep.subr.mxu0 0.0
  %352 = vmatpush1.msra.mxu0 0.0
  %353 = vmatprep.subr.mxu0 0.0
  %354 = vmatpush1.msra.mxu0 0.0
  %355 = vmatprep.subr.mxu0 0.0
  %356 = vmatpush1.msra.mxu0 0.0
  %357 = vmatprep.subr.mxu0 0.0
  %358 = vmatpush1.msra.mxu0 0.0
  %359 = vmatprep.subr.mxu0 0.0
  %360 = vmatpush1.msra.mxu0 0.0
  %361 = vmatprep.subr.mxu0 0.0
  %362 = vmatpush1.msra.mxu0 0.0
  %363 = vmatprep.subr.mxu0 0.0
  %364 = vmatpush1.msra.mxu0 0.0
  %365 = vmatprep.subr.mxu0 0.0
  %366 = vmatpush1.msra.mxu0 0.0
  %367 = vmatprep.subr.mxu0 0.0
  %368 = vmatpush1.msra.mxu0 0.0
  %369 = vmatprep.subr.mxu0 0.0
  %370 = vmatpush1.msra.mxu0 0.0
  %371 = vmatprep.subr.mxu0 0.0
  %372 = vmatpush1.msra.mxu0 0.0
  %373 = vmatprep.subr.mxu0 0.0
  %374 = vmatpush1.msra.mxu0 0.0
  %375 = vmatprep.subr.mxu0 0.0
  %376 = vmatpush1.msra.mxu0 0.0
  %377 = vmatprep.mubr.f32.mxu0 0.0
  %378 = vmatmul.mubr.f32.gmra.mrb[0].mxu0 %v155
  %v379 = vpop.f32.mrb[0].mxu0
  %v380 = vadd.f32 %v146, %v379
  %v381 = vpop.f32.mrb[0].mxu0
  %v382 = vadd.f32 %v146, %v381
  %383 = vmatprep.mubr.f32.mxu0 0.0
  %384 = vmatmul.mubr.f32.gmra.mrb[0].mxu0 %v158
  %v385 = vpop.f32.mrb[0].mxu0
  %v386 = vadd.f32 %v151, %v385
  %v387 = vpop.f32.mrb[0].mxu0
  %v388 = vadd.f32 %v151, %v387
  %389 = vdwg.mxu0
  %390 = vmatprep.subr.mxu0 %v21
  %391 = vmatpush1.msra.mxu0 %v20
  %392 = vmatprep.subr.mxu0 %v46
  %393 = vmatpush1.msra.mxu0 %v45
  %394 = vmatprep.subr.mxu0 %v71
  %395 = vmatpush1.msra.mxu0 %v70
  %396 = vmatprep.subr.mxu0 %v96
  %397 = vmatpush1.msra.mxu0 %v95
  %398 = vmatprep.subr.mxu0 %v177
  %399 = vmatpush1.msra.mxu0 %v174
  %400 = vmatprep.subr.mxu0 0.0
  %401 = vmatpush1.msra.mxu0 0.0
  %402 = vmatprep.subr.mxu0 0.0
  %403 = vmatpush1.msra.mxu0 0.0
  %404 = vmatprep.subr.mxu0 0.0
  %405 = vmatpush1.msra.mxu0 0.0
  %406 = vmatprep.subr.mxu0 0.0
  %407 = vmatpush1.msra.mxu0 0.0
  %408 = vmatprep.subr.mxu0 0.0
  %409 = vmatpush1.msra.mxu0 0.0
  %410 = vmatprep.subr.mxu0 0.0
  %411 = vmatpush1.msra.mxu0 0.0
  %412 = vmatprep.subr.mxu0 0.0
  %413 = vmatpush1.msra.mxu0 0.0
  %414 = vmatprep.subr.mxu0 0.0
  %415 = vmatpush1.msra.mxu0 0.0
  %416 = vmatprep.subr.mxu0 0.0
  %417 = vmatpush1.msra.mxu0 0.0
  %418 = vmatprep.subr.mxu0 0.0
  %419 = vmatpush1.msra.mxu0 0.0
  %420 = vmatprep.subr.mxu0 0.0
  %421 = vmatpush1.msra.mxu0 0.0
  %422 = vmatprep.subr.mxu0 0.0
  %423 = vmatpush1.msra.mxu0 0.0
  %424 = vmatprep.subr.mxu0 0.0
  %425 = vmatpush1.msra.mxu0 0.0
  %426 = vmatprep.subr.mxu0 0.0
  %427 = vmatpush1.msra.mxu0 0.0
  %428 = vmatprep.subr.mxu0 0.0
  %429 = vmatpush1.msra.mxu0 0.0
  %430 = vmatprep.subr.mxu0 0.0
  %431 = vmatpush1.msra.mxu0 0.0
  %432 = vmatprep.subr.mxu0 0.0
  %433 = vmatpush1.msra.mxu0 0.0
  %434 = vmatprep.subr.mxu0 0.0
  %435 = vmatpush1.msra.mxu0 0.0
  %436 = vmatprep.subr.mxu0 0.0
  %437 = vmatpush1.msra.mxu0 0.0
  %438 = vmatprep.subr.mxu0 0.0
  %439 = vmatpush1.msra.mxu0 0.0
  %440 = vmatprep.subr.mxu0 0.0
  %441 = vmatpush1.msra.mxu0 0.0
  %442 = vmatprep.subr.mxu0 0.0
  %443 = vmatpush1.msra.mxu0 0.0
  %444 = vmatprep.subr.mxu0 0.0
  %445 = vmatpush1.msra.mxu0 0.0
  %446 = vmatprep.subr.mxu0 0.0
  %447 = vmatpush1.msra.mxu0 0.0
  %448 = vmatprep.subr.mxu0 0.0
  %449 = vmatpush1.msra.mxu0 0.0
  %450 = vmatprep.subr.mxu0 0.0
  %451 = vmatpush1.msra.mxu0 0.0
  %452 = vmatprep.subr.mxu0 0.0
  %453 = vmatpush1.msra.mxu0 0.0
  %454 = vmatprep.mubr.f32.mxu0 0.0
  %455 = vmatmul.mubr.f32.gmra.mrb[0].mxu0 %v155
  %v456 = vpop.f32.mrb[0].mxu0
  %v457 = vadd.f32 %v146, %v456
  %v458 = vpop.f32.mrb[0].mxu0
  %v459 = vadd.f32 %v146, %v458
  %460 = vmatprep.mubr.f32.mxu0 0.0
  %461 = vmatmul.mubr.f32.gmra.mrb[0].mxu0 %v158
  %v462 = vpop.f32.mrb[0].mxu0
  %v463 = vadd.f32 %v151, %v462
  %v464 = vpop.f32.mrb[0].mxu0
  %v465 = vadd.f32 %v151, %v464
  %466 = vdwg.mxu0
  %467 = vmatprep.subr.mxu0 %v23
  %468 = vmatpush1.msra.mxu0 %v22
  %469 = vmatprep.subr.mxu0 %v48
  %470 = vmatpush1.msra.mxu0 %v47
  %471 = vmatprep.subr.mxu0 %v73
  %472 = vmatpush1.msra.mxu0 %v72
  %473 = vmatprep.subr.mxu0 %v98
  %474 = vmatpush1.msra.mxu0 %v97
  %475 = vmatprep.subr.mxu0 %v183
  %476 = vmatpush1.msra.mxu0 %v180
  %477 = vmatprep.subr.mxu0 0.0
  %478 = vmatpush1.msra.mxu0 0.0
  %479 = vmatprep.subr.mxu0 0.0
  %480 = vmatpush1.msra.mxu0 0.0
  %481 = vmatprep.subr.mxu0 0.0
  %482 = vmatpush1.msra.mxu0 0.0
  %483 = vmatprep.subr.mxu0 0.0
  %484 = vmatpush1.msra.mxu0 0.0
  %485 = vmatprep.subr.mxu0 0.0
  %486 = vmatpush1.msra.mxu0 0.0
  %487 = vmatprep.subr.mxu0 0.0
  %488 = vmatpush1.msra.mxu0 0.0
  %489 = vmatprep.subr.mxu0 0.0
  %490 = vmatpush1.msra.mxu0 0.0
  %491 = vmatprep.subr.mxu0 0.0
  %492 = vmatpush1.msra.mxu0 0.0
  %493 = vmatprep.subr.mxu0 0.0
  %494 = vmatpush1.msra.mxu0 0.0
  %495 = vmatprep.subr.mxu0 0.0
  %496 = vmatpush1.msra.mxu0 0.0
  %497 = vmatprep.subr.mxu0 0.0
  %498 = vmatpush1.msra.mxu0 0.0
  %499 = vmatprep.subr.mxu0 0.0
  %500 = vmatpush1.msra.mxu0 0.0
  %501 = vmatprep.subr.mxu0 0.0
  %502 = vmatpush1.msra.mxu0 0.0
  %503 = vmatprep.subr.mxu0 0.0
  %504 = vmatpush1.msra.mxu0 0.0
  %505 = vmatprep.subr.mxu0 0.0
  %506 = vmatpush1.msra.mxu0 0.0
  %507 = vmatprep.subr.mxu0 0.0
  %508 = vmatpush1.msra.mxu0 0.0
  %509 = vmatprep.subr.mxu0 0.0
  %510 = vmatpush1.msra.mxu0 0.0
  %511 = vmatprep.subr.mxu0 0.0
  %512 = vmatpush1.msra.mxu0 0.0
  %513 = vmatprep.subr.mxu0 0.0
  %514 = vmatpush1.msra.mxu0 0.0
  %515 = vmatprep.subr.mxu0 0.0
  %516 = vmatpush1.msra.mxu0 0.0
  %517 = vmatprep.subr.mxu0 0.0
  %518 = vmatpush1.msra.mxu0 0.0
  %519 = vmatprep.subr.mxu0 0.0
  %520 = vmatpush1.msra.mxu0 0.0
  %521 = vmatprep.subr.mxu0 0.0
  %522 = vmatpush1.msra.mxu0 0.0
  %523 = vmatprep.subr.mxu0 0.0
  %524 = vmatpush1.msra.mxu0 0.0
  %525 = vmatprep.subr.mxu0 0.0
  %526 = vmatpush1.msra.mxu0 0.0
  %527 = vmatprep.subr.mxu0 0.0
  %528 = vmatpush1.msra.mxu0 0.0
  %529 = vmatprep.subr.mxu0 0.0
  %530 = vmatpush1.msra.mxu0 0.0
  %531 = vmatprep.mubr.f32.mxu0 0.0
  %532 = vmatmul.mubr.f32.gmra.mrb[0].mxu0 %v155
  %v533 = vpop.f32.mrb[0].mxu0
  %v534 = vadd.f32 %v146, %v533
  %v535 = vpop.f32.mrb[0].mxu0
  %v536 = vadd.f32 %v146, %v535
  %537 = vmatprep.mubr.f32.mxu0 0.0
  %538 = vmatmul.mubr.f32.gmra.mrb[0].mxu0 %v158
  %v539 = vpop.f32.mrb[0].mxu0
  %v540 = vadd.f32 %v151, %v539
  %v541 = vpop.f32.mrb[0].mxu0
  %v542 = vadd.f32 %v151, %v541
  %543 = vdwg.mxu0
  %544 = vmatprep.subr.mxu0 %v25
  %545 = vmatpush1.msra.mxu0 %v24
  %546 = vmatprep.subr.mxu0 %v50
  %547 = vmatpush1.msra.mxu0 %v49
  %548 = vmatprep.subr.mxu0 %v75
  %549 = vmatpush1.msra.mxu0 %v74
  %550 = vmatprep.subr.mxu0 %v100
  %551 = vmatpush1.msra.mxu0 %v99
  %552 = vmatprep.subr.mxu0 %v189
  %553 = vmatpush1.msra.mxu0 %v186
  %554 = vmatprep.subr.mxu0 0.0
  %555 = vmatpush1.msra.mxu0 0.0
  %556 = vmatprep.subr.mxu0 0.0
  %557 = vmatpush1.msra.mxu0 0.0
  %558 = vmatprep.subr.mxu0 0.0
  %559 = vmatpush1.msra.mxu0 0.0
  %560 = vmatprep.subr.mxu0 0.0
  %561 = vmatpush1.msra.mxu0 0.0
  %562 = vmatprep.subr.mxu0 0.0
  %563 = vmatpush1.msra.mxu0 0.0
  %564 = vmatprep.subr.mxu0 0.0
  %565 = vmatpush1.msra.mxu0 0.0
  %566 = vmatprep.subr.mxu0 0.0
  %567 = vmatpush1.msra.mxu0 0.0
  %568 = vmatprep.subr.mxu0 0.0
  %569 = vmatpush1.msra.mxu0 0.0
  %570 = vmatprep.subr.mxu0 0.0
  %571 = vmatpush1.msra.mxu0 0.0
  %572 = vmatprep.subr.mxu0 0.0
  %573 = vmatpush1.msra.mxu0 0.0
  %574 = vmatprep.subr.mxu0 0.0
  %575 = vmatpush1.msra.mxu0 0.0
  %576 = vmatprep.subr.mxu0 0.0
  %577 = vmatpush1.msra.mxu0 0.0
  %578 = vmatprep.subr.mxu0 0.0
  %579 = vmatpush1.msra.mxu0 0.0
  %580 = vmatprep.subr.mxu0 0.0
  %581 = vmatpush1.msra.mxu0 0.0
  %582 = vmatprep.subr.mxu0 0.0
  %583 = vmatpush1.msra.mxu0 0.0
  %584 = vmatprep.subr.mxu0 0.0
  %585 = vmatpush1.msra.mxu0 0.0
  %586 = vmatprep.subr.mxu0 0.0
  %587 = vmatpush1.msra.mxu0 0.0
  %588 = vmatprep.subr.mxu0 0.0
  %589 = vmatpush1.msra.mxu0 0.0
  %590 = vmatprep.subr.mxu0 0.0
  %591 = vmatpush1.msra.mxu0 0.0
  %592 = vmatprep.subr.mxu0 0.0
  %593 = vmatpush1.msra.mxu0 0.0
  %594 = vmatprep.subr.mxu0 0.0
  %595 = vmatpush1.msra.mxu0 0.0
  %596 = vmatprep.subr.mxu0 0.0
  %597 = vmatpush1.msra.mxu0 0.0
  %598 = vmatprep.subr.mxu0 0.0
  %599 = vmatpush1.msra.mxu0 0.0
  %600 = vmatprep.subr.mxu0 0.0
  %601 = vmatpush1.msra.mxu0 0.0
  %602 = vmatprep.subr.mxu0 0.0
  %603 = vmatpush1.msra.mxu0 0.0
  %604 = vmatprep.subr.mxu0 0.0
  %605 = vmatpush1.msra.mxu0 0.0
  %606 = vmatprep.subr.mxu0 0.0
  %607 = vmatpush1.msra.mxu0 0.0
  %608 = vmatprep.mubr.f32.mxu0 0.0
  %609 = vmatmul.mubr.f32.gmra.mrb[0].mxu0 %v155
  %v610 = vpop.f32.mrb[0].mxu0
  %v611 = vadd.f32 %v146, %v610
  %v612 = vpop.f32.mrb[0].mxu0
  %v613 = vadd.f32 %v146, %v612
  %614 = vmatprep.mubr.f32.mxu0 0.0
  %615 = vmatmul.mubr.f32.gmra.mrb[0].mxu0 %v158
  %v616 = vpop.f32.mrb[0].mxu0
  %v617 = vadd.f32 %v151, %v616
  %v618 = vpop.f32.mrb[0].mxu0
  %v619 = vadd.f32 %v151, %v618
  %620 = vdwg.mxu0
  %621 = vmatprep.subr.mxu0 %v27
  %622 = vmatpush1.msra.mxu0 %v26
  %623 = vmatprep.subr.mxu0 %v52
  %624 = vmatpush1.msra.mxu0 %v51
  %625 = vmatprep.subr.mxu0 %v77
  %626 = vmatpush1.msra.mxu0 %v76
  %627 = vmatprep.subr.mxu0 %v102
  %628 = vmatpush1.msra.mxu0 %v101
  %629 = vmatprep.subr.mxu0 %v195
  %630 = vmatpush1.msra.mxu0 %v192
  %631 = vmatprep.subr.mxu0 0.0
  %632 = vmatpush1.msra.mxu0 0.0
  %633 = vmatprep.subr.mxu0 0.0
  %634 = vmatpush1.msra.mxu0 0.0
  %635 = vmatprep.subr.mxu0 0.0
  %636 = vmatpush1.msra.mxu0 0.0
  %637 = vmatprep.subr.mxu0 0.0
  %638 = vmatpush1.msra.mxu0 0.0
  %639 = vmatprep.subr.mxu0 0.0
  %640 = vmatpush1.msra.mxu0 0.0
  %641 = vmatprep.subr.mxu0 0.0
  %642 = vmatpush1.msra.mxu0 0.0
  %643 = vmatprep.subr.mxu0 0.0
  %644 = vmatpush1.msra.mxu0 0.0
  %645 = vmatprep.subr.mxu0 0.0
  %646 = vmatpush1.msra.mxu0 0.0
  %647 = vmatprep.subr.mxu0 0.0
  %648 = vmatpush1.msra.mxu0 0.0
  %649 = vmatprep.subr.mxu0 0.0
  %650 = vmatpush1.msra.mxu0 0.0
  %651 = vmatprep.subr.mxu0 0.0
  %652 = vmatpush1.msra.mxu0 0.0
  %653 = vmatprep.subr.mxu0 0.0
  %654 = vmatpush1.msra.mxu0 0.0
  %655 = vmatprep.subr.mxu0 0.0
  %656 = vmatpush1.msra.mxu0 0.0
  %657 = vmatprep.subr.mxu0 0.0
  %658 = vmatpush1.msra.mxu0 0.0
  %659 = vmatprep.subr.mxu0 0.0
  %660 = vmatpush1.msra.mxu0 0.0
  %661 = vmatprep.subr.mxu0 0.0
  %662 = vmatpush1.msra.mxu0 0.0
  %663 = vmatprep.subr.mxu0 0.0
  %664 = vmatpush1.msra.mxu0 0.0
  %665 = vmatprep.subr.mxu0 0.0
  %666 = vmatpush1.msra.mxu0 0.0
  %667 = vmatprep.subr.mxu0 0.0
  %668 = vmatpush1.msra.mxu0 0.0
  %669 = vmatprep.subr.mxu0 0.0
  %670 = vmatpush1.msra.mxu0 0.0
  %671 = vmatprep.subr.mxu0 0.0
  %672 = vmatpush1.msra.mxu0 0.0
  %673 = vmatprep.subr.mxu0 0.0
  %674 = vmatpush1.msra.mxu0 0.0
  %675 = vmatprep.subr.mxu0 0.0
  %676 = vmatpush1.msra.mxu0 0.0
  %677 = vmatprep.subr.mxu0 0.0
  %678 = vmatpush1.msra.mxu0 0.0
  %679 = vmatprep.subr.mxu0 0.0
  %680 = vmatpush1.msra.mxu0 0.0
  %681 = vmatprep.subr.mxu0 0.0
  %682 = vmatpush1.msra.mxu0 0.0
  %683 = vmatprep.subr.mxu0 0.0
  %684 = vmatpush1.msra.mxu0 0.0
  %685 = vmatprep.mubr.f32.mxu0 0.0
  %686 = vmatmul.mubr.f32.gmra.mrb[0].mxu0 %v155
  %v687 = vpop.f32.mrb[0].mxu0
  %v688 = vadd.f32 %v146, %v687
  %v689 = vpop.f32.mrb[0].mxu0
  %v690 = vadd.f32 %v146, %v689
  %691 = vmatprep.mubr.f32.mxu0 0.0
  %692 = vmatmul.mubr.f32.gmra.mrb[0].mxu0 %v158
  %v693 = vpop.f32.mrb[0].mxu0
  %v694 = vadd.f32 %v151, %v693
  %v695 = vpop.f32.mrb[0].mxu0
  %v696 = vadd.f32 %v151, %v695
  %697 = vdwg.mxu0
  %698 = vmatprep.subr.mxu0 %v29
  %699 = vmatpush1.msra.mxu0 %v28
  %700 = vmatprep.subr.mxu0 %v54
  %701 = vmatpush1.msra.mxu0 %v53
  %702 = vmatprep.subr.mxu0 %v79
  %703 = vmatpush1.msra.mxu0 %v78
  %704 = vmatprep.subr.mxu0 %v104
  %705 = vmatpush1.msra.mxu0 %v103
  %706 = vmatprep.subr.mxu0 %v201
  %707 = vmatpush1.msra.mxu0 %v198
  %708 = vmatprep.subr.mxu0 0.0
  %709 = vmatpush1.msra.mxu0 0.0
  %710 = vmatprep.subr.mxu0 0.0
  %711 = vmatpush1.msra.mxu0 0.0
  %712 = vmatprep.subr.mxu0 0.0
  %713 = vmatpush1.msra.mxu0 0.0
  %714 = vmatprep.subr.mxu0 0.0
  %715 = vmatpush1.msra.mxu0 0.0
  %716 = vmatprep.subr.mxu0 0.0
  %717 = vmatpush1.msra.mxu0 0.0
  %718 = vmatprep.subr.mxu0 0.0
  %719 = vmatpush1.msra.mxu0 0.0
  %720 = vmatprep.subr.mxu0 0.0
  %721 = vmatpush1.msra.mxu0 0.0
  %722 = vmatprep.subr.mxu0 0.0
  %723 = vmatpush1.msra.mxu0 0.0
  %724 = vmatprep.subr.mxu0 0.0
  %725 = vmatpush1.msra.mxu0 0.0
  %726 = vmatprep.subr.mxu0 0.0
  %727 = vmatpush1.msra.mxu0 0.0
  %728 = vmatprep.subr.mxu0 0.0
  %729 = vmatpush1.msra.mxu0 0.0
  %730 = vmatprep.subr.mxu0 0.0
  %731 = vmatpush1.msra.mxu0 0.0
  %732 = vmatprep.subr.mxu0 0.0
  %733 = vmatpush1.msra.mxu0 0.0
  %734 = vmatprep.subr.mxu0 0.0
  %735 = vmatpush1.msra.mxu0 0.0
  %736 = vmatprep.subr.mxu0 0.0
  %737 = vmatpush1.msra.mxu0 0.0
  %738 = vmatprep.subr.mxu0 0.0
  %739 = vmatpush1.msra.mxu0 0.0
  %740 = vmatprep.subr.mxu0 0.0
  %741 = vmatpush1.msra.mxu0 0.0
  %742 = vmatprep.subr.mxu0 0.0
  %743 = vmatpush1.msra.mxu0 0.0
  %744 = vmatprep.subr.mxu0 0.0
  %745 = vmatpush1.msra.mxu0 0.0
  %746 = vmatprep.subr.mxu0 0.0
  %747 = vmatpush1.msra.mxu0 0.0
  %748 = vmatprep.subr.mxu0 0.0
  %749 = vmatpush1.msra.mxu0 0.0
  %750 = vmatprep.subr.mxu0 0.0
  %751 = vmatpush1.msra.mxu0 0.0
  %752 = vmatprep.subr.mxu0 0.0
  %753 = vmatpush1.msra.mxu0 0.0
  %754 = vmatprep.subr.mxu0 0.0
  %755 = vmatpush1.msra.mxu0 0.0
  %756 = vmatprep.subr.mxu0 0.0
  %757 = vmatpush1.msra.mxu0 0.0
  %758 = vmatprep.subr.mxu0 0.0
  %759 = vmatpush1.msra.mxu0 0.0
  %760 = vmatprep.subr.mxu0 0.0
  %761 = vmatpush1.msra.mxu0 0.0
  %762 = vmatprep.mubr.f32.mxu0 0.0
  %763 = vmatmul.mubr.f32.gmra.mrb[0].mxu0 %v155
  %v764 = vpop.f32.mrb[0].mxu0
  %v765 = vadd.f32 %v146, %v764
  %v766 = vpop.f32.mrb[0].mxu0
  %v767 = vadd.f32 %v146, %v766
  %768 = vmatprep.mubr.f32.mxu0 0.0
  %769 = vmatmul.mubr.f32.gmra.mrb[0].mxu0 %v158
  %v770 = vpop.f32.mrb[0].mxu0
  %v771 = vadd.f32 %v151, %v770
  %v772 = vpop.f32.mrb[0].mxu0
  %v773 = vadd.f32 %v151, %v772
  %774 = vdwg.mxu0
  %775 = vmatprep.subr.mxu0 %v31
  %776 = vmatpush1.msra.mxu0 %v30
  %777 = vmatprep.subr.mxu0 %v56
  %778 = vmatpush1.msra.mxu0 %v55
  %779 = vmatprep.subr.mxu0 %v81
  %780 = vmatpush1.msra.mxu0 %v80
  %781 = vmatprep.subr.mxu0 %v106
  %782 = vmatpush1.msra.mxu0 %v105
  %783 = vmatprep.subr.mxu0 %v207
  %784 = vmatpush1.msra.mxu0 %v204
  %785 = vmatprep.subr.mxu0 0.0
  %786 = vmatpush1.msra.mxu0 0.0
  %787 = vmatprep.subr.mxu0 0.0
  %788 = vmatpush1.msra.mxu0 0.0
  %789 = vmatprep.subr.mxu0 0.0
  %790 = vmatpush1.msra.mxu0 0.0
  %791 = vmatprep.subr.mxu0 0.0
  %792 = vmatpush1.msra.mxu0 0.0
  %793 = vmatprep.subr.mxu0 0.0
  %794 = vmatpush1.msra.mxu0 0.0
  %795 = vmatprep.subr.mxu0 0.0
  %796 = vmatpush1.msra.mxu0 0.0
  %797 = vmatprep.subr.mxu0 0.0
  %798 = vmatpush1.msra.mxu0 0.0
  %799 = vmatprep.subr.mxu0 0.0
  %800 = vmatpush1.msra.mxu0 0.0
  %801 = vmatprep.subr.mxu0 0.0
  %802 = vmatpush1.msra.mxu0 0.0
  %803 = vmatprep.subr.mxu0 0.0
  %804 = vmatpush1.msra.mxu0 0.0
  %805 = vmatprep.subr.mxu0 0.0
  %806 = vmatpush1.msra.mxu0 0.0
  %807 = vmatprep.subr.mxu0 0.0
  %808 = vmatpush1.msra.mxu0 0.0
  %809 = vmatprep.subr.mxu0 0.0
  %810 = vmatpush1.msra.mxu0 0.0
  %811 = vmatprep.subr.mxu0 0.0
  %812 = vmatpush1.msra.mxu0 0.0
  %813 = vmatprep.subr.mxu0 0.0
  %814 = vmatpush1.msra.mxu0 0.0
  %815 = vmatprep.subr.mxu0 0.0
  %816 = vmatpush1.msra.mxu0 0.0
  %817 = vmatprep.subr.mxu0 0.0
  %818 = vmatpush1.msra.mxu0 0.0
  %819 = vmatprep.subr.mxu0 0.0
  %820 = vmatpush1.msra.mxu0 0.0
  %821 = vmatprep.subr.mxu0 0.0
  %822 = vmatpush1.msra.mxu0 0.0
  %823 = vmatprep.subr.mxu0 0.0
  %824 = vmatpush1.msra.mxu0 0.0
  %825 = vmatprep.subr.mxu0 0.0
  %826 = vmatpush1.msra.mxu0 0.0
  %827 = vmatprep.subr.mxu0 0.0
  %828 = vmatpush1.msra.mxu0 0.0
  %829 = vmatprep.subr.mxu0 0.0
  %830 = vmatpush1.msra.mxu0 0.0
  %831 = vmatprep.subr.mxu0 0.0
  %832 = vmatpush1.msra.mxu0 0.0
  %833 = vmatprep.subr.mxu0 0.0
  %834 = vmatpush1.msra.mxu0 0.0
  %835 = vmatprep.subr.mxu0 0.0
  %836 = vmatpush1.msra.mxu0 0.0
  %837 = vmatprep.subr.mxu0 0.0
  %838 = vmatpush1.msra.mxu0 0.0
  %839 = vmatprep.mubr.f32.mxu0 0.0
  %840 = vmatmul.mubr.f32.gmra.mrb[0].mxu0 %v155
  %v841 = vpop.f32.mrb[0].mxu0
  %v842 = vadd.f32 %v146, %v841
  %v843 = vpop.f32.mrb[0].mxu0
  %v844 = vadd.f32 %v146, %v843
  %845 = vmatprep.mubr.f32.mxu0 0.0
  %846 = vmatmul.mubr.f32.gmra.mrb[0].mxu0 %v158
  %v847 = vpop.f32.mrb[0].mxu0
  %v848 = vadd.f32 %v151, %v847
  %v849 = vpop.f32.mrb[0].mxu0
  %v850 = vadd.f32 %v151, %v849
  %851 = vdwg.mxu0
  %852 = vmatprep.subr.mxu0 %v33
  %853 = vmatpush1.msra.mxu0 %v32
  %854 = vmatprep.subr.mxu0 %v58
  %855 = vmatpush1.msra.mxu0 %v57
  %856 = vmatprep.subr.mxu0 %v83
  %857 = vmatpush1.msra.mxu0 %v82
  %858 = vmatprep.subr.mxu0 %v108
  %859 = vmatpush1.msra.mxu0 %v107
  %860 = vmatprep.subr.mxu0 %v213
  %861 = vmatpush1.msra.mxu0 %v210
  %862 = vmatprep.subr.mxu0 0.0
  %863 = vmatpush1.msra.mxu0 0.0
  %864 = vmatprep.subr.mxu0 0.0
  %865 = vmatpush1.msra.mxu0 0.0
  %866 = vmatprep.subr.mxu0 0.0
  %867 = vmatpush1.msra.mxu0 0.0
  %868 = vmatprep.subr.mxu0 0.0
  %869 = vmatpush1.msra.mxu0 0.0
  %870 = vmatprep.subr.mxu0 0.0
  %871 = vmatpush1.msra.mxu0 0.0
  %872 = vmatprep.subr.mxu0 0.0
  %873 = vmatpush1.msra.mxu0 0.0
  %874 = vmatprep.subr.mxu0 0.0
  %875 = vmatpush1.msra.mxu0 0.0
  %876 = vmatprep.subr.mxu0 0.0
  %877 = vmatpush1.msra.mxu0 0.0
  %878 = vmatprep.subr.mxu0 0.0
  %879 = vmatpush1.msra.mxu0 0.0
  %880 = vmatprep.subr.mxu0 0.0
  %881 = vmatpush1.msra.mxu0 0.0
  %882 = vmatprep.subr.mxu0 0.0
  %883 = vmatpush1.msra.mxu0 0.0
  %884 = vmatprep.subr.mxu0 0.0
  %885 = vmatpush1.msra.mxu0 0.0
  %886 = vmatprep.subr.mxu0 0.0
  %887 = vmatpush1.msra.mxu0 0.0
  %888 = vmatprep.subr.mxu0 0.0
  %889 = vmatpush1.msra.mxu0 0.0
  %890 = vmatprep.subr.mxu0 0.0
  %891 = vmatpush1.msra.mxu0 0.0
  %892 = vmatprep.subr.mxu0 0.0
  %893 = vmatpush1.msra.mxu0 0.0
  %894 = vmatprep.subr.mxu0 0.0
  %895 = vmatpush1.msra.mxu0 0.0
  %896 = vmatprep.subr.mxu0 0.0
  %897 = vmatpush1.msra.mxu0 0.0
  %898 = vmatprep.subr.mxu0 0.0
  %899 = vmatpush1.msra.mxu0 0.0
  %900 = vmatprep.subr.mxu0 0.0
  %901 = vmatpush1.msra.mxu0 0.0
  %902 = vmatprep.subr.mxu0 0.0
  %903 = vmatpush1.msra.mxu0 0.0
  %904 = vmatprep.subr.mxu0 0.0
  %905 = vmatpush1.msra.mxu0 0.0
  %906 = vmatprep.subr.mxu0 0.0
  %907 = vmatpush1.msra.mxu0 0.0
  %908 = vmatprep.subr.mxu0 0.0
  %909 = vmatpush1.msra.mxu0 0.0
  %910 = vmatprep.subr.mxu0 0.0
  %911 = vmatpush1.msra.mxu0 0.0
  %912 = vmatprep.subr.mxu0 0.0
  %913 = vmatpush1.msra.mxu0 0.0
  %914 = vmatprep.subr.mxu0 0.0
  %915 = vmatpush1.msra.mxu0 0.0
  %916 = vmatprep.mubr.f32.mxu0 0.0
  %917 = vmatmul.mubr.f32.gmra.mrb[0].mxu0 %v155
  %v918 = vpop.f32.mrb[0].mxu0
  %v919 = vadd.f32 %v146, %v918
  %v920 = vpop.f32.mrb[0].mxu0
  %v921 = vadd.f32 %v146, %v920
  %922 = vmatprep.mubr.f32.mxu0 0.0
  %923 = vmatmul.mubr.f32.gmra.mrb[0].mxu0 %v158
  %v924 = vpop.f32.mrb[0].mxu0
  %v925 = vadd.f32 %v151, %v924
  %v926 = vpop.f32.mrb[0].mxu0
  %v927 = vadd.f32 %v151, %v926
  %928 = vdwg.mxu0
  %929 = vmatprep.subr.mxu0 %v35
  %930 = vmatpush1.msra.mxu0 %v34
  %931 = vmatprep.subr.mxu0 %v60
  %932 = vmatpush1.msra.mxu0 %v59
  %933 = vmatprep.subr.mxu0 %v85
  %934 = vmatpush1.msra.mxu0 %v84
  %935 = vmatprep.subr.mxu0 %v110
  %936 = vmatpush1.msra.mxu0 %v109
  %937 = vmatprep.subr.mxu0 %v219
  %938 = vmatpush1.msra.mxu0 %v216
  %939 = vmatprep.subr.mxu0 0.0
  %940 = vmatpush1.msra.mxu0 0.0
  %941 = vmatprep.subr.mxu0 0.0
  %942 = vmatpush1.msra.mxu0 0.0
  %943 = vmatprep.subr.mxu0 0.0
  %944 = vmatpush1.msra.mxu0 0.0
  %945 = vmatprep.subr.mxu0 0.0
  %946 = vmatpush1.msra.mxu0 0.0
  %947 = vmatprep.subr.mxu0 0.0
  %948 = vmatpush1.msra.mxu0 0.0
  %949 = vmatprep.subr.mxu0 0.0
  %950 = vmatpush1.msra.mxu0 0.0
  %951 = vmatprep.subr.mxu0 0.0
  %952 = vmatpush1.msra.mxu0 0.0
  %953 = vmatprep.subr.mxu0 0.0
  %954 = vmatpush1.msra.mxu0 0.0
  %955 = vmatprep.subr.mxu0 0.0
  %956 = vmatpush1.msra.mxu0 0.0
  %957 = vmatprep.subr.mxu0 0.0
  %958 = vmatpush1.msra.mxu0 0.0
  %959 = vmatprep.subr.mxu0 0.0
  %960 = vmatpush1.msra.mxu0 0.0
  %961 = vmatprep.subr.mxu0 0.0
  %962 = vmatpush1.msra.mxu0 0.0
  %963 = vmatprep.subr.mxu0 0.0
  %964 = vmatpush1.msra.mxu0 0.0
  %965 = vmatprep.subr.mxu0 0.0
  %966 = vmatpush1.msra.mxu0 0.0
  %967 = vmatprep.subr.mxu0 0.0
  %968 = vmatpush1.msra.mxu0 0.0
  %969 = vmatprep.subr.mxu0 0.0
  %970 = vmatpush1.msra.mxu0 0.0
  %971 = vmatprep.subr.mxu0 0.0
  %972 = vmatpush1.msra.mxu0 0.0
  %973 = vmatprep.subr.mxu0 0.0
  %974 = vmatpush1.msra.mxu0 0.0
  %975 = vmatprep.subr.mxu0 0.0
  %976 = vmatpush1.msra.mxu0 0.0
  %977 = vmatprep.subr.mxu0 0.0
  %978 = vmatpush1.msra.mxu0 0.0
  %979 = vmatprep.subr.mxu0 0.0
  %980 = vmatpush1.msra.mxu0 0.0
  %981 = vmatprep.subr.mxu0 0.0
  %982 = vmatpush1.msra.mxu0 0.0
  %983 = vmatprep.subr.mxu0 0.0
  %984 = vmatpush1.msra.mxu0 0.0
  %985 = vmatprep.subr.mxu0 0.0
  %986 = vmatpush1.msra.mxu0 0.0
  %987 = vmatprep.subr.mxu0 0.0
  %988 = vmatpush1.msra.mxu0 0.0
  %989 = vmatprep.subr.mxu0 0.0
  %990 = vmatpush1.msra.mxu0 0.0
  %991 = vmatprep.subr.mxu0 0.0
  %992 = vmatpush1.msra.mxu0 0.0
  %993 = vmatprep.mubr.f32.mxu0 0.0
  %994 = vmatmul.mubr.f32.gmra.mrb[0].mxu0 %v155
  %v995 = vpop.f32.mrb[0].mxu0
  %v996 = vadd.f32 %v146, %v995
  %v997 = vpop.f32.mrb[0].mxu0
  %v998 = vadd.f32 %v146, %v997
  %999 = vmatprep.mubr.f32.mxu0 0.0
  %1000 = vmatmul.mubr.f32.gmra.mrb[0].mxu0 %v158
  %v1001 = vpop.f32.mrb[0].mxu0
  %v1002 = vadd.f32 %v151, %v1001
  %v1003 = vpop.f32.mrb[0].mxu0
  %v1004 = vadd.f32 %v151, %v1003
  %1005 = vdwg.mxu0
  %1006 = vmatprep.subr.mxu0 %v37
  %1007 = vmatpush1.msra.mxu0 %v36
  %1008 = vmatprep.subr.mxu0 %v62
  %1009 = vmatpush1.msra.mxu0 %v61
  %1010 = vmatprep.subr.mxu0 %v87
  %1011 = vmatpush1.msra.mxu0 %v86
  %1012 = vmatprep.subr.mxu0 %v112
  %1013 = vmatpush1.msra.mxu0 %v111
  %1014 = vmatprep.subr.mxu0 %v225
  %1015 = vmatpush1.msra.mxu0 %v222
  %1016 = vmatprep.subr.mxu0 0.0
  %1017 = vmatpush1.msra.mxu0 0.0
  %1018 = vmatprep.subr.mxu0 0.0
  %1019 = vmatpush1.msra.mxu0 0.0
  %1020 = vmatprep.subr.mxu0 0.0
  %1021 = vmatpush1.msra.mxu0 0.0
  %1022 = vmatprep.subr.mxu0 0.0
  %1023 = vmatpush1.msra.mxu0 0.0
  %1024 = vmatprep.subr.mxu0 0.0
  %1025 = vmatpush1.msra.mxu0 0.0
  %1026 = vmatprep.subr.mxu0 0.0
  %1027 = vmatpush1.msra.mxu0 0.0
  %1028 = vmatprep.subr.mxu0 0.0
  %1029 = vmatpush1.msra.mxu0 0.0
  %1030 = vmatprep.subr.mxu0 0.0
  %1031 = vmatpush1.msra.mxu0 0.0
  %1032 = vmatprep.subr.mxu0 0.0
  %1033 = vmatpush1.msra.mxu0 0.0
  %1034 = vmatprep.subr.mxu0 0.0
  %1035 = vmatpush1.msra.mxu0 0.0
  %1036 = vmatprep.subr.mxu0 0.0
  %1037 = vmatpush1.msra.mxu0 0.0
  %1038 = vmatprep.subr.mxu0 0.0
  %1039 = vmatpush1.msra.mxu0 0.0
  %1040 = vmatprep.subr.mxu0 0.0
  %1041 = vmatpush1.msra.mxu0 0.0
  %1042 = vmatprep.subr.mxu0 0.0
  %1043 = vmatpush1.msra.mxu0 0.0
  %1044 = vmatprep.subr.mxu0 0.0
  %1045 = vmatpush1.msra.mxu0 0.0
  %1046 = vmatprep.subr.mxu0 0.0
  %1047 = vmatpush1.msra.mxu0 0.0
  %1048 = vmatprep.subr.mxu0 0.0
  %1049 = vmatpush1.msra.mxu0 0.0
  %1050 = vmatprep.subr.mxu0 0.0
  %1051 = vmatpush1.msra.mxu0 0.0
  %1052 = vmatprep.subr.mxu0 0.0
  %1053 = vmatpush1.msra.mxu0 0.0
  %1054 = vmatprep.subr.mxu0 0.0
  %1055 = vmatpush1.msra.mxu0 0.0
  %1056 = vmatprep.subr.mxu0 0.0
  %1057 = vmatpush1.msra.mxu0 0.0
  %1058 = vmatprep.subr.mxu0 0.0
  %1059 = vmatpush1.msra.mxu0 0.0
  %1060 = vmatprep.subr.mxu0 0.0
  %1061 = vmatpush1.msra.mxu0 0.0
  %1062 = vmatprep.subr.mxu0 0.0
  %1063 = vmatpush1.msra.mxu0 0.0
  %1064 = vmatprep.subr.mxu0 0.0
  %1065 = vmatpush1.msra.mxu0 0.0
  %1066 = vmatprep.subr.mxu0 0.0
  %1067 = vmatpush1.msra.mxu0 0.0
  %1068 = vmatprep.subr.mxu0 0.0
  %1069 = vmatpush1.msra.mxu0 0.0
  %1070 = vmatprep.mubr.f32.mxu0 0.0
  %1071 = vmatmul.mubr.f32.gmra.mrb[0].mxu0 %v155
  %v1072 = vpop.f32.mrb[0].mxu0
  %v1073 = vadd.f32 %v146, %v1072
  %v1074 = vpop.f32.mrb[0].mxu0
  %v1075 = vadd.f32 %v146, %v1074
  %1076 = vmatprep.mubr.f32.mxu0 0.0
  %1077 = vmatmul.mubr.f32.gmra.mrb[0].mxu0 %v158
  %v1078 = vpop.f32.mrb[0].mxu0
  %v1079 = vadd.f32 %v151, %v1078
  %v1080 = vpop.f32.mrb[0].mxu0
  %v1081 = vadd.f32 %v151, %v1080
  %1082 = vdwg.mxu0
  %1083 = vmatprep.subr.mxu0 %v39
  %1084 = vmatpush1.msra.mxu0 %v38
  %1085 = vmatprep.subr.mxu0 %v64
  %1086 = vmatpush1.msra.mxu0 %v63
  %1087 = vmatprep.subr.mxu0 %v89
  %1088 = vmatpush1.msra.mxu0 %v88
  %1089 = vmatprep.subr.mxu0 %v114
  %1090 = vmatpush1.msra.mxu0 %v113
  %1091 = vmatprep.subr.mxu0 %v231
  %1092 = vmatpush1.msra.mxu0 %v228
  %1093 = vmatprep.subr.mxu0 0.0
  %1094 = vmatpush1.msra.mxu0 0.0
  %1095 = vmatprep.subr.mxu0 0.0
  %1096 = vmatpush1.msra.mxu0 0.0
  %1097 = vmatprep.subr.mxu0 0.0
  %1098 = vmatpush1.msra.mxu0 0.0
  %1099 = vmatprep.subr.mxu0 0.0
  %1100 = vmatpush1.msra.mxu0 0.0
  %1101 = vmatprep.subr.mxu0 0.0
  %1102 = vmatpush1.msra.mxu0 0.0
  %1103 = vmatprep.subr.mxu0 0.0
  %1104 = vmatpush1.msra.mxu0 0.0
  %1105 = vmatprep.subr.mxu0 0.0
  %1106 = vmatpush1.msra.mxu0 0.0
  %1107 = vmatprep.subr.mxu0 0.0
  %1108 = vmatpush1.msra.mxu0 0.0
  %1109 = vmatprep.subr.mxu0 0.0
  %1110 = vmatpush1.msra.mxu0 0.0
  %1111 = vmatprep.subr.mxu0 0.0
  %1112 = vmatpush1.msra.mxu0 0.0
  %1113 = vmatprep.subr.mxu0 0.0
  %1114 = vmatpush1.msra.mxu0 0.0
  %1115 = vmatprep.subr.mxu0 0.0
  %1116 = vmatpush1.msra.mxu0 0.0
  %1117 = vmatprep.subr.mxu0 0.0
  %1118 = vmatpush1.msra.mxu0 0.0
  %1119 = vmatprep.subr.mxu0 0.0
  %1120 = vmatpush1.msra.mxu0 0.0
  %1121 = vmatprep.subr.mxu0 0.0
  %1122 = vmatpush1.msra.mxu0 0.0
  %1123 = vmatprep.subr.mxu0 0.0
  %1124 = vmatpush1.msra.mxu0 0.0
  %1125 = vmatprep.subr.mxu0 0.0
  %1126 = vmatpush1.msra.mxu0 0.0
  %1127 = vmatprep.subr.mxu0 0.0
  %1128 = vmatpush1.msra.mxu0 0.0
  %1129 = vmatprep.subr.mxu0 0.0
  %1130 = vmatpush1.msra.mxu0 0.0
  %1131 = vmatprep.subr.mxu0 0.0
  %1132 = vmatpush1.msra.mxu0 0.0
  %1133 = vmatprep.subr.mxu0 0.0
  %1134 = vmatpush1.msra.mxu0 0.0
  %1135 = vmatprep.subr.mxu0 0.0
  %1136 = vmatpush1.msra.mxu0 0.0
  %1137 = vmatprep.subr.mxu0 0.0
  %1138 = vmatpush1.msra.mxu0 0.0
  %1139 = vmatprep.subr.mxu0 0.0
  %1140 = vmatpush1.msra.mxu0 0.0
  %1141 = vmatprep.subr.mxu0 0.0
  %1142 = vmatpush1.msra.mxu0 0.0
  %1143 = vmatprep.subr.mxu0 0.0
  %1144 = vmatpush1.msra.mxu0 0.0
  %1145 = vmatprep.subr.mxu0 0.0
  %1146 = vmatpush1.msra.mxu0 0.0
  %1147 = vmatprep.mubr.f32.mxu0 0.0
  %1148 = vmatmul.mubr.f32.gmra.mrb[0].mxu0 %v155
  %v1149 = vpop.f32.mrb[0].mxu0
  %v1150 = vadd.f32 %v146, %v1149
  %v1151 = vpop.f32.mrb[0].mxu0
  %v1152 = vadd.f32 %v146, %v1151
  %1153 = vmatprep.mubr.f32.mxu0 0.0
  %1154 = vmatmul.mubr.f32.gmra.mrb[0].mxu0 %v158
  %v1155 = vpop.f32.mrb[0].mxu0
  %v1156 = vadd.f32 %v151, %v1155
  %v1157 = vpop.f32.mrb[0].mxu0
  %v1158 = vadd.f32 %v151, %v1157
  %1159 = vdwg.mxu0
  %1160 = vmatprep.subr.mxu0 0.0
  %1161 = vmatpush1.msra.mxu0 %v40
  %1162 = vmatprep.subr.mxu0 0.0
  %1163 = vmatpush1.msra.mxu0 %v65
  %1164 = vmatprep.subr.mxu0 0.0
  %1165 = vmatpush1.msra.mxu0 %v90
  %1166 = vmatprep.subr.mxu0 0.0
  %1167 = vmatpush1.msra.mxu0 %v115
  %1168 = vmatprep.subr.mxu0 0.0
  %1169 = vmatpush1.msra.mxu0 %v234
  %1170 = vmatprep.subr.mxu0 0.0
  %1171 = vmatpush1.msra.mxu0 0.0
  %1172 = vmatprep.subr.mxu0 0.0
  %1173 = vmatpush1.msra.mxu0 0.0
  %1174 = vmatprep.subr.mxu0 0.0
  %1175 = vmatpush1.msra.mxu0 0.0
  %1176 = vmatprep.subr.mxu0 0.0
  %1177 = vmatpush1.msra.mxu0 0.0
  %1178 = vmatprep.subr.mxu0 0.0
  %1179 = vmatpush1.msra.mxu0 0.0
  %1180 = vmatprep.subr.mxu0 0.0
  %1181 = vmatpush1.msra.mxu0 0.0
  %1182 = vmatprep.subr.mxu0 0.0
  %1183 = vmatpush1.msra.mxu0 0.0
  %1184 = vmatprep.subr.mxu0 0.0
  %1185 = vmatpush1.msra.mxu0 0.0
  %1186 = vmatprep.subr.mxu0 0.0
  %1187 = vmatpush1.msra.mxu0 0.0
  %1188 = vmatprep.subr.mxu0 0.0
  %1189 = vmatpush1.msra.mxu0 0.0
  %1190 = vmatprep.subr.mxu0 0.0
  %1191 = vmatpush1.msra.mxu0 0.0
  %1192 = vmatprep.subr.mxu0 0.0
  %1193 = vmatpush1.msra.mxu0 0.0
  %1194 = vmatprep.subr.mxu0 0.0
  %1195 = vmatpush1.msra.mxu0 0.0
  %1196 = vmatprep.subr.mxu0 0.0
  %1197 = vmatpush1.msra.mxu0 0.0
  %1198 = vmatprep.subr.mxu0 0.0
  %1199 = vmatpush1.msra.mxu0 0.0
  %1200 = vmatprep.subr.mxu0 0.0
  %1201 = vmatpush1.msra.mxu0 0.0
  %1202 = vmatprep.subr.mxu0 0.0
  %1203 = vmatpush1.msra.mxu0 0.0
  %1204 = vmatprep.subr.mxu0 0.0
  %1205 = vmatpush1.msra.mxu0 0.0
  %1206 = vmatprep.subr.mxu0 0.0
  %1207 = vmatpush1.msra.mxu0 0.0
  %1208 = vmatprep.subr.mxu0 0.0
  %1209 = vmatpush1.msra.mxu0 0.0
  %1210 = vmatprep.subr.mxu0 0.0
  %1211 = vmatpush1.msra.mxu0 0.0
  %1212 = vmatprep.subr.mxu0 0.0
  %1213 = vmatpush1.msra.mxu0 0.0
  %1214 = vmatprep.subr.mxu0 0.0
  %1215 = vmatpush1.msra.mxu0 0.0
  %1216 = vmatprep.subr.mxu0 0.0
  %1217 = vmatpush1.msra.mxu0 0.0
  %1218 = vmatprep.subr.mxu0 0.0
  %1219 = vmatpush1.msra.mxu0 0.0
  %1220 = vmatprep.subr.mxu0 0.0
  %1221 = vmatpush1.msra.mxu0 0.0
  %1222 = vmatprep.subr.mxu0 0.0
  %1223 = vmatpush1.msra.mxu0 0.0
  %1224 = vmatprep.mubr.f32.mxu0 0.0
  %1225 = vmatmul.mubr.f32.gmra.mrb[0].mxu0 %v155
  %v1226 = vpop.f32.mrb[0].mxu0
  %v1227 = vadd.f32 %v146, %v1226
  %v1228 = vpop.f32.mrb[0].mxu0
  %1229 = vmatprep.mubr.f32.mxu0 0.0
  %1230 = vmatmul.mubr.f32.gmra.mrb[0].mxu0 %v158
  %v1231 = vpop.f32.mrb[0].mxu0
  %v1232 = vadd.f32 %v151, %v1231
  %v1233 = vpop.f32.mrb[0].mxu0
  %1234 = vdwg.mxu0
  %v1235 = vmax.f32 %v303, 0.0
  %v1236 = vmax.f32 %v305, 0.0
  %v1237 = vmax.f32 %v380, 0.0
  %v1238 = vmax.f32 %v382, 0.0
  %v1239 = vmax.f32 %v457, 0.0
  %v1240 = vmax.f32 %v459, 0.0
  %v1241 = vmax.f32 %v534, 0.0
  %v1242 = vmax.f32 %v536, 0.0
  %v1243 = vmax.f32 %v611, 0.0
  %v1244 = vmax.f32 %v613, 0.0
  %v1245 = vmax.f32 %v688, 0.0
  %v1246 = vmax.f32 %v690, 0.0
  %v1247 = vmax.f32 %v765, 0.0
  %v1248 = vmax.f32 %v767, 0.0
  %v1249 = vmax.f32 %v842, 0.0
  %v1250 = vmax.f32 %v844, 0.0
  %v1251 = vmax.f32 %v919, 0.0
  %v1252 = vmax.f32 %v921, 0.0
  %v1253 = vmax.f32 %v996, 0.0
  %v1254 = vmax.f32 %v998, 0.0
  %v1255 = vmax.f32 %v1073, 0.0
  %v1256 = vmax.f32 %v1075, 0.0
  %v1257 = vmax.f32 %v1150, 0.0
  %v1258 = vmax.f32 %v1152, 0.0
  %v1259 = vmax.f32 %v1227, 0.0
  %v1260 = vmax.f32 %v309, 0.0
  %v1261 = vmax.f32 %v311, 0.0
  %v1262 = vmax.f32 %v386, 0.0
  %v1263 = vmax.f32 %v388, 0.0
  %v1264 = vmax.f32 %v463, 0.0
  %v1265 = vmax.f32 %v465, 0.0
  %v1266 = vmax.f32 %v540, 0.0
  %v1267 = vmax.f32 %v542, 0.0
  %v1268 = vmax.f32 %v617, 0.0
  %v1269 = vmax.f32 %v619, 0.0
  %v1270 = vmax.f32 %v694, 0.0
  %v1271 = vmax.f32 %v696, 0.0
  %v1272 = vmax.f32 %v771, 0.0
  %v1273 = vmax.f32 %v773, 0.0
  %v1274 = vmax.f32 %v848, 0.0
  %v1275 = vmax.f32 %v850, 0.0
  %v1276 = vmax.f32 %v925, 0.0
  %v1277 = vmax.f32 %v927, 0.0
  %v1278 = vmax.f32 %v1002, 0.0
  %v1279 = vmax.f32 %v1004, 0.0
  %v1280 = vmax.f32 %v1079, 0.0
  %v1281 = vmax.f32 %v1081, 0.0
  %v1282 = vmax.f32 %v1156, 0.0
  %v1283 = vmax.f32 %v1158, 0.0
  %v1284 = vmax.f32 %v1232, 0.0
  %1285 = vst [vmem:[%s3] sm:$0xff] %v1235
  %1286 = vst [vmem:[%s3 + $0x8] sm:$0xff] %v1236
  %1287 = vst [vmem:[%s3 + $0x10] sm:$0xff] %v1237
  %1288 = vst [vmem:[%s3 + $0x18] sm:$0xff] %v1238
  %1289 = vst [vmem:[%s3 + $0x20] sm:$0xff] %v1239
  %1290 = vst [vmem:[%s3 + $0x28] sm:$0xff] %v1240
  %1291 = vst [vmem:[%s3 + $0x30] sm:$0xff] %v1241
  %1292 = vst [vmem:[%s3 + $0x38] sm:$0xff] %v1242
  %1293 = vst [vmem:[%s3 + $0x40] sm:$0xff] %v1243
  %1294 = vst [vmem:[%s3 + $0x48] sm:$0xff] %v1244
  %1295 = vst [vmem:[%s3 + $0x50] sm:$0xff] %v1245
  %1296 = vst [vmem:[%s3 + $0x58] sm:$0xff] %v1246
  %1297 = vst [vmem:[%s3 + $0x60] sm:$0xff] %v1247
  %1298 = vst [vmem:[%s3 + $0x68] sm:$0xff] %v1248
  %1299 = vst [vmem:[%s3 + $0x70] sm:$0xff] %v1249
  %1300 = vst [vmem:[%s3 + $0x78] sm:$0xff] %v1250
  %1301 = vst [vmem:[%s3 + $0x80] sm:$0xff] %v1251
  %1302 = vst [vmem:[%s3 + $0x88] sm:$0xff] %v1252
  %1303 = vst [vmem:[%s3 + $0x90] sm:$0xff] %v1253
  %1304 = vst [vmem:[%s3 + $0x98] sm:$0xff] %v1254
  %1305 = vst [vmem:[%s3 + $0xa0] sm:$0xff] %v1255
  %1306 = vst [vmem:[%s3 + $0xa8] sm:$0xff] %v1256
  %1307 = vst [vmem:[%s3 + $0xb0] sm:$0xff] %v1257
  %1308 = vst [vmem:[%s3 + $0xb8] sm:$0xff] %v1258
  %vm1309 = vcmask 523264
  %1310 = vst.msk [vmem:[%s3 + $0xc0] sm:$0xff] %vm1309, %v1259
  %1311 = vst [vmem:[%s3 + $0xc8] sm:$0xff] %v1260
  %1312 = vst [vmem:[%s3 + $0xd0] sm:$0xff] %v1261
  %1313 = vst [vmem:[%s3 + $0xd8] sm:$0xff] %v1262
  %1314 = vst [vmem:[%s3 + $0xe0] sm:$0xff] %v1263
  %1315 = vst [vmem:[%s3 + $0xe8] sm:$0xff] %v1264
  %1316 = vst [vmem:[%s3 + $0xf0] sm:$0xff] %v1265
  %1317 = vst [vmem:[%s3 + $0xf8] sm:$0xff] %v1266
  %1318 = vst [vmem:[%s3 + $0x100] sm:$0xff] %v1267
  %1319 = vst [vmem:[%s3 + $0x108] sm:$0xff] %v1268
  %1320 = vst [vmem:[%s3 + $0x110] sm:$0xff] %v1269
  %1321 = vst [vmem:[%s3 + $0x118] sm:$0xff] %v1270
  %1322 = vst [vmem:[%s3 + $0x120] sm:$0xff] %v1271
  %1323 = vst [vmem:[%s3 + $0x128] sm:$0xff] %v1272
  %1324 = vst [vmem:[%s3 + $0x130] sm:$0xff] %v1273
  %1325 = vst [vmem:[%s3 + $0x138] sm:$0xff] %v1274
  %1326 = vst [vmem:[%s3 + $0x140] sm:$0xff] %v1275
  %1327 = vst [vmem:[%s3 + $0x148] sm:$0xff] %v1276
  %1328 = vst [vmem:[%s3 + $0x150] sm:$0xff] %v1277
  %1329 = vst [vmem:[%s3 + $0x158] sm:$0xff] %v1278
  %1330 = vst [vmem:[%s3 + $0x160] sm:$0xff] %v1279
  %1331 = vst [vmem:[%s3 + $0x168] sm:$0xff] %v1280
  %1332 = vst [vmem:[%s3 + $0x170] sm:$0xff] %v1281
  %1333 = vst [vmem:[%s3 + $0x178] sm:$0xff] %v1282
  %1334 = vst [vmem:[%s3 + $0x180] sm:$0xff] %v1283
  %1335 = vst.msk [vmem:[%s3 + $0x188] sm:$0xff] %vm1309, %v1284
  // Predicated region
  $region14: #{rollout_encoder_forward.3} parent=0 // pred_check
    _
  $region15: #{rollout_encoder_forward.3} parent=0 // pred_check_branch
    %1337 = sbr.rel (0) target = $region17
  $region16: #{rollout_encoder_forward.3} parent=0 // pred_region
    _
  $region17: #{rollout_encoder_forward.3} parent=0 // pred_fallthru
    _
  // Predicated region
  $region18: #{rollout_encoder_forward.3} parent=0 // pred_check
    _
  $region19: #{rollout_encoder_forward.3} parent=0 // pred_check_branch
    %1339 = sbr.rel (0) target = $region21
  $region20: #{rollout_encoder_forward.3} parent=0 // pred_region
    _
  $region21: #{rollout_encoder_forward.3} parent=0 // pred_fallthru
    _

// kernel: rollout_encoder_forward.4
$region0: #{rollout_encoder_forward.4}
  #allocation0 [shape = 'u32[]', space=smem, size = 0x4, offset = 0x4, fixed_abs, tag = 'smem constant byte address 0x4 - core index']
  #allocation1 [shape = 'u32[144,128]{1,0:T(1,128)}', space=vmem, size = 0x12000, scoped, tag = 'internal scratch']
  %s0 = inlined_call_operand.vmem [shape: f32[16,144], index: 0, kind: input, shape index: {}]
  %s1 = inlined_call_operand.vmem [shape: f32[144,576], index: 1, kind: input, shape index: {}]
  %s2 = inlined_call_operand.vmem [shape: f32[16,1], index: 2, kind: input, shape index: {}]
  %s3 = inlined_call_operand.vmem [shape: f32[16,576], index: 3, kind: output, shape index: {}]
  %s4 = sld [smem:[#allocation0]]
  $region22: #{rollout_encoder_forward.4} parent=0
    _
  %s6 = ssub.s32 1, %s4
  %s7 = scalar_select 0, %s6, %s4
  // Predicated region
  $region2: #{rollout_encoder_forward.4} parent=0 // pred_check
    _
  $region3: #{rollout_encoder_forward.4} parent=0 // pred_check_branch
    %9 = sbr.rel (0) target = $region5
  $region4: #{rollout_encoder_forward.4} parent=0 // pred_region
    _
  $region5: #{rollout_encoder_forward.4} parent=0 // pred_fallthru
    _
  // Predicated region
  $region6: #{rollout_encoder_forward.4} parent=0 // pred_check
    _
  $region7: #{rollout_encoder_forward.4} parent=0 // pred_check_branch
    %11 = sbr.rel (0) target = $region9
  $region8: #{rollout_encoder_forward.4} parent=0 // pred_region
    _
  $region9: #{rollout_encoder_forward.4} parent=0 // pred_fallthru
    _
  // Predicated region
  $region10: #{rollout_encoder_forward.4} parent=0 // pred_check
    _
  $region11: #{rollout_encoder_forward.4} parent=0 // pred_check_branch
    %13 = sbr.rel (0) target = $region13
  $region12: #{rollout_encoder_forward.4} parent=0 // pred_region
    _
  $region13: #{rollout_encoder_forward.4} parent=0 // pred_fallthru
    _
  %v14 = vld [vmem:[%s0] sm:$0xff]
  %v15 = vld [vmem:[%s0 + $0x8] sm:$0xff]
  %v16 = vld [vmem:[%s0 + $0x10] sm:$0xff]
  %v17 = vld [vmem:[%s0 + $0x18] sm:$0xff]
  %v18 = vld [vmem:[%s1] sm:$0xff]
  %v19 = vld [vmem:[%s1 + $0x8] sm:$0xff]
  %v20 = vld [vmem:[%s1 + $0x10] sm:$0xff]
  %v21 = vld [vmem:[%s1 + $0x18] sm:$0xff]
  %v22 = vld [vmem:[%s1 + $0x20] sm:$0xff]
  %v23 = vld [vmem:[%s1 + $0x28] sm:$0xff]
  %v24 = vld [vmem:[%s1 + $0x30] sm:$0xff]
  %v25 = vld [vmem:[%s1 + $0x38] sm:$0xff]
  %v26 = vld [vmem:[%s1 + $0x40] sm:$0xff]
  %v27 = vld [vmem:[%s1 + $0x48] sm:$0xff]
  %v28 = vld [vmem:[%s1 + $0x50] sm:$0xff]
  %v29 = vld [vmem:[%s1 + $0x58] sm:$0xff]
  %v30 = vld [vmem:[%s1 + $0x60] sm:$0xff]
  %v31 = vld [vmem:[%s1 + $0x68] sm:$0xff]
  %v32 = vld [vmem:[%s1 + $0x70] sm:$0xff]
  %v33 = vld [vmem:[%s1 + $0x78] sm:$0xff]
  %v34 = vld [vmem:[%s1 + $0x80] sm:$0xff]
  %v35 = vld [vmem:[%s1 + $0x88] sm:$0xff]
  %v36 = vld [vmem:[%s1 + $0x90] sm:$0xff]
  %v37 = vld [vmem:[%s1 + $0x98] sm:$0xff]
  %v38 = vld [vmem:[%s1 + $0xa0] sm:$0xff]
  %v39 = vld [vmem:[%s1 + $0xa8] sm:$0xff]
  %v40 = vld [vmem:[%s1 + $0xb0] sm:$0xff]
  %v41 = vld [vmem:[%s1 + $0xb8] sm:$0xff]
  %v42 = vld [vmem:[%s1 + $0xc0] sm:$0xff]
  %v43 = vld [vmem:[%s1 + $0xc8] sm:$0xff]
  %v44 = vld [vmem:[%s1 + $0xd0] sm:$0xff]
  %v45 = vld [vmem:[%s1 + $0xd8] sm:$0xff]
  %v46 = vld [vmem:[%s1 + $0xe0] sm:$0xff]
  %v47 = vld [vmem:[%s1 + $0xe8] sm:$0xff]
  %v48 = vld [vmem:[%s1 + $0xf0] sm:$0xff]
  %v49 = vld [vmem:[%s1 + $0xf8] sm:$0xff]
  %v50 = vld [vmem:[%s1 + $0x100] sm:$0xff]
  %v51 = vld [vmem:[%s1 + $0x108] sm:$0xff]
  %v52 = vld [vmem:[%s1 + $0x110] sm:$0xff]
  %v53 = vld [vmem:[%s1 + $0x118] sm:$0xff]
  %v54 = vld [vmem:[%s1 + $0x120] sm:$0xff]
  %v55 = vld [vmem:[%s1 + $0x128] sm:$0xff]
  %v56 = vld [vmem:[%s1 + $0x130] sm:$0xff]
  %v57 = vld [vmem:[%s1 + $0x138] sm:$0xff]
  %v58 = vld [vmem:[%s1 + $0x140] sm:$0xff]
  %v59 = vld [vmem:[%s1 + $0x148] sm:$0xff]
  %v60 = vld [vmem:[%s1 + $0x150] sm:$0xff]
  %v61 = vld [vmem:[%s1 + $0x158] sm:$0xff]
  %v62 = vld [vmem:[%s1 + $0x160] sm:$0xff]
  %v63 = vld [vmem:[%s1 + $0x168] sm:$0xff]
  %v64 = vld [vmem:[%s1 + $0x170] sm:$0xff]
  %v65 = vld [vmem:[%s1 + $0x178] sm:$0xff]
  %v66 = vld [vmem:[%s1 + $0x180] sm:$0xff]
  %v67 = vld [vmem:[%s1 + $0x188] sm:$0xff]
  %v68 = vld [vmem:[%s1 + $0x190] sm:$0xff]
  %v69 = vld [vmem:[%s1 + $0x198] sm:$0xff]
  %v70 = vld [vmem:[%s1 + $0x1a0] sm:$0xff]
  %v71 = vld [vmem:[%s1 + $0x1a8] sm:$0xff]
  %v72 = vld [vmem:[%s1 + $0x1b0] sm:$0xff]
  %v73 = vld [vmem:[%s1 + $0x1b8] sm:$0xff]
  %v74 = vld [vmem:[%s1 + $0x1c0] sm:$0xff]
  %v75 = vld [vmem:[%s1 + $0x1c8] sm:$0xff]
  %v76 = vld [vmem:[%s1 + $0x1d0] sm:$0xff]
  %v77 = vld [vmem:[%s1 + $0x1d8] sm:$0xff]
  %v78 = vld [vmem:[%s1 + $0x1e0] sm:$0xff]
  %v79 = vld [vmem:[%s1 + $0x1e8] sm:$0xff]
  %v80 = vld [vmem:[%s1 + $0x1f0] sm:$0xff]
  %v81 = vld [vmem:[%s1 + $0x1f8] sm:$0xff]
  %v82 = vld [vmem:[%s1 + $0x200] sm:$0xff]
  %v83 = vld [vmem:[%s1 + $0x208] sm:$0xff]
  %v84 = vld [vmem:[%s1 + $0x210] sm:$0xff]
  %v85 = vld [vmem:[%s1 + $0x218] sm:$0xff]
  %v86 = vld [vmem:[%s1 + $0x220] sm:$0xff]
  %v87 = vld [vmem:[%s1 + $0x228] sm:$0xff]
  %v88 = vld [vmem:[%s1 + $0x230] sm:$0xff]
  %v89 = vld [vmem:[%s1 + $0x238] sm:$0xff]
  %v90 = vld [vmem:[%s1 + $0x240] sm:$0xff]
  %v91 = vld [vmem:[%s1 + $0x248] sm:$0xff]
  %v92 = vld [vmem:[%s1 + $0x250] sm:$0xff]
  %v93 = vld [vmem:[%s1 + $0x258] sm:$0xff]
  %v94 = vld [vmem:[%s1 + $0x260] sm:$0xff]
  %v95 = vld [vmem:[%s1 + $0x268] sm:$0xff]
  %v96 = vld [vmem:[%s1 + $0x270] sm:$0xff]
  %v97 = vld [vmem:[%s1 + $0x278] sm:$0xff]
  %v98 = vld [vmem:[%s1 + $0x280] sm:$0xff]
  %v99 = vld [vmem:[%s1 + $0x288] sm:$0xff]
  %v100 = vld [vmem:[%s1 + $0x290] sm:$0xff]
  %v101 = vld [vmem:[%s1 + $0x298] sm:$0xff]
  %v102 = vld [vmem:[%s1 + $0x2a0] sm:$0xff]
  %v103 = vld [vmem:[%s1 + $0x2a8] sm:$0xff]
  %v104 = vld [vmem:[%s1 + $0x2b0] sm:$0xff]
  %v105 = vld [vmem:[%s1 + $0x2b8] sm:$0xff]
  %v106 = vld [vmem:[%s1 + $0x2c0] sm:$0xff]
  %v107 = vld [vmem:[%s1 + $0x2c8] sm:$0xff]
  %v108 = vld [vmem:[%s2] sm:$0xff]
  %v109 = vld [vmem:[%s2 + $0x8] sm:$0xff]
  %111 = vset.pattern.permute.xlu0 0
  %112 = vperm.xlu0 %111, %v108
  %v113 = vpop.permute.xlu0 %112
  %116 = vset.pattern.permute.xlu0 0
  %117 = vperm.xlu0 %116, %v109
  %v118 = vpop.permute.xlu0 %117
  %vm120 = vcmask 130048
  %v122 = vsel %vm120, %v15, 0
  %v125 = vsel %vm120, %v17, 0
  %127 = vmatprep.subr.mxu0 %v19
  %128 = vmatpush1.msra.mxu0 %v18
  %129 = vmatprep.subr.mxu0 %v24
  %130 = vmatpush1.msra.mxu0 %v23
  %131 = vmatprep.subr.mxu0 %v29
  %132 = vmatpush1.msra.mxu0 %v28
  %133 = vmatprep.subr.mxu0 %v34
  %134 = vmatpush1.msra.mxu0 %v33
  %135 = vmatprep.subr.mxu0 %v39
  %136 = vmatpush1.msra.mxu0 %v38
  %137 = vmatprep.subr.mxu0 %v44
  %138 = vmatpush1.msra.mxu0 %v43
  %139 = vmatprep.subr.mxu0 %v49
  %140 = vmatpush1.msra.mxu0 %v48
  %141 = vmatprep.subr.mxu0 %v54
  %142 = vmatpush1.msra.mxu0 %v53
  %143 = vmatprep.subr.mxu0 %v59
  %144 = vmatpush1.msra.mxu0 %v58
  %145 = vmatprep.subr.mxu0 %v64
  %146 = vmatpush1.msra.mxu0 %v63
  %147 = vmatprep.subr.mxu0 %v69
  %148 = vmatpush1.msra.mxu0 %v68
  %149 = vmatprep.subr.mxu0 %v74
  %150 = vmatpush1.msra.mxu0 %v73
  %151 = vmatprep.subr.mxu0 %v79
  %152 = vmatpush1.msra.mxu0 %v78
  %153 = vmatprep.subr.mxu0 %v84
  %154 = vmatpush1.msra.mxu0 %v83
  %155 = vmatprep.subr.mxu0 %v89
  %156 = vmatpush1.msra.mxu0 %v88
  %157 = vmatprep.subr.mxu0 %v94
  %158 = vmatpush1.msra.mxu0 %v93
  %159 = vmatprep.subr.mxu0 %v99
  %160 = vmatpush1.msra.mxu0 %v98
  %161 = vmatprep.subr.mxu0 %v104
  %162 = vmatpush1.msra.mxu0 %v103
  %163 = vmatprep.subr.mxu0 0.0
  %164 = vmatpush1.msra.mxu0 0.0
  %165 = vmatprep.subr.mxu0 0.0
  %166 = vmatpush1.msra.mxu0 0.0
  %167 = vmatprep.subr.mxu0 0.0
  %168 = vmatpush1.msra.mxu0 0.0
  %169 = vmatprep.subr.mxu0 0.0
  %170 = vmatpush1.msra.mxu0 0.0
  %171 = vmatprep.subr.mxu0 0.0
  %172 = vmatpush1.msra.mxu0 0.0
  %173 = vmatprep.subr.mxu0 0.0
  %174 = vmatpush1.msra.mxu0 0.0
  %175 = vmatprep.subr.mxu0 0.0
  %176 = vmatpush1.msra.mxu0 0.0
  %177 = vmatprep.subr.mxu0 0.0
  %178 = vmatpush1.msra.mxu0 0.0
  %179 = vmatprep.subr.mxu0 0.0
  %180 = vmatpush1.msra.mxu0 0.0
  %181 = vmatprep.subr.mxu0 0.0
  %182 = vmatpush1.msra.mxu0 0.0
  %183 = vmatprep.subr.mxu0 0.0
  %184 = vmatpush1.msra.mxu0 0.0
  %185 = vmatprep.subr.mxu0 0.0
  %186 = vmatpush1.msra.mxu0 0.0
  %187 = vmatprep.subr.mxu0 0.0
  %188 = vmatpush1.msra.mxu0 0.0
  %189 = vmatprep.subr.mxu0 0.0
  %190 = vmatpush1.msra.mxu0 0.0
  %191 = vmatprep.mubr.f32.mxu0 %v122
  %192 = vmatmul.mubr.f32.gmra.mrb[0].mxu0 %v14
  %v193 = vpop.f32.mrb[0].mxu0
  %v194 = vadd.f32 %v113, %v193
  %v195 = vpop.f32.mrb[0].mxu0
  %v196 = vadd.f32 %v113, %v195
  %197 = vmatprep.mubr.f32.mxu0 %v125
  %198 = vmatmul.mubr.f32.gmra.mrb[0].mxu0 %v16
  %v199 = vpop.f32.mrb[0].mxu0
  %v200 = vadd.f32 %v118, %v199
  %v201 = vpop.f32.mrb[0].mxu0
  %v202 = vadd.f32 %v118, %v201
  %203 = vdwg.mxu0
  %204 = vmatprep.subr.mxu0 %v21
  %205 = vmatpush1.msra.mxu0 %v20
  %206 = vmatprep.subr.mxu0 %v26
  %207 = vmatpush1.msra.mxu0 %v25
  %208 = vmatprep.subr.mxu0 %v31
  %209 = vmatpush1.msra.mxu0 %v30
  %210 = vmatprep.subr.mxu0 %v36
  %211 = vmatpush1.msra.mxu0 %v35
  %212 = vmatprep.subr.mxu0 %v41
  %213 = vmatpush1.msra.mxu0 %v40
  %214 = vmatprep.subr.mxu0 %v46
  %215 = vmatpush1.msra.mxu0 %v45
  %216 = vmatprep.subr.mxu0 %v51
  %217 = vmatpush1.msra.mxu0 %v50
  %218 = vmatprep.subr.mxu0 %v56
  %219 = vmatpush1.msra.mxu0 %v55
  %220 = vmatprep.subr.mxu0 %v61
  %221 = vmatpush1.msra.mxu0 %v60
  %222 = vmatprep.subr.mxu0 %v66
  %223 = vmatpush1.msra.mxu0 %v65
  %224 = vmatprep.subr.mxu0 %v71
  %225 = vmatpush1.msra.mxu0 %v70
  %226 = vmatprep.subr.mxu0 %v76
  %227 = vmatpush1.msra.mxu0 %v75
  %228 = vmatprep.subr.mxu0 %v81
  %229 = vmatpush1.msra.mxu0 %v80
  %230 = vmatprep.subr.mxu0 %v86
  %231 = vmatpush1.msra.mxu0 %v85
  %232 = vmatprep.subr.mxu0 %v91
  %233 = vmatpush1.msra.mxu0 %v90
  %234 = vmatprep.subr.mxu0 %v96
  %235 = vmatpush1.msra.mxu0 %v95
  %236 = vmatprep.subr.mxu0 %v101
  %237 = vmatpush1.msra.mxu0 %v100
  %238 = vmatprep.subr.mxu0 %v106
  %239 = vmatpush1.msra.mxu0 %v105
  %240 = vmatprep.subr.mxu0 0.0
  %241 = vmatpush1.msra.mxu0 0.0
  %242 = vmatprep.subr.mxu0 0.0
  %243 = vmatpush1.msra.mxu0 0.0
  %244 = vmatprep.subr.mxu0 0.0
  %245 = vmatpush1.msra.mxu0 0.0
  %246 = vmatprep.subr.mxu0 0.0
  %247 = vmatpush1.msra.mxu0 0.0
  %248 = vmatprep.subr.mxu0 0.0
  %249 = vmatpush1.msra.mxu0 0.0
  %250 = vmatprep.subr.mxu0 0.0
  %251 = vmatpush1.msra.mxu0 0.0
  %252 = vmatprep.subr.mxu0 0.0
  %253 = vmatpush1.msra.mxu0 0.0
  %254 = vmatprep.subr.mxu0 0.0
  %255 = vmatpush1.msra.mxu0 0.0
  %256 = vmatprep.subr.mxu0 0.0
  %257 = vmatpush1.msra.mxu0 0.0
  %258 = vmatprep.subr.mxu0 0.0
  %259 = vmatpush1.msra.mxu0 0.0
  %260 = vmatprep.subr.mxu0 0.0
  %261 = vmatpush1.msra.mxu0 0.0
  %262 = vmatprep.subr.mxu0 0.0
  %263 = vmatpush1.msra.mxu0 0.0
  %264 = vmatprep.subr.mxu0 0.0
  %265 = vmatpush1.msra.mxu0 0.0
  %266 = vmatprep.subr.mxu0 0.0
  %267 = vmatpush1.msra.mxu0 0.0
  %268 = vmatprep.mubr.f32.mxu0 %v122
  %269 = vmatmul.mubr.f32.gmra.mrb[0].mxu0 %v14
  %v270 = vpop.f32.mrb[0].mxu0
  %v271 = vadd.f32 %v113, %v270
  %v272 = vpop.f32.mrb[0].mxu0
  %v273 = vadd.f32 %v113, %v272
  %274 = vmatprep.mubr.f32.mxu0 %v125
  %275 = vmatmul.mubr.f32.gmra.mrb[0].mxu0 %v16
  %v276 = vpop.f32.mrb[0].mxu0
  %v277 = vadd.f32 %v118, %v276
  %v278 = vpop.f32.mrb[0].mxu0
  %v279 = vadd.f32 %v118, %v278
  %280 = vdwg.mxu0
  %281 = vmatprep.subr.mxu0 0.0
  %282 = vmatpush1.msra.mxu0 %v22
  %283 = vmatprep.subr.mxu0 0.0
  %284 = vmatpush1.msra.mxu0 %v27
  %285 = vmatprep.subr.mxu0 0.0
  %286 = vmatpush1.msra.mxu0 %v32
  %287 = vmatprep.subr.mxu0 0.0
  %288 = vmatpush1.msra.mxu0 %v37
  %289 = vmatprep.subr.mxu0 0.0
  %290 = vmatpush1.msra.mxu0 %v42
  %291 = vmatprep.subr.mxu0 0.0
  %292 = vmatpush1.msra.mxu0 %v47
  %293 = vmatprep.subr.mxu0 0.0
  %294 = vmatpush1.msra.mxu0 %v52
  %295 = vmatprep.subr.mxu0 0.0
  %296 = vmatpush1.msra.mxu0 %v57
  %297 = vmatprep.subr.mxu0 0.0
  %298 = vmatpush1.msra.mxu0 %v62
  %299 = vmatprep.subr.mxu0 0.0
  %300 = vmatpush1.msra.mxu0 %v67
  %301 = vmatprep.subr.mxu0 0.0
  %302 = vmatpush1.msra.mxu0 %v72
  %303 = vmatprep.subr.mxu0 0.0
  %304 = vmatpush1.msra.mxu0 %v77
  %305 = vmatprep.subr.mxu0 0.0
  %306 = vmatpush1.msra.mxu0 %v82
  %307 = vmatprep.subr.mxu0 0.0
  %308 = vmatpush1.msra.mxu0 %v87
  %309 = vmatprep.subr.mxu0 0.0
  %310 = vmatpush1.msra.mxu0 %v92
  %311 = vmatprep.subr.mxu0 0.0
  %312 = vmatpush1.msra.mxu0 %v97
  %313 = vmatprep.subr.mxu0 0.0
  %314 = vmatpush1.msra.mxu0 %v102
  %315 = vmatprep.subr.mxu0 0.0
  %316 = vmatpush1.msra.mxu0 %v107
  %317 = vmatprep.subr.mxu0 0.0
  %318 = vmatpush1.msra.mxu0 0.0
  %319 = vmatprep.subr.mxu0 0.0
  %320 = vmatpush1.msra.mxu0 0.0
  %321 = vmatprep.subr.mxu0 0.0
  %322 = vmatpush1.msra.mxu0 0.0
  %323 = vmatprep.subr.mxu0 0.0
  %324 = vmatpush1.msra.mxu0 0.0
  %325 = vmatprep.subr.mxu0 0.0
  %326 = vmatpush1.msra.mxu0 0.0
  %327 = vmatprep.subr.mxu0 0.0
  %328 = vmatpush1.msra.mxu0 0.0
  %329 = vmatprep.subr.mxu0 0.0
  %330 = vmatpush1.msra.mxu0 0.0
  %331 = vmatprep.subr.mxu0 0.0
  %332 = vmatpush1.msra.mxu0 0.0
  %333 = vmatprep.subr.mxu0 0.0
  %334 = vmatpush1.msra.mxu0 0.0
  %335 = vmatprep.subr.mxu0 0.0
  %336 = vmatpush1.msra.mxu0 0.0
  %337 = vmatprep.subr.mxu0 0.0
  %338 = vmatpush1.msra.mxu0 0.0
  %339 = vmatprep.subr.mxu0 0.0
  %340 = vmatpush1.msra.mxu0 0.0
  %341 = vmatprep.subr.mxu0 0.0
  %342 = vmatpush1.msra.mxu0 0.0
  %343 = vmatprep.subr.mxu0 0.0
  %344 = vmatpush1.msra.mxu0 0.0
  %345 = vmatprep.mubr.f32.mxu0 %v122
  %346 = vmatmul.mubr.f32.gmra.mrb[0].mxu0 %v14
  %v347 = vpop.f32.mrb[0].mxu0
  %v348 = vadd.f32 %v113, %v347
  %v349 = vpop.f32.mrb[0].mxu0
  %350 = vmatprep.mubr.f32.mxu0 %v125
  %351 = vmatmul.mubr.f32.gmra.mrb[0].mxu0 %v16
  %v352 = vpop.f32.mrb[0].mxu0
  %v353 = vadd.f32 %v118, %v352
  %v354 = vpop.f32.mrb[0].mxu0
  %355 = vdwg.mxu0
  %v356 = vmax.f32 %v194, 0.0
  %v357 = vmax.f32 %v196, 0.0
  %v358 = vmax.f32 %v271, 0.0
  %v359 = vmax.f32 %v273, 0.0
  %v360 = vmax.f32 %v348, 0.0
  %v361 = vmax.f32 %v200, 0.0
  %v362 = vmax.f32 %v202, 0.0
  %v363 = vmax.f32 %v277, 0.0
  %v364 = vmax.f32 %v279, 0.0
  %v365 = vmax.f32 %v353, 0.0
  %366 = vst [vmem:[%s3] sm:$0xff] %v356
  %367 = vst [vmem:[%s3 + $0x8] sm:$0xff] %v357
  %368 = vst [vmem:[%s3 + $0x10] sm:$0xff] %v358
  %369 = vst [vmem:[%s3 + $0x18] sm:$0xff] %v359
  %vm370 = vcmask 523264
  %371 = vst.msk [vmem:[%s3 + $0x20] sm:$0xff] %vm370, %v360
  %372 = vst [vmem:[%s3 + $0x28] sm:$0xff] %v361
  %373 = vst [vmem:[%s3 + $0x30] sm:$0xff] %v362
  %374 = vst [vmem:[%s3 + $0x38] sm:$0xff] %v363
  %375 = vst [vmem:[%s3 + $0x40] sm:$0xff] %v364
  %376 = vst.msk [vmem:[%s3 + $0x48] sm:$0xff] %vm370, %v365
  // Predicated region
  $region14: #{rollout_encoder_forward.4} parent=0 // pred_check
    _
  $region15: #{rollout_encoder_forward.4} parent=0 // pred_check_branch
    %378 = sbr.rel (0) target = $region17
  $region16: #{rollout_encoder_forward.4} parent=0 // pred_region
    _
  $region17: #{rollout_encoder_forward.4} parent=0 // pred_fallthru
    _
  // Predicated region
  $region18: #{rollout_encoder_forward.4} parent=0 // pred_check
    _
  $region19: #{rollout_encoder_forward.4} parent=0 // pred_check_branch
    %380 = sbr.rel (0) target = $region21
  $region20: #{rollout_encoder_forward.4} parent=0 // pred_region
    _
  $region21: #{rollout_encoder_forward.4} parent=0 // pred_fallthru
    _

// kernel: rollout_encoder_forward.5
$region0: #{rollout_encoder_forward.5}
  #allocation0 [shape = 'u32[]', space=smem, size = 0x4, offset = 0x4, fixed_abs, tag = 'smem constant byte address 0x4 - core index']
  #allocation1 [shape = 'u32[144,128]{1,0:T(1,128)}', space=vmem, size = 0x12000, scoped, tag = 'internal scratch']
  %s0 = inlined_call_operand.vmem [shape: f32[16,576], index: 0, kind: input, shape index: {}]
  %s1 = inlined_call_operand.vmem [shape: f32[16,1], index: 1, kind: input, shape index: {}]
  %s2 = inlined_call_operand.vmem [shape: f32[576,96], index: 2, kind: input, shape index: {}]
  %s3 = inlined_call_operand.vmem [shape: f32[1,96], index: 3, kind: input, shape index: {}]
  %s4 = inlined_call_operand.vmem [shape: f32[1,96], index: 4, kind: input, shape index: {}]
  %s5 = inlined_call_operand.vmem [shape: f32[32,96], index: 5, kind: input, shape index: {}]
  %s6 = inlined_call_operand.vmem [shape: f32[1,32], index: 6, kind: input, shape index: {}]
  %s7 = inlined_call_operand.hbm [shape: f32[2,32], index: 7, kind: output, shape index: {}]
  %s8 = sld [smem:[#allocation0]]
  $region38: #{rollout_encoder_forward.5} parent=0
    _
  %s10 = ssub.s32 1, %s8
  %s11 = scalar_select 0, %s10, %s8
  $region1: #{rollout_encoder_forward.5} parent=0
    #allocation2 [shape = 'u8[1024]{0}', space=vmem, size = 0x400, scoped, tag = 'output window, operand 0, single buffered']
    #allocation3 [shape = 's32[1]{0}', space=sflag, size = 0x4, scoped, tag = 'scoped memory for rollout_encoder_forward.5']
    %12 = vsyncpa [#allocation3], 0
    // Predicated region
    $region2: #{rollout_encoder_forward.5} parent=1 // pred_check
      _
    $region3: #{rollout_encoder_forward.5} parent=1 // pred_check_branch
      %14 = sbr.rel (0) target = $region5
    $region4: #{rollout_encoder_forward.5} parent=1 // pred_region
      _
    $region5: #{rollout_encoder_forward.5} parent=1 // pred_fallthru
      _
    // Predicated region
    $region6: #{rollout_encoder_forward.5} parent=1 // pred_check
      _
    $region7: #{rollout_encoder_forward.5} parent=1 // pred_check_branch
      %16 = sbr.rel (0) target = $region9
    $region8: #{rollout_encoder_forward.5} parent=1 // pred_region
      _
    $region9: #{rollout_encoder_forward.5} parent=1 // pred_fallthru
      _
    // Predicated region
    $region10: #{rollout_encoder_forward.5} parent=1 // pred_check
      _
    $region11: #{rollout_encoder_forward.5} parent=1 // pred_check_branch
      %18 = sbr.rel (0) target = $region13
    $region12: #{rollout_encoder_forward.5} parent=1 // pred_region
      _
    $region13: #{rollout_encoder_forward.5} parent=1 // pred_fallthru
      _
    // Predicated region
    $region14: #{rollout_encoder_forward.5} parent=1 // pred_check
      _
    $region15: #{rollout_encoder_forward.5} parent=1 // pred_check_branch
      %20 = sbr.rel (0) target = $region17
    $region16: #{rollout_encoder_forward.5} parent=1 // pred_region
      _
    $region17: #{rollout_encoder_forward.5} parent=1 // pred_fallthru
      _
    // Predicated region
    $region18: #{rollout_encoder_forward.5} parent=1 // pred_check
      _
    $region19: #{rollout_encoder_forward.5} parent=1 // pred_check_branch
      %22 = sbr.rel (0) target = $region21
    $region20: #{rollout_encoder_forward.5} parent=1 // pred_region
      _
    $region21: #{rollout_encoder_forward.5} parent=1 // pred_fallthru
      _
    // Predicated region
    $region22: #{rollout_encoder_forward.5} parent=1 // pred_check
      _
    $region23: #{rollout_encoder_forward.5} parent=1 // pred_check_branch
      %24 = sbr.rel (0) target = $region25
    $region24: #{rollout_encoder_forward.5} parent=1 // pred_region
      _
    $region25: #{rollout_encoder_forward.5} parent=1 // pred_fallthru
      _
    // Predicated region
    $region26: #{rollout_encoder_forward.5} parent=1 // pred_check
      _
    $region27: #{rollout_encoder_forward.5} parent=1 // pred_check_branch
      %26 = sbr.rel (0) target = $region29
    $region28: #{rollout_encoder_forward.5} parent=1 // pred_region
      _
    $region29: #{rollout_encoder_forward.5} parent=1 // pred_fallthru
      _
    %v27 = vld [vmem:[%s0] sm:$0xff]
    %v28 = vld [vmem:[%s0 + $0x8] sm:$0xff]
    %v29 = vld [vmem:[%s0 + $0x10] sm:$0xff]
    %v30 = vld [vmem:[%s0 + $0x18] sm:$0xff]
    %v31 = vld [vmem:[%s0 + $0x20] sm:$0xff]
    %v32 = vld [vmem:[%s0 + $0x28] sm:$0xff]
    %v33 = vld [vmem:[%s0 + $0x30] sm:$0xff]
    %v34 = vld [vmem:[%s0 + $0x38] sm:$0xff]
    %v35 = vld [vmem:[%s0 + $0x40] sm:$0xff]
    %v36 = vld [vmem:[%s0 + $0x48] sm:$0xff]
    %v37 = vld [vmem:[%s2] sm:$0xff]
    %v38 = vld [vmem:[%s2 + $0x8] sm:$0xff]
    %v39 = vld [vmem:[%s2 + $0x10] sm:$0xff]
    %v40 = vld [vmem:[%s2 + $0x18] sm:$0xff]
    %v41 = vld [vmem:[%s2 + $0x20] sm:$0xff]
    %v42 = vld [vmem:[%s2 + $0x28] sm:$0xff]
    %v43 = vld [vmem:[%s2 + $0x30] sm:$0xff]
    %v44 = vld [vmem:[%s2 + $0x38] sm:$0xff]
    %v45 = vld [vmem:[%s2 + $0x40] sm:$0xff]
    %v46 = vld [vmem:[%s2 + $0x48] sm:$0xff]
    %v47 = vld [vmem:[%s2 + $0x50] sm:$0xff]
    %v48 = vld [vmem:[%s2 + $0x58] sm:$0xff]
    %v49 = vld [vmem:[%s2 + $0x60] sm:$0xff]
    %v50 = vld [vmem:[%s2 + $0x68] sm:$0xff]
    %v51 = vld [vmem:[%s2 + $0x70] sm:$0xff]
    %v52 = vld [vmem:[%s2 + $0x78] sm:$0xff]
    %v53 = vld [vmem:[%s2 + $0x80] sm:$0xff]
    %v54 = vld [vmem:[%s2 + $0x88] sm:$0xff]
    %v55 = vld [vmem:[%s2 + $0x90] sm:$0xff]
    %v56 = vld [vmem:[%s2 + $0x98] sm:$0xff]
    %v57 = vld [vmem:[%s2 + $0xa0] sm:$0xff]
    %v58 = vld [vmem:[%s2 + $0xa8] sm:$0xff]
    %v59 = vld [vmem:[%s2 + $0xb0] sm:$0xff]
    %v60 = vld [vmem:[%s2 + $0xb8] sm:$0xff]
    %v61 = vld [vmem:[%s2 + $0xc0] sm:$0xff]
    %v62 = vld [vmem:[%s2 + $0xc8] sm:$0xff]
    %v63 = vld [vmem:[%s2 + $0xd0] sm:$0xff]
    %v64 = vld [vmem:[%s2 + $0xd8] sm:$0xff]
    %v65 = vld [vmem:[%s2 + $0xe0] sm:$0xff]
    %v66 = vld [vmem:[%s2 + $0xe8] sm:$0xff]
    %v67 = vld [vmem:[%s2 + $0xf0] sm:$0xff]
    %v68 = vld [vmem:[%s2 + $0xf8] sm:$0xff]
    %v69 = vld [vmem:[%s2 + $0x100] sm:$0xff]
    %v70 = vld [vmem:[%s2 + $0x108] sm:$0xff]
    %v71 = vld [vmem:[%s2 + $0x110] sm:$0xff]
    %v72 = vld [vmem:[%s2 + $0x118] sm:$0xff]
    %v73 = vld [vmem:[%s2 + $0x120] sm:$0xff]
    %v74 = vld [vmem:[%s2 + $0x128] sm:$0xff]
    %v75 = vld [vmem:[%s2 + $0x130] sm:$0xff]
    %v76 = vld [vmem:[%s2 + $0x138] sm:$0xff]
    %v77 = vld [vmem:[%s2 + $0x140] sm:$0xff]
    %v78 = vld [vmem:[%s2 + $0x148] sm:$0xff]
    %v79 = vld [vmem:[%s2 + $0x150] sm:$0xff]
    %v80 = vld [vmem:[%s2 + $0x158] sm:$0xff]
    %v81 = vld [vmem:[%s2 + $0x160] sm:$0xff]
    %v82 = vld [vmem:[%s2 + $0x168] sm:$0xff]
    %v83 = vld [vmem:[%s2 + $0x170] sm:$0xff]
    %v84 = vld [vmem:[%s2 + $0x178] sm:$0xff]
    %v85 = vld [vmem:[%s2 + $0x180] sm:$0xff]
    %v86 = vld [vmem:[%s2 + $0x188] sm:$0xff]
    %v87 = vld [vmem:[%s2 + $0x190] sm:$0xff]
    %v88 = vld [vmem:[%s2 + $0x198] sm:$0xff]
    %v89 = vld [vmem:[%s2 + $0x1a0] sm:$0xff]
    %v90 = vld [vmem:[%s2 + $0x1a8] sm:$0xff]
    %v91 = vld [vmem:[%s2 + $0x1b0] sm:$0xff]
    %v92 = vld [vmem:[%s2 + $0x1b8] sm:$0xff]
    %v93 = vld [vmem:[%s2 + $0x1c0] sm:$0xff]
    %v94 = vld [vmem:[%s2 + $0x1c8] sm:$0xff]
    %v95 = vld [vmem:[%s2 + $0x1d0] sm:$0xff]
    %v96 = vld [vmem:[%s2 + $0x1d8] sm:$0xff]
    %v97 = vld [vmem:[%s2 + $0x1e0] sm:$0xff]
    %v98 = vld [vmem:[%s2 + $0x1e8] sm:$0xff]
    %v99 = vld [vmem:[%s2 + $0x1f0] sm:$0xff]
    %v100 = vld [vmem:[%s2 + $0x1f8] sm:$0xff]
    %v101 = vld [vmem:[%s2 + $0x200] sm:$0xff]
    %v102 = vld [vmem:[%s2 + $0x208] sm:$0xff]
    %v103 = vld [vmem:[%s2 + $0x210] sm:$0xff]
    %v104 = vld [vmem:[%s2 + $0x218] sm:$0xff]
    %v105 = vld [vmem:[%s2 + $0x220] sm:$0xff]
    %v106 = vld [vmem:[%s2 + $0x228] sm:$0xff]
    %v107 = vld [vmem:[%s2 + $0x230] sm:$0xff]
    %v108 = vld [vmem:[%s2 + $0x238] sm:$0xff]
    %v109 = vld [vmem:[%s1] sm:$0xff]
    %v110 = vld [vmem:[%s1 + $0x8] sm:$0xff]
    %v111 = vld [vmem:[%s3] sm:$0x1]
    %113 = vset.pattern.permute.xlu0 0
    %114 = vperm.xlu0 %113, %v109
    %v115 = vpop.permute.xlu0 %114
    %118 = vset.pattern.permute.xlu0 0
    %119 = vperm.xlu0 %118, %v110
    %v120 = vpop.permute.xlu0 %119
    %v123 = vlaneseq
    %v124 = vshrl.u32 %v123, 7
    %v125 = vsub.s32 0, %v124
    %v126 = vrot.slane %v111, %v125
    %v128 = vmul.f32 %v115, %v126
    %v129 = vmul.f32 %v120, %v126
    %vm130 = vcmask 523264
    %v132 = vsel %vm130, %v31, 0
    %v135 = vsel %vm130, %v36, 0
    %137 = vmatprep.subr.mxu0 0.0
    %138 = vmatpush1.msra.mxu0 %v37
    %139 = vmatprep.subr.mxu0 0.0
    %140 = vmatpush1.msra.mxu0 %v38
    %141 = vmatprep.subr.mxu0 0.0
    %142 = vmatpush1.msra.mxu0 %v39
    %143 = vmatprep.subr.mxu0 0.0
    %144 = vmatpush1.msra.mxu0 %v40
    %145 = vmatprep.subr.mxu0 0.0
    %146 = vmatpush1.msra.mxu0 %v41
    %147 = vmatprep.subr.mxu0 0.0
    %148 = vmatpush1.msra.mxu0 %v42
    %149 = vmatprep.subr.mxu0 0.0
    %150 = vmatpush1.msra.mxu0 %v43
    %151 = vmatprep.subr.mxu0 0.0
    %152 = vmatpush1.msra.mxu0 %v44
    %153 = vmatprep.subr.mxu0 0.0
    %154 = vmatpush1.msra.mxu0 %v45
    %155 = vmatprep.subr.mxu0 0.0
    %156 = vmatpush1.msra.mxu0 %v46
    %157 = vmatprep.subr.mxu0 0.0
    %158 = vmatpush1.msra.mxu0 %v47
    %159 = vmatprep.subr.mxu0 0.0
    %160 = vmatpush1.msra.mxu0 %v48
    %161 = vmatprep.subr.mxu0 0.0
    %162 = vmatpush1.msra.mxu0 %v49
    %163 = vmatprep.subr.mxu0 0.0
    %164 = vmatpush1.msra.mxu0 %v50
    %165 = vmatprep.subr.mxu0 0.0
    %166 = vmatpush1.msra.mxu0 %v51
    %167 = vmatprep.subr.mxu0 0.0
    %168 = vmatpush1.msra.mxu0 %v52
    %169 = vmatprep.subr.mxu0 0.0
    %170 = vmatpush1.msra.mxu0 %v53
    %171 = vmatprep.subr.mxu0 0.0
    %172 = vmatpush1.msra.mxu0 %v54
    %173 = vmatprep.subr.mxu0 0.0
    %174 = vmatpush1.msra.mxu0 %v55
    %175 = vmatprep.subr.mxu0 0.0
    %176 = vmatpush1.msra.mxu0 %v56
    %177 = vmatprep.subr.mxu0 0.0
    %178 = vmatpush1.msra.mxu0 %v57
    %179 = vmatprep.subr.mxu0 0.0
    %180 = vmatpush1.msra.mxu0 %v58
    %181 = vmatprep.subr.mxu0 0.0
    %182 = vmatpush1.msra.mxu0 %v59
    %183 = vmatprep.subr.mxu0 0.0
    %184 = vmatpush1.msra.mxu0 %v60
    %185 = vmatprep.subr.mxu0 0.0
    %186 = vmatpush1.msra.mxu0 %v61
    %187 = vmatprep.subr.mxu0 0.0
    %188 = vmatpush1.msra.mxu0 %v62
    %189 = vmatprep.subr.mxu0 0.0
    %190 = vmatpush1.msra.mxu0 %v63
    %191 = vmatprep.subr.mxu0 0.0
    %192 = vmatpush1.msra.mxu0 %v64
    %193 = vmatprep.subr.mxu0 0.0
    %194 = vmatpush1.msra.mxu0 %v65
    %195 = vmatprep.subr.mxu0 0.0
    %196 = vmatpush1.msra.mxu0 %v66
    %197 = vmatprep.subr.mxu0 0.0
    %198 = vmatpush1.msra.mxu0 %v67
    %199 = vmatprep.subr.mxu0 0.0
    %200 = vmatpush1.msra.mxu0 %v68
    %201 = vmatprep.mubr.f32.mxu0 %v28
    %202 = vmatmul.mubr.f32.gmra.mrb[0].mxu0 %v27
    %v203 = vpop.f32.mrb[0].mxu0
    %v204 = vadd.f32 %v128, %v203
    %v205 = vpop.f32.mrb[0].mxu0
    %206 = vmatprep.mubr.f32.mxu0 %v33
    %207 = vmatmul.mubr.f32.gmra.mrb[0].mxu0 %v32
    %v208 = vpop.f32.mrb[0].mxu0
    %v209 = vadd.f32 %v129, %v208
    %v210 = vpop.f32.mrb[0].mxu0
    %211 = vdwg.mxu0
    %212 = vmatprep.subr.mxu0 0.0
    %213 = vmatpush1.msra.mxu0 %v69
    %214 = vmatprep.subr.mxu0 0.0
    %215 = vmatpush1.msra.mxu0 %v70
    %216 = vmatprep.subr.mxu0 0.0
    %217 = vmatpush1.msra.mxu0 %v71
    %218 = vmatprep.subr.mxu0 0.0
    %219 = vmatpush1.msra.mxu0 %v72
    %220 = vmatprep.subr.mxu0 0.0
    %221 = vmatpush1.msra.mxu0 %v73
    %222 = vmatprep.subr.mxu0 0.0
    %223 = vmatpush1.msra.mxu0 %v74
    %224 = vmatprep.subr.mxu0 0.0
    %225 = vmatpush1.msra.mxu0 %v75
    %226 = vmatprep.subr.mxu0 0.0
    %227 = vmatpush1.msra.mxu0 %v76
    %228 = vmatprep.subr.mxu0 0.0
    %229 = vmatpush1.msra.mxu0 %v77
    %230 = vmatprep.subr.mxu0 0.0
    %231 = vmatpush1.msra.mxu0 %v78
    %232 = vmatprep.subr.mxu0 0.0
    %233 = vmatpush1.msra.mxu0 %v79
    %234 = vmatprep.subr.mxu0 0.0
    %235 = vmatpush1.msra.mxu0 %v80
    %236 = vmatprep.subr.mxu0 0.0
    %237 = vmatpush1.msra.mxu0 %v81
    %238 = vmatprep.subr.mxu0 0.0
    %239 = vmatpush1.msra.mxu0 %v82
    %240 = vmatprep.subr.mxu0 0.0
    %241 = vmatpush1.msra.mxu0 %v83
    %242 = vmatprep.subr.mxu0 0.0
    %243 = vmatpush1.msra.mxu0 %v84
    %244 = vmatprep.subr.mxu0 0.0
    %245 = vmatpush1.msra.mxu0 %v85
    %246 = vmatprep.subr.mxu0 0.0
    %247 = vmatpush1.msra.mxu0 %v86
    %248 = vmatprep.subr.mxu0 0.0
    %249 = vmatpush1.msra.mxu0 %v87
    %250 = vmatprep.subr.mxu0 0.0
    %251 = vmatpush1.msra.mxu0 %v88
    %252 = vmatprep.subr.mxu0 0.0
    %253 = vmatpush1.msra.mxu0 %v89
    %254 = vmatprep.subr.mxu0 0.0
    %255 = vmatpush1.msra.mxu0 %v90
    %256 = vmatprep.subr.mxu0 0.0
    %257 = vmatpush1.msra.mxu0 %v91
    %258 = vmatprep.subr.mxu0 0.0
    %259 = vmatpush1.msra.mxu0 %v92
    %260 = vmatprep.subr.mxu0 0.0
    %261 = vmatpush1.msra.mxu0 %v93
    %262 = vmatprep.subr.mxu0 0.0
    %263 = vmatpush1.msra.mxu0 %v94
    %264 = vmatprep.subr.mxu0 0.0
    %265 = vmatpush1.msra.mxu0 %v95
    %266 = vmatprep.subr.mxu0 0.0
    %267 = vmatpush1.msra.mxu0 %v96
    %268 = vmatprep.subr.mxu0 0.0
    %269 = vmatpush1.msra.mxu0 %v97
    %270 = vmatprep.subr.mxu0 0.0
    %271 = vmatpush1.msra.mxu0 %v98
    %272 = vmatprep.subr.mxu0 0.0
    %273 = vmatpush1.msra.mxu0 %v99
    %274 = vmatprep.subr.mxu0 0.0
    %275 = vmatpush1.msra.mxu0 %v100
    %276 = vmatprep.mubr.f32.mxu0 %v30
    %277 = vmatmul.mubr.f32.gmra.mrb[0].mxu0 %v29
    %v278 = vpop.f32.mrb[0].mxu0
    %v279 = vadd.f32 %v204, %v278
    %v280 = vpop.f32.mrb[0].mxu0
    %281 = vmatprep.mubr.f32.mxu0 %v35
    %282 = vmatmul.mubr.f32.gmra.mrb[0].mxu0 %v34
    %v283 = vpop.f32.mrb[0].mxu0
    %v284 = vadd.f32 %v209, %v283
    %v285 = vpop.f32.mrb[0].mxu0
    %286 = vdwg.mxu0
    %287 = vmatprep.subr.mxu0 0.0
    %288 = vmatpush1.msra.mxu0 %v101
    %289 = vmatprep.subr.mxu0 0.0
    %290 = vmatpush1.msra.mxu0 %v102
    %291 = vmatprep.subr.mxu0 0.0
    %292 = vmatpush1.msra.mxu0 %v103
    %293 = vmatprep.subr.mxu0 0.0
    %294 = vmatpush1.msra.mxu0 %v104
    %295 = vmatprep.subr.mxu0 0.0
    %296 = vmatpush1.msra.mxu0 %v105
    %297 = vmatprep.subr.mxu0 0.0
    %298 = vmatpush1.msra.mxu0 %v106
    %299 = vmatprep.subr.mxu0 0.0
    %300 = vmatpush1.msra.mxu0 %v107
    %301 = vmatprep.subr.mxu0 0.0
    %302 = vmatpush1.msra.mxu0 %v108
    %303 = vmatprep.subr.mxu0 0.0
    %304 = vmatpush1.msra.mxu0 0.0
    %305 = vmatprep.subr.mxu0 0.0
    %306 = vmatpush1.msra.mxu0 0.0
    %307 = vmatprep.subr.mxu0 0.0
    %308 = vmatpush1.msra.mxu0 0.0
    %309 = vmatprep.subr.mxu0 0.0
    %310 = vmatpush1.msra.mxu0 0.0
    %311 = vmatprep.subr.mxu0 0.0
    %312 = vmatpush1.msra.mxu0 0.0
    %313 = vmatprep.subr.mxu0 0.0
    %314 = vmatpush1.msra.mxu0 0.0
    %315 = vmatprep.subr.mxu0 0.0
    %316 = vmatpush1.msra.mxu0 0.0
    %317 = vmatprep.subr.mxu0 0.0
    %318 = vmatpush1.msra.mxu0 0.0
    %319 = vmatprep.subr.mxu0 0.0
    %320 = vmatpush1.msra.mxu0 0.0
    %321 = vmatprep.subr.mxu0 0.0
    %322 = vmatpush1.msra.mxu0 0.0
    %323 = vmatprep.subr.mxu0 0.0
    %324 = vmatpush1.msra.mxu0 0.0
    %325 = vmatprep.subr.mxu0 0.0
    %326 = vmatpush1.msra.mxu0 0.0
    %327 = vmatprep.subr.mxu0 0.0
    %328 = vmatpush1.msra.mxu0 0.0
    %329 = vmatprep.subr.mxu0 0.0
    %330 = vmatpush1.msra.mxu0 0.0
    %331 = vmatprep.subr.mxu0 0.0
    %332 = vmatpush1.msra.mxu0 0.0
    %333 = vmatprep.subr.mxu0 0.0
    %334 = vmatpush1.msra.mxu0 0.0
    %335 = vmatprep.subr.mxu0 0.0
    %336 = vmatpush1.msra.mxu0 0.0
    %337 = vmatprep.subr.mxu0 0.0
    %338 = vmatpush1.msra.mxu0 0.0
    %339 = vmatprep.subr.mxu0 0.0
    %340 = vmatpush1.msra.mxu0 0.0
    %341 = vmatprep.subr.mxu0 0.0
    %342 = vmatpush1.msra.mxu0 0.0
    %343 = vmatprep.subr.mxu0 0.0
    %344 = vmatpush1.msra.mxu0 0.0
    %345 = vmatprep.subr.mxu0 0.0
    %346 = vmatpush1.msra.mxu0 0.0
    %347 = vmatprep.subr.mxu0 0.0
    %348 = vmatpush1.msra.mxu0 0.0
    %349 = vmatprep.subr.mxu0 0.0
    %350 = vmatpush1.msra.mxu0 0.0
    %351 = vmatprep.mubr.f32.mxu0 0.0
    %352 = vmatmul.mubr.f32.gmra.mrb[0].mxu0 %v132
    %v353 = vpop.f32.mrb[0].mxu0
    %v354 = vadd.f32 %v279, %v353
    %v355 = vpop.f32.mrb[0].mxu0
    %356 = vmatprep.mubr.f32.mxu0 0.0
    %357 = vmatmul.mubr.f32.gmra.mrb[0].mxu0 %v135
    %v358 = vpop.f32.mrb[0].mxu0
    %v359 = vadd.f32 %v284, %v358
    %v360 = vpop.f32.mrb[0].mxu0
    %361 = vdwg.mxu0
    %v362 = vld [vmem:[%s4] sm:$0x1]
    %v364 = vlaneseq
    %v365 = vshrl.u32 %v364, 7
    %v366 = vsub.s32 0, %v365
    %v367 = vrot.slane %v362, %v366
    %v369 = vadd.f32 %v354, %v367
    %v370 = vadd.f32 %v359, %v367
    %v371 = vld [vmem:[%s6] sm:$0x1]
    %v372 = vld [vmem:[%s5] sm:$0xff]
    %v373 = vld [vmem:[%s5 + $0x8] sm:$0xff]
    %v374 = vld [vmem:[%s5 + $0x10] sm:$0xff]
    %v375 = vld [vmem:[%s5 + $0x18] sm:$0xff]
    %vm376 = vcmask 261120
    %v378 = vsel %vm376, 0.0, 0
    %380 = vmatprep.subr.mxu0 0.0
    %381 = vmatpush1.msra.mxu0 %v372
    %382 = vmatprep.subr.mxu0 0.0
    %383 = vmatpush1.msra.mxu0 %v373
    %384 = vmatprep.subr.mxu0 0.0
    %385 = vmatpush1.msra.mxu0 %v374
    %386 = vmatprep.subr.mxu0 0.0
    %387 = vmatpush1.msra.mxu0 %v375
    %388 = vmatprep.subr.mxu0 0.0
    %389 = vmatpush1.msra.mxu0 0.0
    %390 = vmatprep.subr.mxu0 0.0
    %391 = vmatpush1.msra.mxu0 0.0
    %392 = vmatprep.subr.mxu0 0.0
    %393 = vmatpush1.msra.mxu0 0.0
    %394 = vmatprep.subr.mxu0 0.0
    %395 = vmatpush1.msra.mxu0 0.0
    %396 = vmatprep.subr.mxu0 0.0
    %397 = vmatpush1.msra.mxu0 0.0
    %398 = vmatprep.subr.mxu0 0.0
    %399 = vmatpush1.msra.mxu0 0.0
    %400 = vmatprep.subr.mxu0 0.0
    %401 = vmatpush1.msra.mxu0 0.0
    %402 = vmatprep.subr.mxu0 0.0
    %403 = vmatpush1.msra.mxu0 0.0
    %404 = vmatprep.subr.mxu0 0.0
    %405 = vmatpush1.msra.mxu0 0.0
    %406 = vmatprep.subr.mxu0 0.0
    %407 = vmatpush1.msra.mxu0 0.0
    %408 = vmatprep.subr.mxu0 0.0
    %409 = vmatpush1.msra.mxu0 0.0
    %410 = vmatprep.subr.mxu0 0.0
    %411 = vmatpush1.msra.mxu0 0.0
    %412 = vmatprep.subr.mxu0 0.0
    %413 = vmatpush1.msra.mxu0 0.0
    %414 = vmatprep.subr.mxu0 0.0
    %415 = vmatpush1.msra.mxu0 0.0
    %416 = vmatprep.subr.mxu0 0.0
    %417 = vmatpush1.msra.mxu0 0.0
    %418 = vmatprep.subr.mxu0 0.0
    %419 = vmatpush1.msra.mxu0 0.0
    %420 = vmatprep.subr.mxu0 0.0
    %421 = vmatpush1.msra.mxu0 0.0
    %422 = vmatprep.subr.mxu0 0.0
    %423 = vmatpush1.msra.mxu0 0.0
    %424 = vmatprep.subr.mxu0 0.0
    %425 = vmatpush1.msra.mxu0 0.0
    %426 = vmatprep.subr.mxu0 0.0
    %427 = vmatpush1.msra.mxu0 0.0
    %428 = vmatprep.subr.mxu0 0.0
    %429 = vmatpush1.msra.mxu0 0.0
    %430 = vmatprep.subr.mxu0 0.0
    %431 = vmatpush1.msra.mxu0 0.0
    %432 = vmatprep.subr.mxu0 0.0
    %433 = vmatpush1.msra.mxu0 0.0
    %434 = vmatprep.subr.mxu0 0.0
    %435 = vmatpush1.msra.mxu0 0.0
    %436 = vmatprep.subr.mxu0 0.0
    %437 = vmatpush1.msra.mxu0 0.0
    %438 = vmatprep.subr.mxu0 0.0
    %439 = vmatpush1.msra.mxu0 0.0
    %440 = vmatprep.subr.mxu0 0.0
    %441 = vmatpush1.msra.mxu0 0.0
    %442 = vmatprep.subr.mxu0 0.0
    %443 = vmatpush1.msra.mxu0 0.0
    %444 = vmatprep.mubr.f32.mxu0 0.0
    %445 = vmatmul.mubr.f32.gmra.mrb[0].mxu0 %v378
    %v446 = vpop.f32.mrb[0].mxu0
    %v447 = vadd.f32 0.0, %v446
    %v448 = vpop.f32.mrb[0].mxu0
    %449 = vdwg.mxu0
    %v450 = vadd.f32 %v369, %v447
    %v451 = vxor.u32 %v450, 2147483648
    %v452 = vmul.f32 %v451, 1.442695
    %v453 = vpow.pop %v452
    %v454 = vadd.f32 %v453, 1.0
    %v455 = vrcp.pop %v454
    %v456 = vmul.f32 1.0, %v455
    %v458 = vlaneseq
    %v459 = vshrl.u32 %v458, 7
    %v460 = vsub.s32 0, %v459
    %v461 = vrot.slane %v371, %v460
    %462 = vrot.lane.b32.xlu0 %v461, 64
    %v463 = vpop.permute.xlu0 %462
    %v465 = vadd.f32 %v447, %v463
    %467 = vrot.lane.b32.xlu0 %v465, 64
    %v468 = vpop.permute.xlu0 %467
    %v470 = vmul.f32 %v456, %v468
    %472 = vrot.lane.b32.xlu0 %v470, 64
    %v473 = vpop.permute.xlu0 %472
    %v475 = vadd.f32 %v369, %v473
    %v476 = vtanh.pop %v475
    %v477 = vsub.f32 1.0, %v456
    %479 = vrot.lane.b32.xlu0 %v476, 96
    %v480 = vpop.permute.xlu0 %479
    %v482 = vmul.f32 %v477, %v480
    %v483 = vmul.f32 %v456, 0.0
    %v484 = vadd.f32 %v482, %v483
    %486 = vrot.lane.b32.xlu0 %v484, 96
    %v487 = vpop.permute.xlu0 %486
    %v488 = vsel %vm376, %v487, 0
    %490 = vmatprep.subr.mxu0 0.0
    %491 = vmatpush1.msra.mxu0 %v372
    %492 = vmatprep.subr.mxu0 0.0
    %493 = vmatpush1.msra.mxu0 %v373
    %494 = vmatprep.subr.mxu0 0.0
    %495 = vmatpush1.msra.mxu0 %v374
    %496 = vmatprep.subr.mxu0 0.0
    %497 = vmatpush1.msra.mxu0 %v375
    %498 = vmatprep.subr.mxu0 0.0
    %499 = vmatpush1.msra.mxu0 0.0
    %500 = vmatprep.subr.mxu0 0.0
    %501 = vmatpush1.msra.mxu0 0.0
    %502 = vmatprep.subr.mxu0 0.0
    %503 = vmatpush1.msra.mxu0 0.0
    %504 = vmatprep.subr.mxu0 0.0
    %505 = vmatpush1.msra.mxu0 0.0
    %506 = vmatprep.subr.mxu0 0.0
    %507 = vmatpush1.msra.mxu0 0.0
    %508 = vmatprep.subr.mxu0 0.0
    %509 = vmatpush1.msra.mxu0 0.0
    %510 = vmatprep.subr.mxu0 0.0
    %511 = vmatpush1.msra.mxu0 0.0
    %512 = vmatprep.subr.mxu0 0.0
    %513 = vmatpush1.msra.mxu0 0.0
    %514 = vmatprep.subr.mxu0 0.0
    %515 = vmatpush1.msra.mxu0 0.0
    %516 = vmatprep.subr.mxu0 0.0
    %517 = vmatpush1.msra.mxu0 0.0
    %518 = vmatprep.subr.mxu0 0.0
    %519 = vmatpush1.msra.mxu0 0.0
    %520 = vmatprep.subr.mxu0 0.0
    %521 = vmatpush1.msra.mxu0 0.0
    %522 = vmatprep.subr.mxu0 0.0
    %523 = vmatpush1.msra.mxu0 0.0
    %524 = vmatprep.subr.mxu0 0.0
    %525 = vmatpush1.msra.mxu0 0.0
    %526 = vmatprep.subr.mxu0 0.0
    %527 = vmatpush1.msra.mxu0 0.0
    %528 = vmatprep.subr.mxu0 0.0
    %529 = vmatpush1.msra.mxu0 0.0
    %530 = vmatprep.subr.mxu0 0.0
    %531 = vmatpush1.msra.mxu0 0.0
    %532 = vmatprep.subr.mxu0 0.0
    %533 = vmatpush1.msra.mxu0 0.0
    %534 = vmatprep.subr.mxu0 0.0
    %535 = vmatpush1.msra.mxu0 0.0
    %536 = vmatprep.subr.mxu0 0.0
    %537 = vmatpush1.msra.mxu0 0.0
    %538 = vmatprep.subr.mxu0 0.0
    %539 = vmatpush1.msra.mxu0 0.0
    %540 = vmatprep.subr.mxu0 0.0
    %541 = vmatpush1.msra.mxu0 0.0
    %542 = vmatprep.subr.mxu0 0.0
    %543 = vmatpush1.msra.mxu0 0.0
    %544 = vmatprep.subr.mxu0 0.0
    %545 = vmatpush1.msra.mxu0 0.0
    %546 = vmatprep.subr.mxu0 0.0
    %547 = vmatpush1.msra.mxu0 0.0
    %548 = vmatprep.subr.mxu0 0.0
    %549 = vmatpush1.msra.mxu0 0.0
    %550 = vmatprep.subr.mxu0 0.0
    %551 = vmatpush1.msra.mxu0 0.0
    %552 = vmatprep.subr.mxu0 0.0
    %553 = vmatpush1.msra.mxu0 0.0
    %554 = vmatprep.mubr.f32.mxu0 0.0
    %555 = vmatmul.mubr.f32.gmra.mrb[0].mxu0 %v488
    %v556 = vpop.f32.mrb[0].mxu0
    %v557 = vadd.f32 0.0, %v556
    %v558 = vpop.f32.mrb[0].mxu0
    %559 = vdwg.mxu0
    %v561 = vrot.slane %v557, 6
    %v563 = vadd.f32 %v369, %v561
    %v564 = vxor.u32 %v563, 2147483648
    %v565 = vmul.f32 %v564, 1.442695
    %v566 = vpow.pop %v565
    %v567 = vadd.f32 %v566, 1.0
    %v568 = vrcp.pop %v567
    %v569 = vmul.f32 1.0, %v568
    %v570 = vadd.f32 %v557, %v463
    %v572 = vrot.slane %v570, 6
    %573 = vrot.lane.b32.xlu0 %v572, 64
    %v574 = vpop.permute.xlu0 %573
    %v576 = vmul.f32 %v569, %v574
    %578 = vrot.lane.b32.xlu0 %v576, 64
    %v579 = vpop.permute.xlu0 %578
    %v581 = vadd.f32 %v369, %v579
    %v582 = vtanh.pop %v581
    %v583 = vsub.f32 1.0, %v569
    %585 = vrot.lane.b32.xlu0 %v582, 96
    %v586 = vpop.permute.xlu0 %585
    %v588 = vmul.f32 %v583, %v586
    %v589 = vrot.slane %v484, 6
    %v591 = vmul.f32 %v569, %v589
    %v592 = vadd.f32 %v588, %v591
    %v594 = vrot.slane %v592, 2
    %595 = vrot.lane.b32.xlu0 %v594, 96
    %v596 = vpop.permute.xlu0 %595
    %v597 = vsel %vm376, %v596, 0
    %599 = vmatprep.subr.mxu0 0.0
    %600 = vmatpush1.msra.mxu0 %v372
    %601 = vmatprep.subr.mxu0 0.0
    %602 = vmatpush1.msra.mxu0 %v373
    %603 = vmatprep.subr.mxu0 0.0
    %604 = vmatpush1.msra.mxu0 %v374
    %605 = vmatprep.subr.mxu0 0.0
    %606 = vmatpush1.msra.mxu0 %v375
    %607 = vmatprep.subr.mxu0 0.0
    %608 = vmatpush1.msra.mxu0 0.0
    %609 = vmatprep.subr.mxu0 0.0
    %610 = vmatpush1.msra.mxu0 0.0
    %611 = vmatprep.subr.mxu0 0.0
    %612 = vmatpush1.msra.mxu0 0.0
    %613 = vmatprep.subr.mxu0 0.0
    %614 = vmatpush1.msra.mxu0 0.0
    %615 = vmatprep.subr.mxu0 0.0
    %616 = vmatpush1.msra.mxu0 0.0
    %617 = vmatprep.subr.mxu0 0.0
    %618 = vmatpush1.msra.mxu0 0.0
    %619 = vmatprep.subr.mxu0 0.0
    %620 = vmatpush1.msra.mxu0 0.0
    %621 = vmatprep.subr.mxu0 0.0
    %622 = vmatpush1.msra.mxu0 0.0
    %623 = vmatprep.subr.mxu0 0.0
    %624 = vmatpush1.msra.mxu0 0.0
    %625 = vmatprep.subr.mxu0 0.0
    %626 = vmatpush1.msra.mxu0 0.0
    %627 = vmatprep.subr.mxu0 0.0
    %628 = vmatpush1.msra.mxu0 0.0
    %629 = vmatprep.subr.mxu0 0.0
    %630 = vmatpush1.msra.mxu0 0.0
    %631 = vmatprep.subr.mxu0 0.0
    %632 = vmatpush1.msra.mxu0 0.0
    %633 = vmatprep.subr.mxu0 0.0
    %634 = vmatpush1.msra.mxu0 0.0
    %635 = vmatprep.subr.mxu0 0.0
    %636 = vmatpush1.msra.mxu0 0.0
    %637 = vmatprep.subr.mxu0 0.0
    %638 = vmatpush1.msra.mxu0 0.0
    %639 = vmatprep.subr.mxu0 0.0
    %640 = vmatpush1.msra.mxu0 0.0
    %641 = vmatprep.subr.mxu0 0.0
    %642 = vmatpush1.msra.mxu0 0.0
    %643 = vmatprep.subr.mxu0 0.0
    %644 = vmatpush1.msra.mxu0 0.0
    %645 = vmatprep.subr.mxu0 0.0
    %646 = vmatpush1.msra.mxu0 0.0
    %647 = vmatprep.subr.mxu0 0.0
    %648 = vmatpush1.msra.mxu0 0.0
    %649 = vmatprep.subr.mxu0 0.0
    %650 = vmatpush1.msra.mxu0 0.0
    %651 = vmatprep.subr.mxu0 0.0
    %652 = vmatpush1.msra.mxu0 0.0
    %653 = vmatprep.subr.mxu0 0.0
    %654 = vmatpush1.msra.mxu0 0.0
    %655 = vmatprep.subr.mxu0 0.0
    %656 = vmatpush1.msra.mxu0 0.0
    %657 = vmatprep.subr.mxu0 0.0
    %658 = vmatpush1.msra.mxu0 0.0
    %659 = vmatprep.subr.mxu0 0.0
    %660 = vmatpush1.msra.mxu0 0.0
    %661 = vmatprep.subr.mxu0 0.0
    %662 = vmatpush1.msra.mxu0 0.0
    %663 = vmatprep.mubr.f32.mxu0 0.0
    %664 = vmatmul.mubr.f32.gmra.mrb[0].mxu0 %v597
    %v665 = vpop.f32.mrb[0].mxu0
    %v666 = vadd.f32 0.0, %v665
    %v667 = vpop.f32.mrb[0].mxu0
    %668 = vdwg.mxu0
    %v670 = vrot.slane %v666, 4
    %v672 = vadd.f32 %v369, %v670
    %v673 = vxor.u32 %v672, 2147483648
    %v674 = vmul.f32 %v673, 1.442695
    %v675 = vpow.pop %v674
    %v676 = vadd.f32 %v675, 1.0
    %v677 = vrcp.pop %v676
    %v678 = vmul.f32 1.0, %v677
    %v679 = vadd.f32 %v666, %v463
    %v681 = vrot.slane %v679, 4
    %682 = vrot.lane.b32.xlu0 %v681, 64
    %v683 = vpop.permute.xlu0 %682
    %v685 = vmul.f32 %v678, %v683
    %687 = vrot.lane.b32.xlu0 %v685, 64
    %v688 = vpop.permute.xlu0 %687
    %v690 = vadd.f32 %v369, %v688
    %v691 = vtanh.pop %v690
    %v692 = vsub.f32 1.0, %v678
    %694 = vrot.lane.b32.xlu0 %v691, 96
    %v695 = vpop.permute.xlu0 %694
    %v697 = vmul.f32 %v692, %v695
    %v698 = vrot.slane %v592, 6
    %v700 = vmul.f32 %v678, %v698
    %v701 = vadd.f32 %v697, %v700
    %v703 = vrot.slane %v701, 4
    %704 = vrot.lane.b32.xlu0 %v703, 96
    %v705 = vpop.permute.xlu0 %704
    %v706 = vsel %vm376, %v705, 0
    %708 = vmatprep.subr.mxu0 0.0
    %709 = vmatpush1.msra.mxu0 %v372
    %710 = vmatprep.subr.mxu0 0.0
    %711 = vmatpush1.msra.mxu0 %v373
    %712 = vmatprep.subr.mxu0 0.0
    %713 = vmatpush1.msra.mxu0 %v374
    %714 = vmatprep.subr.mxu0 0.0
    %715 = vmatpush1.msra.mxu0 %v375
    %716 = vmatprep.subr.mxu0 0.0
    %717 = vmatpush1.msra.mxu0 0.0
    %718 = vmatprep.subr.mxu0 0.0
    %719 = vmatpush1.msra.mxu0 0.0
    %720 = vmatprep.subr.mxu0 0.0
    %721 = vmatpush1.msra.mxu0 0.0
    %722 = vmatprep.subr.mxu0 0.0
    %723 = vmatpush1.msra.mxu0 0.0
    %724 = vmatprep.subr.mxu0 0.0
    %725 = vmatpush1.msra.mxu0 0.0
    %726 = vmatprep.subr.mxu0 0.0
    %727 = vmatpush1.msra.mxu0 0.0
    %728 = vmatprep.subr.mxu0 0.0
    %729 = vmatpush1.msra.mxu0 0.0
    %730 = vmatprep.subr.mxu0 0.0
    %731 = vmatpush1.msra.mxu0 0.0
    %732 = vmatprep.subr.mxu0 0.0
    %733 = vmatpush1.msra.mxu0 0.0
    %734 = vmatprep.subr.mxu0 0.0
    %735 = vmatpush1.msra.mxu0 0.0
    %736 = vmatprep.subr.mxu0 0.0
    %737 = vmatpush1.msra.mxu0 0.0
    %738 = vmatprep.subr.mxu0 0.0
    %739 = vmatpush1.msra.mxu0 0.0
    %740 = vmatprep.subr.mxu0 0.0
    %741 = vmatpush1.msra.mxu0 0.0
    %742 = vmatprep.subr.mxu0 0.0
    %743 = vmatpush1.msra.mxu0 0.0
    %744 = vmatprep.subr.mxu0 0.0
    %745 = vmatpush1.msra.mxu0 0.0
    %746 = vmatprep.subr.mxu0 0.0
    %747 = vmatpush1.msra.mxu0 0.0
    %748 = vmatprep.subr.mxu0 0.0
    %749 = vmatpush1.msra.mxu0 0.0
    %750 = vmatprep.subr.mxu0 0.0
    %751 = vmatpush1.msra.mxu0 0.0
    %752 = vmatprep.subr.mxu0 0.0
    %753 = vmatpush1.msra.mxu0 0.0
    %754 = vmatprep.subr.mxu0 0.0
    %755 = vmatpush1.msra.mxu0 0.0
    %756 = vmatprep.subr.mxu0 0.0
    %757 = vmatpush1.msra.mxu0 0.0
    %758 = vmatprep.subr.mxu0 0.0
    %759 = vmatpush1.msra.mxu0 0.0
    %760 = vmatprep.subr.mxu0 0.0
    %761 = vmatpush1.msra.mxu0 0.0
    %762 = vmatprep.subr.mxu0 0.0
    %763 = vmatpush1.msra.mxu0 0.0
    %764 = vmatprep.subr.mxu0 0.0
    %765 = vmatpush1.msra.mxu0 0.0
    %766 = vmatprep.subr.mxu0 0.0
    %767 = vmatpush1.msra.mxu0 0.0
    %768 = vmatprep.subr.mxu0 0.0
    %769 = vmatpush1.msra.mxu0 0.0
    %770 = vmatprep.subr.mxu0 0.0
    %771 = vmatpush1.msra.mxu0 0.0
    %772 = vmatprep.mubr.f32.mxu0 0.0
    %773 = vmatmul.mubr.f32.gmra.mrb[0].mxu0 %v706
    %v774 = vpop.f32.mrb[0].mxu0
    %v775 = vadd.f32 0.0, %v774
    %v776 = vpop.f32.mrb[0].mxu0
    %777 = vdwg.mxu0
    %v779 = vrot.slane %v775, 2
    %v781 = vadd.f32 %v369, %v779
    %v782 = vxor.u32 %v781, 2147483648
    %v783 = vmul.f32 %v782, 1.442695
    %v784 = vpow.pop %v783
    %v785 = vadd.f32 %v784, 1.0
    %v786 = vrcp.pop %v785
    %v787 = vmul.f32 1.0, %v786
    %v788 = vadd.f32 %v775, %v463
    %v790 = vrot.slane %v788, 2
    %791 = vrot.lane.b32.xlu0 %v790, 64
    %v792 = vpop.permute.xlu0 %791
    %v794 = vmul.f32 %v787, %v792
    %796 = vrot.lane.b32.xlu0 %v794, 64
    %v797 = vpop.permute.xlu0 %796
    %v799 = vadd.f32 %v369, %v797
    %v800 = vtanh.pop %v799
    %v801 = vsub.f32 1.0, %v787
    %803 = vrot.lane.b32.xlu0 %v800, 96
    %v804 = vpop.permute.xlu0 %803
    %v806 = vmul.f32 %v801, %v804
    %v807 = vrot.slane %v701, 6
    %v809 = vmul.f32 %v787, %v807
    %v810 = vadd.f32 %v806, %v809
    %v812 = vrot.slane %v810, 6
    %813 = vrot.lane.b32.xlu0 %v812, 96
    %v814 = vpop.permute.xlu0 %813
    %v815 = vsel %vm376, %v814, 0
    %817 = vmatprep.subr.mxu0 0.0
    %818 = vmatpush1.msra.mxu0 %v372
    %819 = vmatprep.subr.mxu0 0.0
    %820 = vmatpush1.msra.mxu0 %v373
    %821 = vmatprep.subr.mxu0 0.0
    %822 = vmatpush1.msra.mxu0 %v374
    %823 = vmatprep.subr.mxu0 0.0
    %824 = vmatpush1.msra.mxu0 %v375
    %825 = vmatprep.subr.mxu0 0.0
    %826 = vmatpush1.msra.mxu0 0.0
    %827 = vmatprep.subr.mxu0 0.0
    %828 = vmatpush1.msra.mxu0 0.0
    %829 = vmatprep.subr.mxu0 0.0
    %830 = vmatpush1.msra.mxu0 0.0
    %831 = vmatprep.subr.mxu0 0.0
    %832 = vmatpush1.msra.mxu0 0.0
    %833 = vmatprep.subr.mxu0 0.0
    %834 = vmatpush1.msra.mxu0 0.0
    %835 = vmatprep.subr.mxu0 0.0
    %836 = vmatpush1.msra.mxu0 0.0
    %837 = vmatprep.subr.mxu0 0.0
    %838 = vmatpush1.msra.mxu0 0.0
    %839 = vmatprep.subr.mxu0 0.0
    %840 = vmatpush1.msra.mxu0 0.0
    %841 = vmatprep.subr.mxu0 0.0
    %842 = vmatpush1.msra.mxu0 0.0
    %843 = vmatprep.subr.mxu0 0.0
    %844 = vmatpush1.msra.mxu0 0.0
    %845 = vmatprep.subr.mxu0 0.0
    %846 = vmatpush1.msra.mxu0 0.0
    %847 = vmatprep.subr.mxu0 0.0
    %848 = vmatpush1.msra.mxu0 0.0
    %849 = vmatprep.subr.mxu0 0.0
    %850 = vmatpush1.msra.mxu0 0.0
    %851 = vmatprep.subr.mxu0 0.0
    %852 = vmatpush1.msra.mxu0 0.0
    %853 = vmatprep.subr.mxu0 0.0
    %854 = vmatpush1.msra.mxu0 0.0
    %855 = vmatprep.subr.mxu0 0.0
    %856 = vmatpush1.msra.mxu0 0.0
    %857 = vmatprep.subr.mxu0 0.0
    %858 = vmatpush1.msra.mxu0 0.0
    %859 = vmatprep.subr.mxu0 0.0
    %860 = vmatpush1.msra.mxu0 0.0
    %861 = vmatprep.subr.mxu0 0.0
    %862 = vmatpush1.msra.mxu0 0.0
    %863 = vmatprep.subr.mxu0 0.0
    %864 = vmatpush1.msra.mxu0 0.0
    %865 = vmatprep.subr.mxu0 0.0
    %866 = vmatpush1.msra.mxu0 0.0
    %867 = vmatprep.subr.mxu0 0.0
    %868 = vmatpush1.msra.mxu0 0.0
    %869 = vmatprep.subr.mxu0 0.0
    %870 = vmatpush1.msra.mxu0 0.0
    %871 = vmatprep.subr.mxu0 0.0
    %872 = vmatpush1.msra.mxu0 0.0
    %873 = vmatprep.subr.mxu0 0.0
    %874 = vmatpush1.msra.mxu0 0.0
    %875 = vmatprep.subr.mxu0 0.0
    %876 = vmatpush1.msra.mxu0 0.0
    %877 = vmatprep.subr.mxu0 0.0
    %878 = vmatpush1.msra.mxu0 0.0
    %879 = vmatprep.subr.mxu0 0.0
    %880 = vmatpush1.msra.mxu0 0.0
    %881 = vmatprep.mubr.f32.mxu0 0.0
    %882 = vmatmul.mubr.f32.gmra.mrb[0].mxu0 %v815
    %v883 = vpop.f32.mrb[0].mxu0
    %v884 = vadd.f32 0.0, %v883
    %v885 = vpop.f32.mrb[0].mxu0
    %886 = vdwg.mxu0
    %v887 = vadd.f32 %v370, %v884
    %v888 = vxor.u32 %v887, 2147483648
    %v889 = vmul.f32 %v888, 1.442695
    %v890 = vpow.pop %v889
    %v891 = vadd.f32 %v890, 1.0
    %v892 = vrcp.pop %v891
    %v893 = vmul.f32 1.0, %v892
    %v894 = vadd.f32 %v884, %v463
    %896 = vrot.lane.b32.xlu0 %v894, 64
    %v897 = vpop.permute.xlu0 %896
    %v899 = vmul.f32 %v893, %v897
    %901 = vrot.lane.b32.xlu0 %v899, 64
    %v902 = vpop.permute.xlu0 %901
    %v904 = vadd.f32 %v370, %v902
    %v905 = vtanh.pop %v904
    %v906 = vsub.f32 1.0, %v893
    %908 = vrot.lane.b32.xlu0 %v905, 96
    %v909 = vpop.permute.xlu0 %908
    %v911 = vmul.f32 %v906, %v909
    %v913 = vmul.f32 %v893, %v812
    %v914 = vadd.f32 %v911, %v913
    %916 = vrot.lane.b32.xlu0 %v914, 96
    %v917 = vpop.permute.xlu0 %916
    %v918 = vsel %vm376, %v917, 0
    %920 = vmatprep.subr.mxu0 0.0
    %921 = vmatpush1.msra.mxu0 %v372
    %922 = vmatprep.subr.mxu0 0.0
    %923 = vmatpush1.msra.mxu0 %v373
    %924 = vmatprep.subr.mxu0 0.0
    %925 = vmatpush1.msra.mxu0 %v374
    %926 = vmatprep.subr.mxu0 0.0
    %927 = vmatpush1.msra.mxu0 %v375
    %928 = vmatprep.subr.mxu0 0.0
    %929 = vmatpush1.msra.mxu0 0.0
    %930 = vmatprep.subr.mxu0 0.0
    %931 = vmatpush1.msra.mxu0 0.0
    %932 = vmatprep.subr.mxu0 0.0
    %933 = vmatpush1.msra.mxu0 0.0
    %934 = vmatprep.subr.mxu0 0.0
    %935 = vmatpush1.msra.mxu0 0.0
    %936 = vmatprep.subr.mxu0 0.0
    %937 = vmatpush1.msra.mxu0 0.0
    %938 = vmatprep.subr.mxu0 0.0
    %939 = vmatpush1.msra.mxu0 0.0
    %940 = vmatprep.subr.mxu0 0.0
    %941 = vmatpush1.msra.mxu0 0.0
    %942 = vmatprep.subr.mxu0 0.0
    %943 = vmatpush1.msra.mxu0 0.0
    %944 = vmatprep.subr.mxu0 0.0
    %945 = vmatpush1.msra.mxu0 0.0
    %946 = vmatprep.subr.mxu0 0.0
    %947 = vmatpush1.msra.mxu0 0.0
    %948 = vmatprep.subr.mxu0 0.0
    %949 = vmatpush1.msra.mxu0 0.0
    %950 = vmatprep.subr.mxu0 0.0
    %951 = vmatpush1.msra.mxu0 0.0
    %952 = vmatprep.subr.mxu0 0.0
    %953 = vmatpush1.msra.mxu0 0.0
    %954 = vmatprep.subr.mxu0 0.0
    %955 = vmatpush1.msra.mxu0 0.0
    %956 = vmatprep.subr.mxu0 0.0
    %957 = vmatpush1.msra.mxu0 0.0
    %958 = vmatprep.subr.mxu0 0.0
    %959 = vmatpush1.msra.mxu0 0.0
    %960 = vmatprep.subr.mxu0 0.0
    %961 = vmatpush1.msra.mxu0 0.0
    %962 = vmatprep.subr.mxu0 0.0
    %963 = vmatpush1.msra.mxu0 0.0
    %964 = vmatprep.subr.mxu0 0.0
    %965 = vmatpush1.msra.mxu0 0.0
    %966 = vmatprep.subr.mxu0 0.0
    %967 = vmatpush1.msra.mxu0 0.0
    %968 = vmatprep.subr.mxu0 0.0
    %969 = vmatpush1.msra.mxu0 0.0
    %970 = vmatprep.subr.mxu0 0.0
    %971 = vmatpush1.msra.mxu0 0.0
    %972 = vmatprep.subr.mxu0 0.0
    %973 = vmatpush1.msra.mxu0 0.0
    %974 = vmatprep.subr.mxu0 0.0
    %975 = vmatpush1.msra.mxu0 0.0
    %976 = vmatprep.subr.mxu0 0.0
    %977 = vmatpush1.msra.mxu0 0.0
    %978 = vmatprep.subr.mxu0 0.0
    %979 = vmatpush1.msra.mxu0 0.0
    %980 = vmatprep.subr.mxu0 0.0
    %981 = vmatpush1.msra.mxu0 0.0
    %982 = vmatprep.subr.mxu0 0.0
    %983 = vmatpush1.msra.mxu0 0.0
    %984 = vmatprep.mubr.f32.mxu0 0.0
    %985 = vmatmul.mubr.f32.gmra.mrb[0].mxu0 %v918
    %v986 = vpop.f32.mrb[0].mxu0
    %v987 = vadd.f32 0.0, %v986
    %v988 = vpop.f32.mrb[0].mxu0
    %989 = vdwg.mxu0
    %v991 = vrot.slane %v987, 6
    %v993 = vadd.f32 %v370, %v991
    %v994 = vxor.u32 %v993, 2147483648
    %v995 = vmul.f32 %v994, 1.442695
    %v996 = vpow.pop %v995
    %v997 = vadd.f32 %v996, 1.0
    %v998 = vrcp.pop %v997
    %v999 = vmul.f32 1.0, %v998
    %v1000 = vadd.f32 %v987, %v463
    %v1002 = vrot.slane %v1000, 6
    %1003 = vrot.lane.b32.xlu0 %v1002, 64
    %v1004 = vpop.permute.xlu0 %1003
    %v1006 = vmul.f32 %v999, %v1004
    %1008 = vrot.lane.b32.xlu0 %v1006, 64
    %v1009 = vpop.permute.xlu0 %1008
    %v1011 = vadd.f32 %v370, %v1009
    %v1012 = vtanh.pop %v1011
    %v1013 = vsub.f32 1.0, %v999
    %1015 = vrot.lane.b32.xlu0 %v1012, 96
    %v1016 = vpop.permute.xlu0 %1015
    %v1018 = vmul.f32 %v1013, %v1016
    %v1019 = vrot.slane %v914, 6
    %v1021 = vmul.f32 %v999, %v1019
    %v1022 = vadd.f32 %v1018, %v1021
    %v1024 = vrot.slane %v1022, 2
    %1025 = vrot.lane.b32.xlu0 %v1024, 96
    %v1026 = vpop.permute.xlu0 %1025
    %v1027 = vsel %vm376, %v1026, 0
    %1029 = vmatprep.subr.mxu0 0.0
    %1030 = vmatpush1.msra.mxu0 %v372
    %1031 = vmatprep.subr.mxu0 0.0
    %1032 = vmatpush1.msra.mxu0 %v373
    %1033 = vmatprep.subr.mxu0 0.0
    %1034 = vmatpush1.msra.mxu0 %v374
    %1035 = vmatprep.subr.mxu0 0.0
    %1036 = vmatpush1.msra.mxu0 %v375
    %1037 = vmatprep.subr.mxu0 0.0
    %1038 = vmatpush1.msra.mxu0 0.0
    %1039 = vmatprep.subr.mxu0 0.0
    %1040 = vmatpush1.msra.mxu0 0.0
    %1041 = vmatprep.subr.mxu0 0.0
    %1042 = vmatpush1.msra.mxu0 0.0
    %1043 = vmatprep.subr.mxu0 0.0
    %1044 = vmatpush1.msra.mxu0 0.0
    %1045 = vmatprep.subr.mxu0 0.0
    %1046 = vmatpush1.msra.mxu0 0.0
    %1047 = vmatprep.subr.mxu0 0.0
    %1048 = vmatpush1.msra.mxu0 0.0
    %1049 = vmatprep.subr.mxu0 0.0
    %1050 = vmatpush1.msra.mxu0 0.0
    %1051 = vmatprep.subr.mxu0 0.0
    %1052 = vmatpush1.msra.mxu0 0.0
    %1053 = vmatprep.subr.mxu0 0.0
    %1054 = vmatpush1.msra.mxu0 0.0
    %1055 = vmatprep.subr.mxu0 0.0
    %1056 = vmatpush1.msra.mxu0 0.0
    %1057 = vmatprep.subr.mxu0 0.0
    %1058 = vmatpush1.msra.mxu0 0.0
    %1059 = vmatprep.subr.mxu0 0.0
    %1060 = vmatpush1.msra.mxu0 0.0
    %1061 = vmatprep.subr.mxu0 0.0
    %1062 = vmatpush1.msra.mxu0 0.0
    %1063 = vmatprep.subr.mxu0 0.0
    %1064 = vmatpush1.msra.mxu0 0.0
    %1065 = vmatprep.subr.mxu0 0.0
    %1066 = vmatpush1.msra.mxu0 0.0
    %1067 = vmatprep.subr.mxu0 0.0
    %1068 = vmatpush1.msra.mxu0 0.0
    %1069 = vmatprep.subr.mxu0 0.0
    %1070 = vmatpush1.msra.mxu0 0.0
    %1071 = vmatprep.subr.mxu0 0.0
    %1072 = vmatpush1.msra.mxu0 0.0
    %1073 = vmatprep.subr.mxu0 0.0
    %1074 = vmatpush1.msra.mxu0 0.0
    %1075 = vmatprep.subr.mxu0 0.0
    %1076 = vmatpush1.msra.mxu0 0.0
    %1077 = vmatprep.subr.mxu0 0.0
    %1078 = vmatpush1.msra.mxu0 0.0
    %1079 = vmatprep.subr.mxu0 0.0
    %1080 = vmatpush1.msra.mxu0 0.0
    %1081 = vmatprep.subr.mxu0 0.0
    %1082 = vmatpush1.msra.mxu0 0.0
    %1083 = vmatprep.subr.mxu0 0.0
    %1084 = vmatpush1.msra.mxu0 0.0
    %1085 = vmatprep.subr.mxu0 0.0
    %1086 = vmatpush1.msra.mxu0 0.0
    %1087 = vmatprep.subr.mxu0 0.0
    %1088 = vmatpush1.msra.mxu0 0.0
    %1089 = vmatprep.subr.mxu0 0.0
    %1090 = vmatpush1.msra.mxu0 0.0
    %1091 = vmatprep.subr.mxu0 0.0
    %1092 = vmatpush1.msra.mxu0 0.0
    %1093 = vmatprep.mubr.f32.mxu0 0.0
    %1094 = vmatmul.mubr.f32.gmra.mrb[0].mxu0 %v1027
    %v1095 = vpop.f32.mrb[0].mxu0
    %v1096 = vadd.f32 0.0, %v1095
    %v1097 = vpop.f32.mrb[0].mxu0
    %1098 = vdwg.mxu0
    %v1100 = vrot.slane %v1096, 4
    %v1102 = vadd.f32 %v370, %v1100
    %v1103 = vxor.u32 %v1102, 2147483648
    %v1104 = vmul.f32 %v1103, 1.442695
    %v1105 = vpow.pop %v1104
    %v1106 = vadd.f32 %v1105, 1.0
    %v1107 = vrcp.pop %v1106
    %v1108 = vmul.f32 1.0, %v1107
    %v1109 = vadd.f32 %v1096, %v463
    %v1111 = vrot.slane %v1109, 4
    %1112 = vrot.lane.b32.xlu0 %v1111, 64
    %v1113 = vpop.permute.xlu0 %1112
    %v1115 = vmul.f32 %v1108, %v1113
    %1117 = vrot.lane.b32.xlu0 %v1115, 64
    %v1118 = vpop.permute.xlu0 %1117
    %v1120 = vadd.f32 %v370, %v1118
    %v1121 = vtanh.pop %v1120
    %v1122 = vsub.f32 1.0, %v1108
    %1124 = vrot.lane.b32.xlu0 %v1121, 96
    %v1125 = vpop.permute.xlu0 %1124
    %v1127 = vmul.f32 %v1122, %v1125
    %v1128 = vrot.slane %v1022, 6
    %v1130 = vmul.f32 %v1108, %v1128
    %v1131 = vadd.f32 %v1127, %v1130
    %v1133 = vrot.slane %v1131, 4
    %1134 = vrot.lane.b32.xlu0 %v1133, 96
    %v1135 = vpop.permute.xlu0 %1134
    %v1136 = vsel %vm376, %v1135, 0
    %1138 = vmatprep.subr.mxu0 0.0
    %1139 = vmatpush1.msra.mxu0 %v372
    %1140 = vmatprep.subr.mxu0 0.0
    %1141 = vmatpush1.msra.mxu0 %v373
    %1142 = vmatprep.subr.mxu0 0.0
    %1143 = vmatpush1.msra.mxu0 %v374
    %1144 = vmatprep.subr.mxu0 0.0
    %1145 = vmatpush1.msra.mxu0 %v375
    %1146 = vmatprep.subr.mxu0 0.0
    %1147 = vmatpush1.msra.mxu0 0.0
    %1148 = vmatprep.subr.mxu0 0.0
    %1149 = vmatpush1.msra.mxu0 0.0
    %1150 = vmatprep.subr.mxu0 0.0
    %1151 = vmatpush1.msra.mxu0 0.0
    %1152 = vmatprep.subr.mxu0 0.0
    %1153 = vmatpush1.msra.mxu0 0.0
    %1154 = vmatprep.subr.mxu0 0.0
    %1155 = vmatpush1.msra.mxu0 0.0
    %1156 = vmatprep.subr.mxu0 0.0
    %1157 = vmatpush1.msra.mxu0 0.0
    %1158 = vmatprep.subr.mxu0 0.0
    %1159 = vmatpush1.msra.mxu0 0.0
    %1160 = vmatprep.subr.mxu0 0.0
    %1161 = vmatpush1.msra.mxu0 0.0
    %1162 = vmatprep.subr.mxu0 0.0
    %1163 = vmatpush1.msra.mxu0 0.0
    %1164 = vmatprep.subr.mxu0 0.0
    %1165 = vmatpush1.msra.mxu0 0.0
    %1166 = vmatprep.subr.mxu0 0.0
    %1167 = vmatpush1.msra.mxu0 0.0
    %1168 = vmatprep.subr.mxu0 0.0
    %1169 = vmatpush1.msra.mxu0 0.0
    %1170 = vmatprep.subr.mxu0 0.0
    %1171 = vmatpush1.msra.mxu0 0.0
    %1172 = vmatprep.subr.mxu0 0.0
    %1173 = vmatpush1.msra.mxu0 0.0
    %1174 = vmatprep.subr.mxu0 0.0
    %1175 = vmatpush1.msra.mxu0 0.0
    %1176 = vmatprep.subr.mxu0 0.0
    %1177 = vmatpush1.msra.mxu0 0.0
    %1178 = vmatprep.subr.mxu0 0.0
    %1179 = vmatpush1.msra.mxu0 0.0
    %1180 = vmatprep.subr.mxu0 0.0
    %1181 = vmatpush1.msra.mxu0 0.0
    %1182 = vmatprep.subr.mxu0 0.0
    %1183 = vmatpush1.msra.mxu0 0.0
    %1184 = vmatprep.subr.mxu0 0.0
    %1185 = vmatpush1.msra.mxu0 0.0
    %1186 = vmatprep.subr.mxu0 0.0
    %1187 = vmatpush1.msra.mxu0 0.0
    %1188 = vmatprep.subr.mxu0 0.0
    %1189 = vmatpush1.msra.mxu0 0.0
    %1190 = vmatprep.subr.mxu0 0.0
    %1191 = vmatpush1.msra.mxu0 0.0
    %1192 = vmatprep.subr.mxu0 0.0
    %1193 = vmatpush1.msra.mxu0 0.0
    %1194 = vmatprep.subr.mxu0 0.0
    %1195 = vmatpush1.msra.mxu0 0.0
    %1196 = vmatprep.subr.mxu0 0.0
    %1197 = vmatpush1.msra.mxu0 0.0
    %1198 = vmatprep.subr.mxu0 0.0
    %1199 = vmatpush1.msra.mxu0 0.0
    %1200 = vmatprep.subr.mxu0 0.0
    %1201 = vmatpush1.msra.mxu0 0.0
    %1202 = vmatprep.mubr.f32.mxu0 0.0
    %1203 = vmatmul.mubr.f32.gmra.mrb[0].mxu0 %v1136
    %v1204 = vpop.f32.mrb[0].mxu0
    %v1205 = vadd.f32 0.0, %v1204
    %v1206 = vpop.f32.mrb[0].mxu0
    %1207 = vdwg.mxu0
    %v1209 = vrot.slane %v1205, 2
    %v1211 = vadd.f32 %v370, %v1209
    %v1212 = vxor.u32 %v1211, 2147483648
    %v1213 = vmul.f32 %v1212, 1.442695
    %v1214 = vpow.pop %v1213
    %v1215 = vadd.f32 %v1214, 1.0
    %v1216 = vrcp.pop %v1215
    %v1217 = vmul.f32 1.0, %v1216
    %v1218 = vadd.f32 %v1205, %v463
    %v1220 = vrot.slane %v1218, 2
    %1221 = vrot.lane.b32.xlu0 %v1220, 64
    %v1222 = vpop.permute.xlu0 %1221
    %v1224 = vmul.f32 %v1217, %v1222
    %1226 = vrot.lane.b32.xlu0 %v1224, 64
    %v1227 = vpop.permute.xlu0 %1226
    %v1229 = vadd.f32 %v370, %v1227
    %v1230 = vtanh.pop %v1229
    %v1231 = vsub.f32 1.0, %v1217
    %1233 = vrot.lane.b32.xlu0 %v1230, 96
    %v1234 = vpop.permute.xlu0 %1233
    %v1236 = vmul.f32 %v1231, %v1234
    %v1237 = vrot.slane %v1131, 6
    %v1239 = vmul.f32 %v1217, %v1237
    %v1240 = vadd.f32 %v1236, %v1239
    %1242 = vrot.lane.b32.xlu0 %v1240, 96
    %v1243 = vpop.permute.xlu0 %1242
    %vm1245 = vcmask 261126
    %1246 = vst.msk [vmem:[#allocation2 - $0x6] sm:$0xc0] %vm1245, %v1243
    // Predicated region
    $region30: #{rollout_encoder_forward.5} parent=1 // pred_check
      _
    $region31: #{rollout_encoder_forward.5} parent=1 // pred_check_branch
      %1248 = sbr.rel (0) target = $region33
    $region32: #{rollout_encoder_forward.5} parent=1 // pred_region
      %s1250 = ssub.s32 32, 32
      %1251 = vsyncadd [#allocation3], %s1250
      %s1253 = sshll.u32 [#allocation2], 4
      %s1254 = int_to_ptr.vmem [resolvable:$true] %s1253
      %1256 = dma.vmem_to_hbm [thread:$0]  %s1254, 32, %s7, [#allocation3]
    $region33: #{rollout_encoder_forward.5} parent=1 // pred_fallthru
      _
    // Predicated region
    $region34: #{rollout_encoder_forward.5} parent=1 // pred_check
      _
    $region35: #{rollout_encoder_forward.5} parent=1 // pred_check_branch
      %1258 = sbr.rel (0) target = $region37
    $region36: #{rollout_encoder_forward.5} parent=1 // pred_region
      %1259 = dma.done [#allocation3], 32
    $region37: #{rollout_encoder_forward.5} parent=1 // pred_fallthru
      _
    %1260 = vsyncpa [#allocation3], 1

</llo_original>
